<compile_context>
chip_gen: v5e
topology: v5e:2x2
jax: 0.10.0
libtpu: 0.0.40
codegen_flags: <defaults>
</compile_context>

<pallas_src>
import jax
import jax.numpy as jnp
from jax.experimental import pallas as pl
from jax.experimental.pallas import tpu as pltpu

LEAK = 0.2
BN_EPS = 1e-5
FC1_OUT = 1024
TN = 256  # fc1 output-feature chunk streamed per grid step


def _leaky(x):
    return jnp.where(x > 0, x, LEAK * x)


def _bn_train(x, gamma, beta):
    # BatchNorm1d forward, training mode, one-pass batch statistics.
    mean = jnp.mean(x, axis=0, keepdims=True)
    ex2 = jnp.mean(x * x, axis=0, keepdims=True)
    var = ex2 - mean * mean
    return (x - mean) * jax.lax.rsqrt(var + BN_EPS) * gamma + beta


def discriminator_kernel(x_ref, lab_ref,
                         w11_ref, b11_ref, w12_ref, b12_ref,
                         w2a_ref, w2b_ref, b2_ref, g2_ref, be2_ref,
                         w3_ref, b3_ref, g3_ref, be3_ref,
                         w4_ref, b4_ref,
                         out_ref, hacc_ref):
    j = pl.program_id(0)

    @pl.when(j == 0)
    def _():
        hacc_ref[...] = jnp.zeros_like(hacc_ref)

    # fc1_1 chunk (bf16 MXU, f32 accumulate) + leaky_relu in f32.
    hx = jnp.dot(x_ref[...], w11_ref[...],
                 preferred_element_type=jnp.float32) + b11_ref[...]
    hx = _leaky(hx)

    # Partial fc2 over this chunk of the image branch (replaces the concat).
    hacc_ref[...] += jnp.dot(hx.astype(jnp.bfloat16), w2a_ref[...],
                             preferred_element_type=jnp.float32)

    @pl.when(j == pl.num_programs(0) - 1)
    def _():
        # fc1_2 (label branch, tiny: kept f32) + leaky_relu.
        hy = _leaky(jnp.dot(lab_ref[...], w12_ref[...],
                            preferred_element_type=jnp.float32) + b12_ref[...])

        # fc2 = image-branch partials + label-branch partial + bias.
        h2 = hacc_ref[...] + jnp.dot(hy.astype(jnp.bfloat16), w2b_ref[...],
                                     preferred_element_type=jnp.float32)
        h2 = h2 + b2_ref[...]
        h2 = _leaky(_bn_train(h2, g2_ref[...], be2_ref[...]))

        # fc3 -> BN -> leaky_relu
        h3 = jnp.dot(h2.astype(jnp.bfloat16), w3_ref[...],
                     preferred_element_type=jnp.float32) + b3_ref[...]
        h3 = _leaky(_bn_train(h3, g3_ref[...], be3_ref[...]))

        # fc4 -> sigmoid  (w4 is tiny: kept f32)
        h4 = jnp.dot(h3, w4_ref[...],
                     preferred_element_type=jnp.float32) + b4_ref[...]
        out_ref[...] = jax.nn.sigmoid(h4)


def make_params(key, H, W):
    """Deterministic init matching the PyTorch module's parameter shapes.
       Linear: U(-1/sqrt(fan_in), 1/sqrt(fan_in)); BN: gamma=1, beta=0."""
    def linear(key, fan_in, fan_out):
        kw, kb = jax.random.split(key)
        bound = 1.0 / jnp.sqrt(fan_in)
        w = jax.random.uniform(kw, (fan_in, fan_out), jnp.float32, -bound, bound)
        b = jax.random.uniform(kb, (1, fan_out), jnp.float32, -bound, bound)
        return w, b

    k1, k2, k3, k4, k5 = jax.random.split(key, 5)
    w11, b11 = linear(k1, H * W, FC1_OUT)
    w12, b12 = linear(k2, 10, FC1_OUT)
    w2, b2 = linear(k3, 2 * FC1_OUT, 512)
    w3, b3 = linear(k4, 512, 256)
    w4, b4 = linear(k5, 256, 1)
    g2, be2 = jnp.ones((1, 512), jnp.float32), jnp.zeros((1, 512), jnp.float32)
    g3, be3 = jnp.ones((1, 256), jnp.float32), jnp.zeros((1, 256), jnp.float32)
    return (w11, b11, w12, b12, w2, b2, g2, be2, w3, b3, g3, be3, w4, b4)


def discriminator_forward(image_nchw, label, params):
    (w11, b11, w12, b12, w2, b2, g2, be2, w3, b3, g3, be3, w4, b4) = params

    B = image_nchw.shape[0]
    x = image_nchw.reshape(B, -1).astype(jnp.float32)   # input.view(B, -1)
    HW = x.shape[1]
    label = label.astype(jnp.float32)

    # Block-diagonal split of fc2 (image rows / label rows) — removes concat.
    w2a = w2[:FC1_OUT]
    w2b = w2[FC1_OUT:]

    # bf16 storage for the bandwidth-dominant operands; f32 accumulate on MXU.
    xb = x.astype(jnp.bfloat16)
    w11b = w11.astype(jnp.bfloat16)
    w2ab = w2a.astype(jnp.bfloat16)
    w2bb = w2b.astype(jnp.bfloat16)
    w3b = w3.astype(jnp.bfloat16)

    args = (xb, label, w11b, b11, w12, b12, w2ab, w2bb, b2, g2, be2,
            w3b, b3, g3, be3, w4, b4)

    n_chunks = FC1_OUT // TN

    def _full2d(shape):
        return pl.BlockSpec(shape, lambda j: (0, 0))

    in_specs = [
        _full2d((B, HW)),                           # x (bf16)
        _full2d((B, 10)),                           # label (f32)
        pl.BlockSpec((HW, TN), lambda j: (0, j)),   # w11 streamed by out-feature
        pl.BlockSpec((1, TN), lambda j: (0, j)),    # b11 matching chunk
        _full2d((10, FC1_OUT)),                     # w12
        _full2d((1, FC1_OUT)),                      # b12
        pl.BlockSpec((TN, 512), lambda j: (j, 0)),  # w2a streamed by K chunk
        _full2d((FC1_OUT, 512)),                    # w2b
        _full2d((1, 512)),                          # b2
        _full2d((1, 512)),                          # gamma2
        _full2d((1, 512)),                          # beta2
        _full2d((512, 256)),                        # w3
        _full2d((1, 256)),                          # b3
        _full2d((1, 256)),                          # gamma3
        _full2d((1, 256)),                          # beta3
        _full2d((256, 1)),                          # w4
        _full2d((1, 1)),                            # b4
    ]

    flops = 2 * B * (HW * FC1_OUT + 10 * FC1_OUT
                     + 2 * FC1_OUT * 512 + 512 * 256 + 256 * 1)
    bytes_accessed = sum(int(a.size) * a.dtype.itemsize for a in args) + B * 4
    cost = pl.CostEstimate(flops=flops,
                           transcendentals=B * (512 + 256 + 1),
                           bytes_accessed=bytes_accessed)

    return pl.pallas_call(
        discriminator_kernel,
        out_shape=jax.ShapeDtypeStruct((B, 1), jnp.float32),
        grid=(n_chunks,),
        in_specs=in_specs,
        out_specs=pl.BlockSpec((B, 1), lambda j: (0, 0)),
        scratch_shapes=[pltpu.VMEM((B, 512), jnp.float32)],
        compiler_params=pltpu.CompilerParams(
            dimension_semantics=("arbitrary",),
            vmem_limit_bytes=32 * 1024 * 1024),
        cost_estimate=cost,
    )(*args)


def _reference(image_nchw, label, params):
    """Plain-JAX reference mirroring the kernel's bf16 storage decisions."""
    (w11, b11, w12, b12, w2, b2, g2, be2, w3, b3, g3, be3, w4, b4) = params
    B = image_nchw.shape[0]
    x = image_nchw.reshape(B, -1).astype(jnp.float32)
    label = label.astype(jnp.float32)

    def bf16mm(a, w):
        return jnp.dot(a.astype(jnp.bfloat16), w.astype(jnp.bfloat16),
                       preferred_element_type=jnp.float32)

    hx = _leaky(bf16mm(x, w11) + b11)
    hy = _leaky(label @ w12 + b12)
    h2 = bf16mm(hx, w2[:FC1_OUT]) + bf16mm(hy, w2[FC1_OUT:]) + b2
    h2 = _leaky(_bn_train(h2, g2, be2))
    h3 = _leaky(_bn_train(bf16mm(h2, w3) + b3, g3, be3))
    return jax.nn.sigmoid(h3 @ w4 + b4)


if __name__ == "__main__":
    H, W, B = 16, 16, 8
    key = jax.random.PRNGKey(0)
    k_img, k_lab, k_par = jax.random.split(key, 3)

    image = jax.random.normal(k_img, (B, 1, H, W), jnp.float32)   # NCHW, like PyTorch
    labels = jax.nn.one_hot(
        jax.random.randint(k_lab, (B,), 0, 10), 10, dtype=jnp.float32)  # (B, 10)
    params = make_params(k_par, H, W)

    out = discriminator_forward(image, labels, params)
    out = jax.block_until_ready(out)

    ref = _reference(image, labels, params)
    assert out.shape == (B, 1)
    assert jnp.allclose(out, ref, atol=5e-3, rtol=5e-3), (
        f"max abs err {jnp.max(jnp.abs(out - ref))}")
    print("KERNEL_OK")
</pallas_src>

<mosaic_0001>
module attributes {stable_mosaic.version = 11 : i64} {
  func.func @discriminator_kernel(%arg0: i32, %arg1: memref<8x256xbf16, #tpu.memory_space<vmem>>, %arg2: memref<8x10xf32, #tpu.memory_space<vmem>>, %arg3: memref<256x256xbf16, #tpu.memory_space<vmem>>, %arg4: memref<1x256xf32, #tpu.memory_space<vmem>>, %arg5: memref<10x1024xf32, #tpu.memory_space<vmem>>, %arg6: memref<1x1024xf32, #tpu.memory_space<vmem>>, %arg7: memref<256x512xbf16, #tpu.memory_space<vmem>>, %arg8: memref<1024x512xbf16, #tpu.memory_space<vmem>>, %arg9: memref<1x512xf32, #tpu.memory_space<vmem>>, %arg10: memref<1x512xf32, #tpu.memory_space<vmem>>, %arg11: memref<1x512xf32, #tpu.memory_space<vmem>>, %arg12: memref<512x256xbf16, #tpu.memory_space<vmem>>, %arg13: memref<1x256xf32, #tpu.memory_space<vmem>>, %arg14: memref<1x256xf32, #tpu.memory_space<vmem>>, %arg15: memref<1x256xf32, #tpu.memory_space<vmem>>, %arg16: memref<256x1xf32, #tpu.memory_space<vmem>>, %arg17: memref<1x1xf32, #tpu.memory_space<vmem>>, %arg18: memref<8x1xf32, #tpu.memory_space<vmem>>, %arg19: memref<8x512xf32, #tpu.memory_space<vmem>>) attributes {dimension_semantics = [#tpu.dimension_semantics<arbitrary>], iteration_bounds = array<i64: 4>, scalar_prefetch = 0 : i64, scratch_operands = 1 : i64, tpu.core_type = #tpu.core_type<tc>, window_params = [{pipeline_mode = #tpu.pipeline_mode<synchronous>, transform_indices = @transform_0, window_bounds = array<i64: 8, 256>}, {pipeline_mode = #tpu.pipeline_mode<synchronous>, transform_indices = @transform_1, window_bounds = array<i64: 8, 10>}, {transform_indices = @transform_2, window_bounds = array<i64: 256, 256>}, {transform_indices = @transform_3, window_bounds = array<i64: 1, 256>}, {pipeline_mode = #tpu.pipeline_mode<synchronous>, transform_indices = @transform_4, window_bounds = array<i64: 10, 1024>}, {pipeline_mode = #tpu.pipeline_mode<synchronous>, transform_indices = @transform_5, window_bounds = array<i64: 1, 1024>}, {transform_indices = @transform_6, window_bounds = array<i64: 256, 512>}, {pipeline_mode = #tpu.pipeline_mode<synchronous>, transform_indices = @transform_7, window_bounds = array<i64: 1024, 512>}, {pipeline_mode = #tpu.pipeline_mode<synchronous>, transform_indices = @transform_8, window_bounds = array<i64: 1, 512>}, {pipeline_mode = #tpu.pipeline_mode<synchronous>, transform_indices = @transform_9, window_bounds = array<i64: 1, 512>}, {pipeline_mode = #tpu.pipeline_mode<synchronous>, transform_indices = @transform_10, window_bounds = array<i64: 1, 512>}, {pipeline_mode = #tpu.pipeline_mode<synchronous>, transform_indices = @transform_11, window_bounds = array<i64: 512, 256>}, {pipeline_mode = #tpu.pipeline_mode<synchronous>, transform_indices = @transform_12, window_bounds = array<i64: 1, 256>}, {pipeline_mode = #tpu.pipeline_mode<synchronous>, transform_indices = @transform_13, window_bounds = array<i64: 1, 256>}, {pipeline_mode = #tpu.pipeline_mode<synchronous>, transform_indices = @transform_14, window_bounds = array<i64: 1, 256>}, {pipeline_mode = #tpu.pipeline_mode<synchronous>, transform_indices = @transform_15, window_bounds = array<i64: 256, 1>}, {pipeline_mode = #tpu.pipeline_mode<synchronous>, transform_indices = @transform_16, window_bounds = array<i64: 1, 1>}, {pipeline_mode = #tpu.pipeline_mode<synchronous>, transform_indices = @transform_17, window_bounds = array<i64: 8, 1>}]} {
    %c0_i32 = arith.constant 0 : i32
    %0 = arith.cmpi eq, %arg0, %c0_i32 : i32
    %1 = arith.extui %0 : i1 to i32
    %c0_i32_0 = arith.constant 0 : i32
    %2 = arith.cmpi ne, %1, %c0_i32_0 : i32
    scf.if %2 {
      %cst_16 = arith.constant 0.000000e+00 : f32
      %23 = vector.broadcast %cst_16 : f32 to vector<8x512xf32>
      %c0_17 = arith.constant 0 : index
      %c0_18 = arith.constant 0 : index
      %24 = vector.load %arg19[%c0_17, %c0_18] : memref<8x512xf32, #tpu.memory_space<vmem>>, vector<8x512xf32>
      tpu.vector_store %arg19[%c0_17, %c0_18], %23 {strides = array<i32>} : memref<8x512xf32, #tpu.memory_space<vmem>>, vector<8x512xf32>,
    } else {
    }
    %c0 = arith.constant 0 : index
    %c0_1 = arith.constant 0 : index
    %3 = vector.load %arg1[%c0, %c0_1] : memref<8x256xbf16, #tpu.memory_space<vmem>>, vector<8x256xbf16>
    %c0_2 = arith.constant 0 : index
    %c0_3 = arith.constant 0 : index
    %4 = vector.load %arg3[%c0_2, %c0_3] : memref<256x256xbf16, #tpu.memory_space<vmem>>, vector<256x256xbf16>
    %cst = arith.constant dense<0.000000e+00> : vector<8x256xf32>
    %5 = tpu.matmul %3, %4, %cst {dimension_numbers = #tpu.dot_dimension_numbers<[1], [0], [0], [1], [0, 0, 1, 1], [], []>} : vector<8x256xbf16>, vector<256x256xbf16>, vector<8x256xf32> -> vector<8x256xf32>
    %c0_4 = arith.constant 0 : index
    %c0_5 = arith.constant 0 : index
    %6 = vector.load %arg4[%c0_4, %c0_5] : memref<1x256xf32, #tpu.memory_space<vmem>>, vector<1x256xf32>
    %7 = vector.broadcast %6 : vector<1x256xf32> to vector<8x256xf32>
    %8 = arith.addf %5, %7 : vector<8x256xf32>
    %cst_6 = arith.constant 0.000000e+00 : f32
    %9 = vector.broadcast %cst_6 : f32 to vector<8x256xf32>
    %10 = arith.cmpf ogt, %8, %9 : vector<8x256xf32>
    %cst_7 = arith.constant 2.000000e-01 : f32
    %11 = vector.broadcast %cst_7 : f32 to vector<8x256xf32>
    %12 = arith.mulf %11, %8 : vector<8x256xf32>
    %13 = arith.select %10, %8, %12 : vector<8x256xi1>, vector<8x256xf32>
    %c0_8 = arith.constant 0 : index
    %c0_9 = arith.constant 0 : index
    %14 = vector.load %arg19[%c0_8, %c0_9] : memref<8x512xf32, #tpu.memory_space<vmem>>, vector<8x512xf32>
    %15 = arith.truncf %13 : vector<8x256xf32> to vector<8x256xbf16>
    %c0_10 = arith.constant 0 : index
    %c0_11 = arith.constant 0 : index
    %16 = vector.load %arg7[%c0_10, %c0_11] : memref<256x512xbf16, #tpu.memory_space<vmem>>, vector<256x512xbf16>
    %cst_12 = arith.constant dense<0.000000e+00> : vector<8x512xf32>
    %17 = tpu.matmul %15, %16, %cst_12 {dimension_numbers = #tpu.dot_dimension_numbers<[1], [0], [0], [1], [0, 0, 1, 1], [], []>} : vector<8x256xbf16>, vector<256x512xbf16>, vector<8x512xf32> -> vector<8x512xf32>
    %18 = arith.addf %14, %17 : vector<8x512xf32>
    %c0_13 = arith.constant 0 : index
    %c0_14 = arith.constant 0 : index
    %19 = vector.load %arg19[%c0_13, %c0_14] : memref<8x512xf32, #tpu.memory_space<vmem>>, vector<8x512xf32>
    tpu.vector_store %arg19[%c0_13, %c0_14], %18 {strides = array<i32>} : memref<8x512xf32, #tpu.memory_space<vmem>>, vector<8x512xf32>,
    %c3_i32 = arith.constant 3 : i32
    %20 = arith.cmpi eq, %arg0, %c3_i32 : i32
    %21 = arith.extui %20 : i1 to i32
    %c0_i32_15 = arith.constant 0 : i32
    %22 = arith.cmpi ne, %21, %c0_i32_15 : i32
    scf.if %22 {
      %c0_16 = arith.constant 0 : index
      %c0_17 = arith.constant 0 : index
      %23 = vector.load %arg2[%c0_16, %c0_17] : memref<8x10xf32, #tpu.memory_space<vmem>>, vector<8x10xf32>
      %c0_18 = arith.constant 0 : index
      %c0_19 = arith.constant 0 : index
      %24 = vector.load %arg5[%c0_18, %c0_19] : memref<10x1024xf32, #tpu.memory_space<vmem>>, vector<10x1024xf32>
      %cst_20 = arith.constant dense<0.000000e+00> : vector<8x1024xf32>
      %25 = tpu.matmul %23, %24, %cst_20 {dimension_numbers = #tpu.dot_dimension_numbers<[1], [0], [0], [1], [0, 0, 1, 1], [], []>} : vector<8x10xf32>, vector<10x1024xf32>, vector<8x1024xf32> -> vector<8x1024xf32>
      %c0_21 = arith.constant 0 : index
      %c0_22 = arith.constant 0 : index
      %26 = vector.load %arg6[%c0_21, %c0_22] : memref<1x1024xf32, #tpu.memory_space<vmem>>, vector<1x1024xf32>
      %27 = vector.broadcast %26 : vector<1x1024xf32> to vector<8x1024xf32>
      %28 = arith.addf %25, %27 : vector<8x1024xf32>
      %cst_23 = arith.constant 0.000000e+00 : f32
      %29 = vector.broadcast %cst_23 : f32 to vector<8x1024xf32>
      %30 = arith.cmpf ogt, %28, %29 : vector<8x1024xf32>
      %cst_24 = arith.constant 2.000000e-01 : f32
      %31 = vector.broadcast %cst_24 : f32 to vector<8x1024xf32>
      %32 = arith.mulf %31, %28 : vector<8x1024xf32>
      %33 = arith.select %30, %28, %32 : vector<8x1024xi1>, vector<8x1024xf32>
      %c0_25 = arith.constant 0 : index
      %c0_26 = arith.constant 0 : index
      %34 = vector.load %arg19[%c0_25, %c0_26] : memref<8x512xf32, #tpu.memory_space<vmem>>, vector<8x512xf32>
      %35 = arith.truncf %33 : vector<8x1024xf32> to vector<8x1024xbf16>
      %c0_27 = arith.constant 0 : index
      %c0_28 = arith.constant 0 : index
      %36 = vector.load %arg8[%c0_27, %c0_28] : memref<1024x512xbf16, #tpu.memory_space<vmem>>, vector<1024x512xbf16>
      %cst_29 = arith.constant dense<0.000000e+00> : vector<8x512xf32>
      %37 = tpu.matmul %35, %36, %cst_29 {dimension_numbers = #tpu.dot_dimension_numbers<[1], [0], [0], [1], [0, 0, 1, 1], [], []>} : vector<8x1024xbf16>, vector<1024x512xbf16>, vector<8x512xf32> -> vector<8x512xf32>
      %38 = arith.addf %34, %37 : vector<8x512xf32>
      %c0_30 = arith.constant 0 : index
      %c0_31 = arith.constant 0 : index
      %39 = vector.load %arg9[%c0_30, %c0_31] : memref<1x512xf32, #tpu.memory_space<vmem>>, vector<1x512xf32>
      %40 = vector.broadcast %39 : vector<1x512xf32> to vector<8x512xf32>
      %41 = arith.addf %38, %40 : vector<8x512xf32>
      %c0_32 = arith.constant 0 : index
      %c0_33 = arith.constant 0 : index
      %42 = vector.load %arg10[%c0_32, %c0_33] : memref<1x512xf32, #tpu.memory_space<vmem>>, vector<1x512xf32>
      %c0_34 = arith.constant 0 : index
      %c0_35 = arith.constant 0 : index
      %43 = vector.load %arg11[%c0_34, %c0_35] : memref<1x512xf32, #tpu.memory_space<vmem>>, vector<1x512xf32>
      %cst_36 = arith.constant dense<0.000000e+00> : vector<512xf32>
      %44 = vector.multi_reduction <add>, %41, %cst_36 [0] : vector<8x512xf32> to vector<512xf32>
      %45 = vector.shape_cast %44 : vector<512xf32> to vector<1x512xf32>
      %cst_37 = arith.constant 8.000000e+00 : f32
      %46 = vector.broadcast %cst_37 : f32 to vector<1x512xf32>
      %47 = arith.divf %45, %46 : vector<1x512xf32>
      %48 = arith.mulf %41, %41 : vector<8x512xf32>
      %cst_38 = arith.constant dense<0.000000e+00> : vector<512xf32>
      %49 = vector.multi_reduction <add>, %48, %cst_38 [0] : vector<8x512xf32> to vector<512xf32>
      %50 = vector.shape_cast %49 : vector<512xf32> to vector<1x512xf32>
      %cst_39 = arith.constant 8.000000e+00 : f32
      %51 = vector.broadcast %cst_39 : f32 to vector<1x512xf32>
      %52 = arith.divf %50, %51 : vector<1x512xf32>
      %53 = arith.mulf %47, %47 : vector<1x512xf32>
      %54 = arith.subf %52, %53 : vector<1x512xf32>
      %55 = vector.broadcast %47 : vector<1x512xf32> to vector<8x512xf32>
      %56 = arith.subf %41, %55 : vector<8x512xf32>
      %cst_40 = arith.constant 9.99999974E-6 : f32
      %57 = vector.broadcast %cst_40 : f32 to vector<1x512xf32>
      %58 = arith.addf %54, %57 : vector<1x512xf32>
      %59 = math.rsqrt %58 : vector<1x512xf32>
      %60 = vector.broadcast %59 : vector<1x512xf32> to vector<8x512xf32>
      %61 = arith.mulf %56, %60 : vector<8x512xf32>
      %62 = vector.broadcast %42 : vector<1x512xf32> to vector<8x512xf32>
      %63 = arith.mulf %61, %62 : vector<8x512xf32>
      %64 = vector.broadcast %43 : vector<1x512xf32> to vector<8x512xf32>
      %65 = arith.addf %63, %64 : vector<8x512xf32>
      %cst_41 = arith.constant 0.000000e+00 : f32
      %66 = vector.broadcast %cst_41 : f32 to vector<8x512xf32>
      %67 = arith.cmpf ogt, %65, %66 : vector<8x512xf32>
      %cst_42 = arith.constant 2.000000e-01 : f32
      %68 = vector.broadcast %cst_42 : f32 to vector<8x512xf32>
      %69 = arith.mulf %68, %65 : vector<8x512xf32>
      %70 = arith.select %67, %65, %69 : vector<8x512xi1>, vector<8x512xf32>
      %71 = arith.truncf %70 : vector<8x512xf32> to vector<8x512xbf16>
      %c0_43 = arith.constant 0 : index
      %c0_44 = arith.constant 0 : index
      %72 = vector.load %arg12[%c0_43, %c0_44] : memref<512x256xbf16, #tpu.memory_space<vmem>>, vector<512x256xbf16>
      %cst_45 = arith.constant dense<0.000000e+00> : vector<8x256xf32>
      %73 = tpu.matmul %71, %72, %cst_45 {dimension_numbers = #tpu.dot_dimension_numbers<[1], [0], [0], [1], [0, 0, 1, 1], [], []>} : vector<8x512xbf16>, vector<512x256xbf16>, vector<8x256xf32> -> vector<8x256xf32>
      %c0_46 = arith.constant 0 : index
      %c0_47 = arith.constant 0 : index
      %74 = vector.load %arg13[%c0_46, %c0_47] : memref<1x256xf32, #tpu.memory_space<vmem>>, vector<1x256xf32>
      %75 = vector.broadcast %74 : vector<1x256xf32> to vector<8x256xf32>
      %76 = arith.addf %73, %75 : vector<8x256xf32>
      %c0_48 = arith.constant 0 : index
      %c0_49 = arith.constant 0 : index
      %77 = vector.load %arg14[%c0_48, %c0_49] : memref<1x256xf32, #tpu.memory_space<vmem>>, vector<1x256xf32>
      %c0_50 = arith.constant 0 : index
      %c0_51 = arith.constant 0 : index
      %78 = vector.load %arg15[%c0_50, %c0_51] : memref<1x256xf32, #tpu.memory_space<vmem>>, vector<1x256xf32>
      %cst_52 = arith.constant dense<0.000000e+00> : vector<256xf32>
      %79 = vector.multi_reduction <add>, %76, %cst_52 [0] : vector<8x256xf32> to vector<256xf32>
      %80 = vector.shape_cast %79 : vector<256xf32> to vector<1x256xf32>
      %cst_53 = arith.constant 8.000000e+00 : f32
      %81 = vector.broadcast %cst_53 : f32 to vector<1x256xf32>
      %82 = arith.divf %80, %81 : vector<1x256xf32>
      %83 = arith.mulf %76, %76 : vector<8x256xf32>
      %cst_54 = arith.constant dense<0.000000e+00> : vector<256xf32>
      %84 = vector.multi_reduction <add>, %83, %cst_54 [0] : vector<8x256xf32> to vector<256xf32>
      %85 = vector.shape_cast %84 : vector<256xf32> to vector<1x256xf32>
      %cst_55 = arith.constant 8.000000e+00 : f32
      %86 = vector.broadcast %cst_55 : f32 to vector<1x256xf32>
      %87 = arith.divf %85, %86 : vector<1x256xf32>
      %88 = arith.mulf %82, %82 : vector<1x256xf32>
      %89 = arith.subf %87, %88 : vector<1x256xf32>
      %90 = vector.broadcast %82 : vector<1x256xf32> to vector<8x256xf32>
      %91 = arith.subf %76, %90 : vector<8x256xf32>
      %cst_56 = arith.constant 9.99999974E-6 : f32
      %92 = vector.broadcast %cst_56 : f32 to vector<1x256xf32>
      %93 = arith.addf %89, %92 : vector<1x256xf32>
      %94 = math.rsqrt %93 : vector<1x256xf32>
      %95 = vector.broadcast %94 : vector<1x256xf32> to vector<8x256xf32>
      %96 = arith.mulf %91, %95 : vector<8x256xf32>
      %97 = vector.broadcast %77 : vector<1x256xf32> to vector<8x256xf32>
      %98 = arith.mulf %96, %97 : vector<8x256xf32>
      %99 = vector.broadcast %78 : vector<1x256xf32> to vector<8x256xf32>
      %100 = arith.addf %98, %99 : vector<8x256xf32>
      %cst_57 = arith.constant 0.000000e+00 : f32
      %101 = vector.broadcast %cst_57 : f32 to vector<8x256xf32>
      %102 = arith.cmpf ogt, %100, %101 : vector<8x256xf32>
      %cst_58 = arith.constant 2.000000e-01 : f32
      %103 = vector.broadcast %cst_58 : f32 to vector<8x256xf32>
      %104 = arith.mulf %103, %100 : vector<8x256xf32>
      %105 = arith.select %102, %100, %104 : vector<8x256xi1>, vector<8x256xf32>
      %c0_59 = arith.constant 0 : index
      %c0_60 = arith.constant 0 : index
      %106 = vector.load %arg16[%c0_59, %c0_60] : memref<256x1xf32, #tpu.memory_space<vmem>>, vector<256x1xf32>
      %cst_61 = arith.constant dense<0.000000e+00> : vector<8x1xf32>
      %107 = tpu.matmul %105, %106, %cst_61 {dimension_numbers = #tpu.dot_dimension_numbers<[1], [0], [0], [1], [0, 0, 1, 1], [], []>} : vector<8x256xf32>, vector<256x1xf32>, vector<8x1xf32> -> vector<8x1xf32>
      %c0_62 = arith.constant 0 : index
      %c0_63 = arith.constant 0 : index
      %108 = vector.load %arg17[%c0_62, %c0_63] : memref<1x1xf32, #tpu.memory_space<vmem>>, vector<1x1xf32>
      %109 = vector.broadcast %108 : vector<1x1xf32> to vector<8x1xf32>
      %110 = arith.addf %107, %109 : vector<8x1xf32>
      %111 = arith.negf %110 : vector<8x1xf32>
      %112 = math.exp %111 : vector<8x1xf32>
      %cst_64 = arith.constant 1.000000e+00 : f32
      %113 = vector.broadcast %cst_64 : f32 to vector<8x1xf32>
      %114 = arith.addf %113, %112 : vector<8x1xf32>
      %115 = arith.divf %113, %114 : vector<8x1xf32>
      %c0_65 = arith.constant 0 : index
      %c0_66 = arith.constant 0 : index
      %116 = vector.load %arg18[%c0_65, %c0_66] : memref<8x1xf32, #tpu.memory_space<vmem>>, vector<8x1xf32>
      tpu.vector_store %arg18[%c0_65, %c0_66], %115 {strides = array<i32>} : memref<8x1xf32, #tpu.memory_space<vmem>>, vector<8x1xf32>,
    } else {
    }
    return
  }
  func.func @transform_0(%arg0: i32) -> (i32, i32) {
    %c0_i32 = arith.constant 0 : i32
    %c0_i32_0 = arith.constant 0 : i32
    %c0_i32_1 = arith.constant 0 : i32
    return %c0_i32, %c0_i32_0 : i32, i32
  }
  func.func @transform_1(%arg0: i32) -> (i32, i32) {
    %c0_i32 = arith.constant 0 : i32
    %c0_i32_0 = arith.constant 0 : i32
    %c0_i32_1 = arith.constant 0 : i32
    return %c0_i32, %c0_i32_0 : i32, i32
  }
  func.func @transform_2(%arg0: i32) -> (i32, i32) {
    %c0_i32 = arith.constant 0 : i32
    %c0_i32_0 = arith.constant 0 : i32
    return %c0_i32, %arg0 : i32, i32
  }
  func.func @transform_3(%arg0: i32) -> (i32, i32) {
    %c0_i32 = arith.constant 0 : i32
    %c0_i32_0 = arith.constant 0 : i32
    return %c0_i32, %arg0 : i32, i32
  }
  func.func @transform_4(%arg0: i32) -> (i32, i32) {
    %c0_i32 = arith.constant 0 : i32
    %c0_i32_0 = arith.constant 0 : i32
    %c0_i32_1 = arith.constant 0 : i32
    return %c0_i32, %c0_i32_0 : i32, i32
  }
  func.func @transform_5(%arg0: i32) -> (i32, i32) {
    %c0_i32 = arith.constant 0 : i32
    %c0_i32_0 = arith.constant 0 : i32
    %c0_i32_1 = arith.constant 0 : i32
    return %c0_i32, %c0_i32_0 : i32, i32
  }
  func.func @transform_6(%arg0: i32) -> (i32, i32) {
    %c0_i32 = arith.constant 0 : i32
    %c0_i32_0 = arith.constant 0 : i32
    return %arg0, %c0_i32 : i32, i32
  }
  func.func @transform_7(%arg0: i32) -> (i32, i32) {
    %c0_i32 = arith.constant 0 : i32
    %c0_i32_0 = arith.constant 0 : i32
    %c0_i32_1 = arith.constant 0 : i32
    return %c0_i32, %c0_i32_0 : i32, i32
  }
  func.func @transform_8(%arg0: i32) -> (i32, i32) {
    %c0_i32 = arith.constant 0 : i32
    %c0_i32_0 = arith.constant 0 : i32
    %c0_i32_1 = arith.constant 0 : i32
    return %c0_i32, %c0_i32_0 : i32, i32
  }
  func.func @transform_9(%arg0: i32) -> (i32, i32) {
    %c0_i32 = arith.constant 0 : i32
    %c0_i32_0 = arith.constant 0 : i32
    %c0_i32_1 = arith.constant 0 : i32
    return %c0_i32, %c0_i32_0 : i32, i32
  }
  func.func @transform_10(%arg0: i32) -> (i32, i32) {
    %c0_i32 = arith.constant 0 : i32
    %c0_i32_0 = arith.constant 0 : i32
    %c0_i32_1 = arith.constant 0 : i32
    return %c0_i32, %c0_i32_0 : i32, i32
  }
  func.func @transform_11(%arg0: i32) -> (i32, i32) {
    %c0_i32 = arith.constant 0 : i32
    %c0_i32_0 = arith.constant 0 : i32
    %c0_i32_1 = arith.constant 0 : i32
    return %c0_i32, %c0_i32_0 : i32, i32
  }
  func.func @transform_12(%arg0: i32) -> (i32, i32) {
    %c0_i32 = arith.constant 0 : i32
    %c0_i32_0 = arith.constant 0 : i32
    %c0_i32_1 = arith.constant 0 : i32
    return %c0_i32, %c0_i32_0 : i32, i32
  }
  func.func @transform_13(%arg0: i32) -> (i32, i32) {
    %c0_i32 = arith.constant 0 : i32
    %c0_i32_0 = arith.constant 0 : i32
    %c0_i32_1 = arith.constant 0 : i32
    return %c0_i32, %c0_i32_0 : i32, i32
  }
  func.func @transform_14(%arg0: i32) -> (i32, i32) {
    %c0_i32 = arith.constant 0 : i32
    %c0_i32_0 = arith.constant 0 : i32
    %c0_i32_1 = arith.constant 0 : i32
    return %c0_i32, %c0_i32_0 : i32, i32
  }
  func.func @transform_15(%arg0: i32) -> (i32, i32) {
    %c0_i32 = arith.constant 0 : i32
    %c0_i32_0 = arith.constant 0 : i32
    %c0_i32_1 = arith.constant 0 : i32
    return %c0_i32, %c0_i32_0 : i32, i32
  }
  func.func @transform_16(%arg0: i32) -> (i32, i32) {
    %c0_i32 = arith.constant 0 : i32
    %c0_i32_0 = arith.constant 0 : i32
    %c0_i32_1 = arith.constant 0 : i32
    return %c0_i32, %c0_i32_0 : i32, i32
  }
  func.func @transform_17(%arg0: i32) -> (i32, i32) {
    %c0_i32 = arith.constant 0 : i32
    %c0_i32_0 = arith.constant 0 : i32
    %c0_i32_1 = arith.constant 0 : i32
    return %c0_i32, %c0_i32_0 : i32, i32
  }
}

</mosaic_0001>

<llo_original>
// kernel: tpu_custom_call.1
$region0: #{tpu_custom_call.1}
  #allocation0 [shape = 'u32[]', space=smem, size = 0x4, offset = 0x4, fixed_abs, tag = 'smem constant byte address 0x4 - core index']
  #allocation1 [shape = 'u32[72,128]{1,0:T(1,128)}', space=vmem, size = 0x9000, scoped, tag = 'internal scratch']
  #allocation2 [shape = 'f32[8,512]{1,0:T(8,128)}', space=vmem, size = 0x4000, scoped, tag = 'scratch operand']
  #allocation3 [shape = 'f32[1,1]{1,0:T(1,128)S(1)}', space=vmem, size = 0x200, scoped, tag = 'scoped memory for tpu_custom_call.1']
  %s0 = inlined_call_operand.vmem [shape: bf16[8,256], index: 0, kind: input, shape index: {}]
  %s1 = inlined_call_operand.vmem [shape: f32[8,10], index: 1, kind: input, shape index: {}]
  %s2 = inlined_call_operand.hbm [shape: bf16[256,1024], index: 2, kind: input, shape index: {}]
  %s3 = inlined_call_operand.vmem [shape: f32[1,1024], index: 3, kind: input, shape index: {}]
  %s4 = inlined_call_operand.vmem [shape: f32[10,1024], index: 4, kind: input, shape index: {}]
  %s5 = inlined_call_operand.vmem [shape: f32[1,1024], index: 5, kind: input, shape index: {}]
  %s6 = inlined_call_operand.hbm [shape: bf16[1024,512], index: 6, kind: input, shape index: {}]
  %s7 = inlined_call_operand.hbm [shape: bf16[1024,512], index: 7, kind: input, shape index: {}]
  %s8 = inlined_call_operand.vmem [shape: f32[1,512], index: 8, kind: input, shape index: {}]
  %s9 = inlined_call_operand.vmem [shape: f32[1,512], index: 9, kind: input, shape index: {}]
  %s10 = inlined_call_operand.vmem [shape: f32[1,512], index: 10, kind: input, shape index: {}]
  %s11 = inlined_call_operand.hbm [shape: bf16[512,256], index: 11, kind: input, shape index: {}]
  %s12 = inlined_call_operand.vmem [shape: f32[1,256], index: 12, kind: input, shape index: {}]
  %s13 = inlined_call_operand.vmem [shape: f32[1,256], index: 13, kind: input, shape index: {}]
  %s14 = inlined_call_operand.vmem [shape: f32[1,256], index: 14, kind: input, shape index: {}]
  %s15 = inlined_call_operand.vmem [shape: f32[256,1], index: 15, kind: input, shape index: {}]
  %s16 = inlined_call_operand.<no memory space> [shape: f32[1,1], index: 16, kind: input, shape index: {}]
  %s17 = inlined_call_operand.vmem [shape: f32[8,1], index: 17, kind: output, shape index: {}]
  %s18 = sld [smem:[#allocation0]]
  $region125: #{tpu_custom_call.1} parent=0
    _
  %s20 = ssub.s32 1, %s18
  %s21 = scalar_select 0, %s20, %s18
  %v22 = vstv %s16
  %23 = vst [vmem:[#allocation3] sm:$0x1] %v22
  $region1: #{tpu_custom_call.1} parent=0
    #allocation4 [shape = 'u8[262144]{0}', space=vmem, size = 0x40000, scoped, tag = 'input window, operand 2']
    #allocation5 [shape = 's32[2]{0}', space=sflag, size = 0x8, scoped, tag = 'scoped memory for tpu_custom_call.1']
    #allocation6 [shape = 'u8[524288]{0}', space=vmem, size = 0x80000, scoped, tag = 'input window, operand 6']
    #allocation7 [shape = 's32[2]{0}', space=sflag, size = 0x8, scoped, tag = 'scoped memory for tpu_custom_call.1']
    #allocation8 [shape = 'u8[1048576]{0}', space=vmem, size = 0x100000, scoped, tag = 'input window, operand 7, single buffered']
    #allocation9 [shape = 'u8[262144]{0}', space=vmem, size = 0x40000, scoped, tag = 'input window, operand 11, single buffered']
    #allocation10 [shape = 's32[1]{0}', space=sflag, size = 0x4, scoped, tag = 'scoped memory for tpu_custom_call.1']
    %24 = vsyncpa [#allocation5], 0
    %s25 = scalar_lea.sflag [#allocation5], 1
    %26 = vsyncpa %s25, 0
    %27 = vsyncpa [#allocation7], 0
    %s28 = scalar_lea.sflag [#allocation7], 1
    %29 = vsyncpa %s28, 0
    %30 = vsyncpa [#allocation10], 0
    loop: start=0, step=1, limit=6
    $region2: #{tpu_custom_call.1} parent=1 // loop_pre_header
      _
    $region3: #{tpu_custom_call.1} parent=1 // loop_header
      %s32 = sphi 0, %s36
      %p33 = scmp.ge.s32.totalorder %s32, 6
      %s40 = sphi 0, %s40
      %s42 = sphi 0, %s40
      %s43 = sphi 0, %s42
      %s57 = sphi 0, %s43
      %s61 = sphi 0, %s61
      %s63 = sphi 0, %s61
      %s64 = sphi 0, %s63
      %s78 = sphi 0, %s64
      %s84 = sphi 0, %s86
      %s87 = sphi 0, %s84
      %s88 = sphi 0, %s87
      %s104 = sphi 0, %s88
      %s110 = sphi 0, %s112
      %s113 = sphi 0, %s110
      %s114 = sphi 0, %s113
      %s130 = sphi 0, %s114
      %s134 = sphi 0, %s134
      %s136 = sphi 0, %s134
      %s137 = sphi 0, %s136
      %s151 = sphi 0, %s137
      %s155 = sphi 0, %s155
      %s157 = sphi 0, %s155
      %s158 = sphi 0, %s157
      %s172 = sphi 0, %s158
      %s178 = sphi 0, %s180
      %s181 = sphi 0, %s178
      %s182 = sphi 0, %s181
      %s198 = sphi 0, %s182
      %s202 = sphi 0, %s202
      %s204 = sphi 0, %s202
      %s205 = sphi 0, %s204
      %s219 = sphi 0, %s205
      %s223 = sphi 0, %s223
      %s225 = sphi 0, %s223
      %s226 = sphi 0, %s225
      %s240 = sphi 0, %s226
      %s244 = sphi 0, %s244
      %s246 = sphi 0, %s244
      %s247 = sphi 0, %s246
      %s261 = sphi 0, %s247
      %s265 = sphi 0, %s265
      %s267 = sphi 0, %s265
      %s268 = sphi 0, %s267
      %s282 = sphi 0, %s268
      %s286 = sphi 0, %s286
      %s288 = sphi 0, %s286
      %s289 = sphi 0, %s288
      %s303 = sphi 0, %s289
      %s307 = sphi 0, %s307
      %s309 = sphi 0, %s307
      %s310 = sphi 0, %s309
      %s324 = sphi 0, %s310
      %s328 = sphi 0, %s328
      %s330 = sphi 0, %s328
      %s331 = sphi 0, %s330
      %s345 = sphi 0, %s331
      %s349 = sphi 0, %s349
      %s351 = sphi 0, %s349
      %s352 = sphi 0, %s351
      %s366 = sphi 0, %s352
      %s370 = sphi 0, %s370
      %s372 = sphi 0, %s370
      %s373 = sphi 0, %s372
      %s387 = sphi 0, %s373
      %s391 = sphi 0, %s391
      %s393 = sphi 0, %s391
      %s394 = sphi 0, %s393
      %s408 = sphi 0, %s394
      %s412 = sphi 0, %s412
      %s414 = sphi 0, %s412
      %s415 = sphi 0, %s414
      %s429 = sphi 0, %s415
    $region4: #{tpu_custom_call.1} parent=1 // loop_header_branch
      %35 = sbr.rel (%p33) target = $region8
    $region5: #{tpu_custom_call.1} parent=1 // loop_body
      %s37 = ssub.s32 %s32, 1
      %s38 = ssub.s32 %s32, 2
      %s39 = sadd.s32 %s32, 1
      %s41 = sadd.s32 %s40, 1
      %p44 = scmp.eq.s32.totalorder %s32, 3
      %p45 = scmp.ne.s32.totalorder %s40, %s42
      %p46 = scmp.eq.s32.totalorder %s32, 0
      %p47 = por %p45, %p46
      %p48 = scmp.ne.s32.totalorder %s40, %s42
      %p49 = scmp.eq.s32.totalorder %s37, 3
      %p50 = por %p48, %p49
      %p51 = scmp.ne.s32.totalorder %s42, %s43
      %p52 = scmp.eq.s32.totalorder %s37, 0
      %p53 = por %p51, %p52
      %p54 = scmp.ne.s32.totalorder %s42, %s43
      %p55 = scmp.eq.s32.totalorder %s38, 3
      %p56 = por %p54, %p55
      %p58 = scmp.ne.s32.totalorder %s43, %s57
      %p59 = scmp.eq.s32.totalorder %s38, 0
      %p60 = por %p58, %p59
      %s62 = sadd.s32 %s61, 1
      %p65 = scmp.eq.s32.totalorder %s32, 3
      %p66 = scmp.ne.s32.totalorder %s61, %s63
      %p67 = scmp.eq.s32.totalorder %s32, 0
      %p68 = por %p66, %p67
      %p69 = scmp.ne.s32.totalorder %s61, %s63
      %p70 = scmp.eq.s32.totalorder %s37, 3
      %p71 = por %p69, %p70
      %p72 = scmp.ne.s32.totalorder %s63, %s64
      %p73 = scmp.eq.s32.totalorder %s37, 0
      %p74 = por %p72, %p73
      %p75 = scmp.ne.s32.totalorder %s63, %s64
      %p76 = scmp.eq.s32.totalorder %s38, 3
      %p77 = por %p75, %p76
      %p79 = scmp.ne.s32.totalorder %s64, %s78
      %p80 = scmp.eq.s32.totalorder %s38, 0
      %p81 = por %p79, %p80
      %s82 = ssub.s32 %s32, %s39
      %p83 = scmp.eq.s32.totalorder %s82, 0
      %s85 = sadd.s32 %s84, 1
      %s86 = scalar_select %p83, %s84, %s85
      %p89 = pneg %p83
      %p90 = scmp.eq.s32.totalorder %s32, 3
      %p91 = por %p89, %p90
      %p92 = scmp.ne.s32.totalorder %s84, %s87
      %p93 = scmp.eq.s32.totalorder %s32, 0
      %p94 = por %p92, %p93
      %p95 = scmp.ne.s32.totalorder %s84, %s87
      %p96 = scmp.eq.s32.totalorder %s37, 3
      %p97 = por %p95, %p96
      %p98 = scmp.ne.s32.totalorder %s87, %s88
      %p99 = scmp.eq.s32.totalorder %s37, 0
      %p100 = por %p98, %p99
      %p101 = scmp.ne.s32.totalorder %s87, %s88
      %p102 = scmp.eq.s32.totalorder %s38, 3
      %p103 = por %p101, %p102
      %p105 = scmp.ne.s32.totalorder %s88, %s104
      %p106 = scmp.eq.s32.totalorder %s38, 0
      %p107 = por %p105, %p106
      %s108 = ssub.s32 %s32, %s39
      %p109 = scmp.eq.s32.totalorder %s108, 0
      %s111 = sadd.s32 %s110, 1
      %s112 = scalar_select %p109, %s110, %s111
      %p115 = pneg %p109
      %p116 = scmp.eq.s32.totalorder %s32, 3
      %p117 = por %p115, %p116
      %p118 = scmp.ne.s32.totalorder %s110, %s113
      %p119 = scmp.eq.s32.totalorder %s32, 0
      %p120 = por %p118, %p119
      %p121 = scmp.ne.s32.totalorder %s110, %s113
      %p122 = scmp.eq.s32.totalorder %s37, 3
      %p123 = por %p121, %p122
      %p124 = scmp.ne.s32.totalorder %s113, %s114
      %p125 = scmp.eq.s32.totalorder %s37, 0
      %p126 = por %p124, %p125
      %p127 = scmp.ne.s32.totalorder %s113, %s114
      %p128 = scmp.eq.s32.totalorder %s38, 3
      %p129 = por %p127, %p128
      %p131 = scmp.ne.s32.totalorder %s114, %s130
      %p132 = scmp.eq.s32.totalorder %s38, 0
      %p133 = por %p131, %p132
      %s135 = sadd.s32 %s134, 1
      %p138 = scmp.eq.s32.totalorder %s32, 3
      %p139 = scmp.ne.s32.totalorder %s134, %s136
      %p140 = scmp.eq.s32.totalorder %s32, 0
      %p141 = por %p139, %p140
      %p142 = scmp.ne.s32.totalorder %s134, %s136
      %p143 = scmp.eq.s32.totalorder %s37, 3
      %p144 = por %p142, %p143
      %p145 = scmp.ne.s32.totalorder %s136, %s137
      %p146 = scmp.eq.s32.totalorder %s37, 0
      %p147 = por %p145, %p146
      %p148 = scmp.ne.s32.totalorder %s136, %s137
      %p149 = scmp.eq.s32.totalorder %s38, 3
      %p150 = por %p148, %p149
      %p152 = scmp.ne.s32.totalorder %s137, %s151
      %p153 = scmp.eq.s32.totalorder %s38, 0
      %p154 = por %p152, %p153
      %s156 = sadd.s32 %s155, 1
      %p159 = scmp.eq.s32.totalorder %s32, 3
      %p160 = scmp.ne.s32.totalorder %s155, %s157
      %p161 = scmp.eq.s32.totalorder %s32, 0
      %p162 = por %p160, %p161
      %p163 = scmp.ne.s32.totalorder %s155, %s157
      %p164 = scmp.eq.s32.totalorder %s37, 3
      %p165 = por %p163, %p164
      %p166 = scmp.ne.s32.totalorder %s157, %s158
      %p167 = scmp.eq.s32.totalorder %s37, 0
      %p168 = por %p166, %p167
      %p169 = scmp.ne.s32.totalorder %s157, %s158
      %p170 = scmp.eq.s32.totalorder %s38, 3
      %p171 = por %p169, %p170
      %p173 = scmp.ne.s32.totalorder %s158, %s172
      %p174 = scmp.eq.s32.totalorder %s38, 0
      %p175 = por %p173, %p174
      %s176 = ssub.s32 %s32, %s39
      %p177 = scmp.eq.s32.totalorder %s176, 0
      %s179 = sadd.s32 %s178, 1
      %s180 = scalar_select %p177, %s178, %s179
      %p183 = pneg %p177
      %p184 = scmp.eq.s32.totalorder %s32, 3
      %p185 = por %p183, %p184
      %p186 = scmp.ne.s32.totalorder %s178, %s181
      %p187 = scmp.eq.s32.totalorder %s32, 0
      %p188 = por %p186, %p187
      %p189 = scmp.ne.s32.totalorder %s178, %s181
      %p190 = scmp.eq.s32.totalorder %s37, 3
      %p191 = por %p189, %p190
      %p192 = scmp.ne.s32.totalorder %s181, %s182
      %p193 = scmp.eq.s32.totalorder %s37, 0
      %p194 = por %p192, %p193
      %p195 = scmp.ne.s32.totalorder %s181, %s182
      %p196 = scmp.eq.s32.totalorder %s38, 3
      %p197 = por %p195, %p196
      %p199 = scmp.ne.s32.totalorder %s182, %s198
      %p200 = scmp.eq.s32.totalorder %s38, 0
      %p201 = por %p199, %p200
      %s203 = sadd.s32 %s202, 1
      %p206 = scmp.eq.s32.totalorder %s32, 3
      %p207 = scmp.ne.s32.totalorder %s202, %s204
      %p208 = scmp.eq.s32.totalorder %s32, 0
      %p209 = por %p207, %p208
      %p210 = scmp.ne.s32.totalorder %s202, %s204
      %p211 = scmp.eq.s32.totalorder %s37, 3
      %p212 = por %p210, %p211
      %p213 = scmp.ne.s32.totalorder %s204, %s205
      %p214 = scmp.eq.s32.totalorder %s37, 0
      %p215 = por %p213, %p214
      %p216 = scmp.ne.s32.totalorder %s204, %s205
      %p217 = scmp.eq.s32.totalorder %s38, 3
      %p218 = por %p216, %p217
      %p220 = scmp.ne.s32.totalorder %s205, %s219
      %p221 = scmp.eq.s32.totalorder %s38, 0
      %p222 = por %p220, %p221
      %s224 = sadd.s32 %s223, 1
      %p227 = scmp.eq.s32.totalorder %s32, 3
      %p228 = scmp.ne.s32.totalorder %s223, %s225
      %p229 = scmp.eq.s32.totalorder %s32, 0
      %p230 = por %p228, %p229
      %p231 = scmp.ne.s32.totalorder %s223, %s225
      %p232 = scmp.eq.s32.totalorder %s37, 3
      %p233 = por %p231, %p232
      %p234 = scmp.ne.s32.totalorder %s225, %s226
      %p235 = scmp.eq.s32.totalorder %s37, 0
      %p236 = por %p234, %p235
      %p237 = scmp.ne.s32.totalorder %s225, %s226
      %p238 = scmp.eq.s32.totalorder %s38, 3
      %p239 = por %p237, %p238
      %p241 = scmp.ne.s32.totalorder %s226, %s240
      %p242 = scmp.eq.s32.totalorder %s38, 0
      %p243 = por %p241, %p242
      %s245 = sadd.s32 %s244, 1
      %p248 = scmp.eq.s32.totalorder %s32, 3
      %p249 = scmp.ne.s32.totalorder %s244, %s246
      %p250 = scmp.eq.s32.totalorder %s32, 0
      %p251 = por %p249, %p250
      %p252 = scmp.ne.s32.totalorder %s244, %s246
      %p253 = scmp.eq.s32.totalorder %s37, 3
      %p254 = por %p252, %p253
      %p255 = scmp.ne.s32.totalorder %s246, %s247
      %p256 = scmp.eq.s32.totalorder %s37, 0
      %p257 = por %p255, %p256
      %p258 = scmp.ne.s32.totalorder %s246, %s247
      %p259 = scmp.eq.s32.totalorder %s38, 3
      %p260 = por %p258, %p259
      %p262 = scmp.ne.s32.totalorder %s247, %s261
      %p263 = scmp.eq.s32.totalorder %s38, 0
      %p264 = por %p262, %p263
      %s266 = sadd.s32 %s265, 1
      %p269 = scmp.eq.s32.totalorder %s32, 3
      %p270 = scmp.ne.s32.totalorder %s265, %s267
      %p271 = scmp.eq.s32.totalorder %s32, 0
      %p272 = por %p270, %p271
      %p273 = scmp.ne.s32.totalorder %s265, %s267
      %p274 = scmp.eq.s32.totalorder %s37, 3
      %p275 = por %p273, %p274
      %p276 = scmp.ne.s32.totalorder %s267, %s268
      %p277 = scmp.eq.s32.totalorder %s37, 0
      %p278 = por %p276, %p277
      %p279 = scmp.ne.s32.totalorder %s267, %s268
      %p280 = scmp.eq.s32.totalorder %s38, 3
      %p281 = por %p279, %p280
      %p283 = scmp.ne.s32.totalorder %s268, %s282
      %p284 = scmp.eq.s32.totalorder %s38, 0
      %p285 = por %p283, %p284
      %s287 = sadd.s32 %s286, 1
      %p290 = scmp.eq.s32.totalorder %s32, 3
      %p291 = scmp.ne.s32.totalorder %s286, %s288
      %p292 = scmp.eq.s32.totalorder %s32, 0
      %p293 = por %p291, %p292
      %p294 = scmp.ne.s32.totalorder %s286, %s288
      %p295 = scmp.eq.s32.totalorder %s37, 3
      %p296 = por %p294, %p295
      %p297 = scmp.ne.s32.totalorder %s288, %s289
      %p298 = scmp.eq.s32.totalorder %s37, 0
      %p299 = por %p297, %p298
      %p300 = scmp.ne.s32.totalorder %s288, %s289
      %p301 = scmp.eq.s32.totalorder %s38, 3
      %p302 = por %p300, %p301
      %p304 = scmp.ne.s32.totalorder %s289, %s303
      %p305 = scmp.eq.s32.totalorder %s38, 0
      %p306 = por %p304, %p305
      %s308 = sadd.s32 %s307, 1
      %p311 = scmp.eq.s32.totalorder %s32, 3
      %p312 = scmp.ne.s32.totalorder %s307, %s309
      %p313 = scmp.eq.s32.totalorder %s32, 0
      %p314 = por %p312, %p313
      %p315 = scmp.ne.s32.totalorder %s307, %s309
      %p316 = scmp.eq.s32.totalorder %s37, 3
      %p317 = por %p315, %p316
      %p318 = scmp.ne.s32.totalorder %s309, %s310
      %p319 = scmp.eq.s32.totalorder %s37, 0
      %p320 = por %p318, %p319
      %p321 = scmp.ne.s32.totalorder %s309, %s310
      %p322 = scmp.eq.s32.totalorder %s38, 3
      %p323 = por %p321, %p322
      %p325 = scmp.ne.s32.totalorder %s310, %s324
      %p326 = scmp.eq.s32.totalorder %s38, 0
      %p327 = por %p325, %p326
      %s329 = sadd.s32 %s328, 1
      %p332 = scmp.eq.s32.totalorder %s32, 3
      %p333 = scmp.ne.s32.totalorder %s328, %s330
      %p334 = scmp.eq.s32.totalorder %s32, 0
      %p335 = por %p333, %p334
      %p336 = scmp.ne.s32.totalorder %s328, %s330
      %p337 = scmp.eq.s32.totalorder %s37, 3
      %p338 = por %p336, %p337
      %p339 = scmp.ne.s32.totalorder %s330, %s331
      %p340 = scmp.eq.s32.totalorder %s37, 0
      %p341 = por %p339, %p340
      %p342 = scmp.ne.s32.totalorder %s330, %s331
      %p343 = scmp.eq.s32.totalorder %s38, 3
      %p344 = por %p342, %p343
      %p346 = scmp.ne.s32.totalorder %s331, %s345
      %p347 = scmp.eq.s32.totalorder %s38, 0
      %p348 = por %p346, %p347
      %s350 = sadd.s32 %s349, 1
      %p353 = scmp.eq.s32.totalorder %s32, 3
      %p354 = scmp.ne.s32.totalorder %s349, %s351
      %p355 = scmp.eq.s32.totalorder %s32, 0
      %p356 = por %p354, %p355
      %p357 = scmp.ne.s32.totalorder %s349, %s351
      %p358 = scmp.eq.s32.totalorder %s37, 3
      %p359 = por %p357, %p358
      %p360 = scmp.ne.s32.totalorder %s351, %s352
      %p361 = scmp.eq.s32.totalorder %s37, 0
      %p362 = por %p360, %p361
      %p363 = scmp.ne.s32.totalorder %s351, %s352
      %p364 = scmp.eq.s32.totalorder %s38, 3
      %p365 = por %p363, %p364
      %p367 = scmp.ne.s32.totalorder %s352, %s366
      %p368 = scmp.eq.s32.totalorder %s38, 0
      %p369 = por %p367, %p368
      %s371 = sadd.s32 %s370, 1
      %p374 = scmp.eq.s32.totalorder %s32, 3
      %p375 = scmp.ne.s32.totalorder %s370, %s372
      %p376 = scmp.eq.s32.totalorder %s32, 0
      %p377 = por %p375, %p376
      %p378 = scmp.ne.s32.totalorder %s370, %s372
      %p379 = scmp.eq.s32.totalorder %s37, 3
      %p380 = por %p378, %p379
      %p381 = scmp.ne.s32.totalorder %s372, %s373
      %p382 = scmp.eq.s32.totalorder %s37, 0
      %p383 = por %p381, %p382
      %p384 = scmp.ne.s32.totalorder %s372, %s373
      %p385 = scmp.eq.s32.totalorder %s38, 3
      %p386 = por %p384, %p385
      %p388 = scmp.ne.s32.totalorder %s373, %s387
      %p389 = scmp.eq.s32.totalorder %s38, 0
      %p390 = por %p388, %p389
      %s392 = sadd.s32 %s391, 1
      %p395 = scmp.eq.s32.totalorder %s32, 3
      %p396 = scmp.ne.s32.totalorder %s391, %s393
      %p397 = scmp.eq.s32.totalorder %s32, 0
      %p398 = por %p396, %p397
      %p399 = scmp.ne.s32.totalorder %s391, %s393
      %p400 = scmp.eq.s32.totalorder %s37, 3
      %p401 = por %p399, %p400
      %p402 = scmp.ne.s32.totalorder %s393, %s394
      %p403 = scmp.eq.s32.totalorder %s37, 0
      %p404 = por %p402, %p403
      %p405 = scmp.ne.s32.totalorder %s393, %s394
      %p406 = scmp.eq.s32.totalorder %s38, 3
      %p407 = por %p405, %p406
      %p409 = scmp.ne.s32.totalorder %s394, %s408
      %p410 = scmp.eq.s32.totalorder %s38, 0
      %p411 = por %p409, %p410
      %s413 = sadd.s32 %s412, 1
      %p416 = scmp.eq.s32.totalorder %s32, 3
      %p417 = scmp.ne.s32.totalorder %s412, %s414
      %p418 = scmp.eq.s32.totalorder %s32, 0
      %p419 = por %p417, %p418
      %p420 = scmp.ne.s32.totalorder %s412, %s414
      %p421 = scmp.eq.s32.totalorder %s37, 3
      %p422 = por %p420, %p421
      %p423 = scmp.ne.s32.totalorder %s414, %s415
      %p424 = scmp.eq.s32.totalorder %s37, 0
      %p425 = por %p423, %p424
      %p426 = scmp.ne.s32.totalorder %s414, %s415
      %p427 = scmp.eq.s32.totalorder %s38, 3
      %p428 = por %p426, %p427
      %p430 = scmp.ne.s32.totalorder %s415, %s429
      %p431 = scmp.eq.s32.totalorder %s38, 0
      %p432 = por %p430, %p431
      %p433 = scmp.le.s32.totalorder 1, %s32
      %p434 = scmp.lt.s32.totalorder %s32, 5
      %p435 = pnand %p433, %p434
      %p436 = pneg %p435
      // Predicated region
      $region9: #{tpu_custom_call.1} parent=5 // pred_check
        _
      $region10: #{tpu_custom_call.1} parent=5 // pred_check_branch
        %438 = sbr.rel (%p435) target = $region12
      $region11: #{tpu_custom_call.1} parent=5 // pred_region
        %s439 = ssub.s32 %s32, 1
        // Predicated region
        $region13: #{tpu_custom_call.1} parent=11 // pred_check
          %p440 = pneg %p53
        $region14: #{tpu_custom_call.1} parent=11 // pred_check_branch
          %442 = sbr.rel (%p440) target = $region16
        $region15: #{tpu_custom_call.1} parent=11 // pred_region
          _
        $region16: #{tpu_custom_call.1} parent=11 // pred_fallthru
          _
        // Predicated region
        $region17: #{tpu_custom_call.1} parent=11 // pred_check
          %p443 = pneg %p74
        $region18: #{tpu_custom_call.1} parent=11 // pred_check_branch
          %445 = sbr.rel (%p443) target = $region20
        $region19: #{tpu_custom_call.1} parent=11 // pred_region
          _
        $region20: #{tpu_custom_call.1} parent=11 // pred_fallthru
          _
        // Predicated region
        $region21: #{tpu_custom_call.1} parent=11 // pred_check
          %p446 = pneg %p147
        $region22: #{tpu_custom_call.1} parent=11 // pred_check_branch
          %448 = sbr.rel (%p446) target = $region24
        $region23: #{tpu_custom_call.1} parent=11 // pred_region
          _
        $region24: #{tpu_custom_call.1} parent=11 // pred_fallthru
          _
        // Predicated region
        $region25: #{tpu_custom_call.1} parent=11 // pred_check
          %p449 = pneg %p168
        $region26: #{tpu_custom_call.1} parent=11 // pred_check_branch
          %451 = sbr.rel (%p449) target = $region28
        $region27: #{tpu_custom_call.1} parent=11 // pred_region
          _
        $region28: #{tpu_custom_call.1} parent=11 // pred_fallthru
          _
        // Predicated region
        $region29: #{tpu_custom_call.1} parent=11 // pred_check
          %p452 = pneg %p215
        $region30: #{tpu_custom_call.1} parent=11 // pred_check_branch
          %454 = sbr.rel (%p452) target = $region32
        $region31: #{tpu_custom_call.1} parent=11 // pred_region
          %456 = vsyncadd [#allocation7], 0
          %s457 = sshll.u32 %s7, 4
          %s458 = int_to_ptr.hbm [resolvable:$true] %s457
          %s459 = sshll.u32 [#allocation8], 4
          %s460 = int_to_ptr.vmem [resolvable:$true] %s459
          %465 = dma.hbm_to_vmem [thread:$0]  %s458, 32768, %s460, [#allocation7], 256, 256, 16
        $region32: #{tpu_custom_call.1} parent=11 // pred_fallthru
          _
        // Predicated region
        $region33: #{tpu_custom_call.1} parent=11 // pred_check
          %p466 = pneg %p236
        $region34: #{tpu_custom_call.1} parent=11 // pred_check_branch
          %468 = sbr.rel (%p466) target = $region36
        $region35: #{tpu_custom_call.1} parent=11 // pred_region
          _
        $region36: #{tpu_custom_call.1} parent=11 // pred_fallthru
          _
        // Predicated region
        $region37: #{tpu_custom_call.1} parent=11 // pred_check
          %p469 = pneg %p257
        $region38: #{tpu_custom_call.1} parent=11 // pred_check_branch
          %471 = sbr.rel (%p469) target = $region40
        $region39: #{tpu_custom_call.1} parent=11 // pred_region
          _
        $region40: #{tpu_custom_call.1} parent=11 // pred_fallthru
          _
        // Predicated region
        $region41: #{tpu_custom_call.1} parent=11 // pred_check
          %p472 = pneg %p278
        $region42: #{tpu_custom_call.1} parent=11 // pred_check_branch
          %474 = sbr.rel (%p472) target = $region44
        $region43: #{tpu_custom_call.1} parent=11 // pred_region
          _
        $region44: #{tpu_custom_call.1} parent=11 // pred_fallthru
          _
        // Predicated region
        $region45: #{tpu_custom_call.1} parent=11 // pred_check
          %p475 = pneg %p299
        $region46: #{tpu_custom_call.1} parent=11 // pred_check_branch
          %477 = sbr.rel (%p475) target = $region48
        $region47: #{tpu_custom_call.1} parent=11 // pred_region
          %479 = vsyncadd [#allocation10], 0
          %s480 = sshll.u32 %s11, 4
          %s481 = int_to_ptr.hbm [resolvable:$true] %s480
          %s482 = sshll.u32 [#allocation9], 4
          %s483 = int_to_ptr.vmem [resolvable:$true] %s482
          %488 = dma.hbm_to_vmem [thread:$0]  %s481, 8192, %s483, [#allocation10], 128, 128, 8
        $region48: #{tpu_custom_call.1} parent=11 // pred_fallthru
          _
        // Predicated region
        $region49: #{tpu_custom_call.1} parent=11 // pred_check
          %p489 = pneg %p320
        $region50: #{tpu_custom_call.1} parent=11 // pred_check_branch
          %491 = sbr.rel (%p489) target = $region52
        $region51: #{tpu_custom_call.1} parent=11 // pred_region
          _
        $region52: #{tpu_custom_call.1} parent=11 // pred_fallthru
          _
        // Predicated region
        $region53: #{tpu_custom_call.1} parent=11 // pred_check
          %p492 = pneg %p341
        $region54: #{tpu_custom_call.1} parent=11 // pred_check_branch
          %494 = sbr.rel (%p492) target = $region56
        $region55: #{tpu_custom_call.1} parent=11 // pred_region
          _
        $region56: #{tpu_custom_call.1} parent=11 // pred_fallthru
          _
        // Predicated region
        $region57: #{tpu_custom_call.1} parent=11 // pred_check
          %p495 = pneg %p362
        $region58: #{tpu_custom_call.1} parent=11 // pred_check_branch
          %497 = sbr.rel (%p495) target = $region60
        $region59: #{tpu_custom_call.1} parent=11 // pred_region
          _
        $region60: #{tpu_custom_call.1} parent=11 // pred_fallthru
          _
        // Predicated region
        $region61: #{tpu_custom_call.1} parent=11 // pred_check
          %p498 = pneg %p383
        $region62: #{tpu_custom_call.1} parent=11 // pred_check_branch
          %500 = sbr.rel (%p498) target = $region64
        $region63: #{tpu_custom_call.1} parent=11 // pred_region
          _
        $region64: #{tpu_custom_call.1} parent=11 // pred_fallthru
          _
        // Predicated region
        $region65: #{tpu_custom_call.1} parent=11 // pred_check
          %p501 = pneg %p404
        $region66: #{tpu_custom_call.1} parent=11 // pred_check_branch
          %503 = sbr.rel (%p501) target = $region68
        $region67: #{tpu_custom_call.1} parent=11 // pred_region
          _
        $region68: #{tpu_custom_call.1} parent=11 // pred_fallthru
          _
      $region12: #{tpu_custom_call.1} parent=5 // pred_fallthru
        _
      %p504 = scmp.lt.s32.totalorder %s32, 4
      // Predicated region
      $region69: #{tpu_custom_call.1} parent=5 // pred_check
        %p505 = pneg %p504
      $region70: #{tpu_custom_call.1} parent=5 // pred_check_branch
        %507 = sbr.rel (%p505) target = $region72
      $region71: #{tpu_custom_call.1} parent=5 // pred_region
        // Predicated region
        $region73: #{tpu_custom_call.1} parent=71 // pred_check
          %p508 = pneg %p94
        $region74: #{tpu_custom_call.1} parent=71 // pred_check_branch
          %510 = sbr.rel (%p508) target = $region76
        $region75: #{tpu_custom_call.1} parent=71 // pred_region
          %s511 = sand.u32 %s84, 1
          %s512 = scalar_lea.sflag [#allocation5], %s511
          %s513 = sand.u32 %s84, 1
          %s514 = smul.addr %s513, 256
          %s515 = scalar_lea.vmem [#allocation4], %s514
          %s516 = smul.u32 2, %s32
          %518 = vsyncadd %s512, 0
          %s519 = smul.addr %s516, 4
          %s520 = scalar_lea.hbm %s2, %s519
          %s521 = sshll.u32 %s520, 4
          %s522 = int_to_ptr.hbm [resolvable:$true] %s521
          %s523 = sshll.u32 %s515, 4
          %s524 = int_to_ptr.vmem [resolvable:$true] %s523
          %529 = dma.hbm_to_vmem [thread:$0]  %s522, 4096, %s524, %s512, 512, 128, 8
        $region76: #{tpu_custom_call.1} parent=71 // pred_fallthru
          _
        // Predicated region
        $region77: #{tpu_custom_call.1} parent=71 // pred_check
          %p530 = pneg %p120
        $region78: #{tpu_custom_call.1} parent=71 // pred_check_branch
          %532 = sbr.rel (%p530) target = $region80
        $region79: #{tpu_custom_call.1} parent=71 // pred_region
          %s533 = smul.u32 2, %s32
          %p534 = scmp.lt.s32.totalorder %s533, 7
          %s535 = scalar_select %p534, %s533, 7
          %s536 = scalar_lea.vmem %s3, %s535
          %s537 = smul.u32 2, %s32
        $region80: #{tpu_custom_call.1} parent=71 // pred_fallthru
          _
        // Predicated region
        $region81: #{tpu_custom_call.1} parent=71 // pred_check
          %p538 = pneg %p188
        $region82: #{tpu_custom_call.1} parent=71 // pred_check_branch
          %540 = sbr.rel (%p538) target = $region84
        $region83: #{tpu_custom_call.1} parent=71 // pred_region
          %s541 = sand.u32 %s32, 1
          %s542 = scalar_lea.sflag [#allocation7], %s541
          %s543 = sand.u32 %s178, 1
          %s544 = smul.addr %s543, 512
          %s545 = scalar_lea.vmem [#allocation6], %s544
          %s546 = smul.u32 32, %s32
          %548 = vsyncadd %s542, 0
          %s549 = smul.addr %s546, 4
          %s550 = smul.addr %s549, 4
          %s551 = scalar_lea.hbm %s6, %s550
          %s552 = sshll.u32 %s551, 4
          %s553 = int_to_ptr.hbm [resolvable:$true] %s552
          %s554 = sshll.u32 %s545, 4
          %s555 = int_to_ptr.vmem [resolvable:$true] %s554
          %560 = dma.hbm_to_vmem [thread:$0]  %s553, 8192, %s555, %s542, 256, 256, 16
        $region84: #{tpu_custom_call.1} parent=71 // pred_fallthru
          _
      $region72: #{tpu_custom_call.1} parent=5 // pred_fallthru
        _
      %p561 = scmp.le.s32.totalorder 1, %s32
      %p562 = scmp.lt.s32.totalorder %s32, 5
      %p563 = pnand %p561, %p562
      %p564 = pneg %p563
      // Predicated region
      $region85: #{tpu_custom_call.1} parent=5 // pred_check
        _
      $region86: #{tpu_custom_call.1} parent=5 // pred_check_branch
        %566 = sbr.rel (%p563) target = $region88
      $region87: #{tpu_custom_call.1} parent=5 // pred_region
        %s567 = ssub.s32 %s32, 1
        %s568 = sand.u32 %s87, 1
        %s569 = scalar_lea.sflag [#allocation5], %s568
        %s570 = sand.u32 %s87, 1
        %s571 = smul.addr %s570, 256
        %s572 = scalar_lea.vmem [#allocation4], %s571
        // Predicated region
        $region89: #{tpu_custom_call.1} parent=87 // pred_check
          %p573 = pneg %p100
        $region90: #{tpu_custom_call.1} parent=87 // pred_check_branch
          %575 = sbr.rel (%p573) target = $region92
        $region91: #{tpu_custom_call.1} parent=87 // pred_region
          %577 = dma.done %s569, 4096
        $region92: #{tpu_custom_call.1} parent=87 // pred_fallthru
          _
        %s578 = sand.u32 %s37, 1
        %s579 = scalar_lea.sflag [#allocation7], %s578
        %s580 = sand.u32 %s181, 1
        %s581 = smul.addr %s580, 512
        %s582 = scalar_lea.vmem [#allocation6], %s581
        // Predicated region
        $region93: #{tpu_custom_call.1} parent=87 // pred_check
          %p583 = pneg %p194
        $region94: #{tpu_custom_call.1} parent=87 // pred_check_branch
          %585 = sbr.rel (%p583) target = $region96
        $region95: #{tpu_custom_call.1} parent=87 // pred_region
          %587 = dma.done %s579, 8192
        $region96: #{tpu_custom_call.1} parent=87 // pred_fallthru
          _
        // Predicated region
        $region97: #{tpu_custom_call.1} parent=87 // pred_check
          %p588 = pneg %p215
        $region98: #{tpu_custom_call.1} parent=87 // pred_check_branch
          %590 = sbr.rel (%p588) target = $region100
        $region99: #{tpu_custom_call.1} parent=87 // pred_region
          %592 = dma.done [#allocation7], 32768
        $region100: #{tpu_custom_call.1} parent=87 // pred_fallthru
          _
        // Predicated region
        $region101: #{tpu_custom_call.1} parent=87 // pred_check
          %p593 = pneg %p299
        $region102: #{tpu_custom_call.1} parent=87 // pred_check_branch
          %595 = sbr.rel (%p593) target = $region104
        $region103: #{tpu_custom_call.1} parent=87 // pred_region
          %597 = dma.done [#allocation10], 8192
        $region104: #{tpu_custom_call.1} parent=87 // pred_fallthru
          _
        %p598 = pneg %p53
        %p599 = pneg %p50
        %p600 = pneg %p74
        %p601 = pneg %p71
        %s602 = sand.u32 %s87, 1
        %s603 = scalar_lea.sflag [#allocation5], %s602
        %s604 = sand.u32 %s87, 1
        %s605 = smul.addr %s604, 256
        %s606 = scalar_lea.vmem [#allocation4], %s605
        %p607 = pneg %p100
        %p608 = pneg %p97
        %s609 = smul.u32 2, %s37
        %p610 = scmp.lt.s32.totalorder %s609, 7
        %s611 = scalar_select %p610, %s609, 7
        %s612 = scalar_lea.vmem %s3, %s611
        %p613 = pneg %p126
        %p614 = pneg %p123
        %p615 = pneg %p147
        %p616 = pneg %p144
        %p617 = pneg %p168
        %p618 = pneg %p165
        %s619 = sand.u32 %s37, 1
        %s620 = scalar_lea.sflag [#allocation7], %s619
        %s621 = sand.u32 %s181, 1
        %s622 = smul.addr %s621, 512
        %s623 = scalar_lea.vmem [#allocation6], %s622
        %p624 = pneg %p194
        %p625 = pneg %p191
        %p626 = pneg %p215
        %p627 = pneg %p212
        %p628 = pneg %p236
        %p629 = pneg %p233
        %p630 = pneg %p257
        %p631 = pneg %p254
        %p632 = pneg %p278
        %p633 = pneg %p275
        %p634 = pneg %p299
        %p635 = pneg %p296
        %p636 = pneg %p320
        %p637 = pneg %p317
        %p638 = pneg %p341
        %p639 = pneg %p338
        %p640 = pneg %p362
        %p641 = pneg %p359
        %p642 = pneg %p383
        %p643 = pneg %p380
        %p644 = pneg %p404
        %p645 = pneg %p401
        %p646 = pneg %p425
        %p647 = pneg %p422
        %s648 = smul.u32 2, %s37
        %s649 = smul.u32 2, %s37
        %p650 = scmp.lt.s32.totalorder %s649, 7
        %s651 = scalar_select %p650, %s649, 7
        %s652 = scalar_lea.vmem %s3, %s651
        %s653 = smul.u32 2, %s37
        %s654 = smul.u32 32, %s37
        %p655 = scmp.eq.s32.totalorder %s37, 0
        // Predicated region
        $region105: #{tpu_custom_call.1} parent=87 // pred_check
          %p656 = pneg %p655
        $region106: #{tpu_custom_call.1} parent=87 // pred_check_branch
          %658 = sbr.rel (%p656) target = $region108
        $region107: #{tpu_custom_call.1} parent=87 // pred_region
          %659 = vst [vmem:[#allocation2] sm:$0xff] 0.0
          %660 = vst [vmem:[#allocation2 + $0x8] sm:$0xff] 0.0
          %661 = vst [vmem:[#allocation2 + $0x10] sm:$0xff] 0.0
          %662 = vst [vmem:[#allocation2 + $0x18] sm:$0xff] 0.0
        $region108: #{tpu_custom_call.1} parent=87 // pred_fallthru
          _
        %v663 = vld [vmem:[%s0] sm:$0xff]
        %v664 = vld [vmem:[%s572] sm:$0xff]
        %v665 = vld [vmem:[%s572 + $0x8] sm:$0xff]
        %v666 = vld [vmem:[%s572 + $0x10] sm:$0xff]
        %v667 = vld [vmem:[%s572 + $0x18] sm:$0xff]
        %v668 = vld [vmem:[%s572 + $0x20] sm:$0xff]
        %v669 = vld [vmem:[%s572 + $0x28] sm:$0xff]
        %v670 = vld [vmem:[%s572 + $0x30] sm:$0xff]
        %v671 = vld [vmem:[%s572 + $0x38] sm:$0xff]
        %v672 = vld [vmem:[%s572 + $0x40] sm:$0xff]
        %v673 = vld [vmem:[%s572 + $0x48] sm:$0xff]
        %v674 = vld [vmem:[%s572 + $0x50] sm:$0xff]
        %v675 = vld [vmem:[%s572 + $0x58] sm:$0xff]
        %v676 = vld [vmem:[%s572 + $0x60] sm:$0xff]
        %v677 = vld [vmem:[%s572 + $0x68] sm:$0xff]
        %v678 = vld [vmem:[%s572 + $0x70] sm:$0xff]
        %v679 = vld [vmem:[%s572 + $0x78] sm:$0xff]
        %v680 = vld [vmem:[%s572 + $0x80] sm:$0xff]
        %v681 = vld [vmem:[%s572 + $0x88] sm:$0xff]
        %v682 = vld [vmem:[%s572 + $0x90] sm:$0xff]
        %v683 = vld [vmem:[%s572 + $0x98] sm:$0xff]
        %v684 = vld [vmem:[%s572 + $0xa0] sm:$0xff]
        %v685 = vld [vmem:[%s572 + $0xa8] sm:$0xff]
        %v686 = vld [vmem:[%s572 + $0xb0] sm:$0xff]
        %v687 = vld [vmem:[%s572 + $0xb8] sm:$0xff]
        %v688 = vld [vmem:[%s572 + $0xc0] sm:$0xff]
        %v689 = vld [vmem:[%s572 + $0xc8] sm:$0xff]
        %v690 = vld [vmem:[%s572 + $0xd0] sm:$0xff]
        %v691 = vld [vmem:[%s572 + $0xd8] sm:$0xff]
        %v692 = vld [vmem:[%s572 + $0xe0] sm:$0xff]
        %v693 = vld [vmem:[%s572 + $0xe8] sm:$0xff]
        %v694 = vld [vmem:[%s572 + $0xf0] sm:$0xff]
        %v695 = vld [vmem:[%s572 + $0xf8] sm:$0xff]
        %v696 = vld [vmem:[%s652] sm:$0x3]
        %v698 = vperm.slane %v696, 0
        %v699 = vperm.slane %v696, 1
        %v703 = vunpack.c.l.b16 %v663
        %v704 = vunpack.c.h.b16 %v663
        %v705 = vpack.c.b16 %v703, %v703
        %v706 = vpack.c.b16 %v704, %v704
        %v741 = vunpack.c.l.b16 %v664
        %v742 = vunpack.c.h.b16 %v664
        %v743 = vunpack.c.l.b16 %v665
        %v744 = vunpack.c.h.b16 %v665
        %v745 = vunpack.c.l.b16 %v666
        %v746 = vunpack.c.h.b16 %v666
        %v747 = vunpack.c.l.b16 %v667
        %v748 = vunpack.c.h.b16 %v667
        %v749 = vunpack.c.l.b16 %v668
        %v750 = vunpack.c.h.b16 %v668
        %v751 = vunpack.c.l.b16 %v669
        %v752 = vunpack.c.h.b16 %v669
        %v753 = vunpack.c.l.b16 %v670
        %v754 = vunpack.c.h.b16 %v670
        %v755 = vunpack.c.l.b16 %v671
        %v756 = vunpack.c.h.b16 %v671
        %v757 = vunpack.c.l.b16 %v672
        %v758 = vunpack.c.h.b16 %v672
        %v759 = vunpack.c.l.b16 %v673
        %v760 = vunpack.c.h.b16 %v673
        %v761 = vunpack.c.l.b16 %v674
        %v762 = vunpack.c.h.b16 %v674
        %v763 = vunpack.c.l.b16 %v675
        %v764 = vunpack.c.h.b16 %v675
        %v765 = vunpack.c.l.b16 %v676
        %v766 = vunpack.c.h.b16 %v676
        %v767 = vunpack.c.l.b16 %v677
        %v768 = vunpack.c.h.b16 %v677
        %v769 = vunpack.c.l.b16 %v678
        %v770 = vunpack.c.h.b16 %v678
        %v771 = vunpack.c.l.b16 %v679
        %v772 = vunpack.c.h.b16 %v679
        %v773 = vunpack.c.l.b16 %v680
        %v774 = vunpack.c.h.b16 %v680
        %v775 = vunpack.c.l.b16 %v681
        %v776 = vunpack.c.h.b16 %v681
        %v777 = vunpack.c.l.b16 %v682
        %v778 = vunpack.c.h.b16 %v682
        %v779 = vunpack.c.l.b16 %v683
        %v780 = vunpack.c.h.b16 %v683
        %v781 = vunpack.c.l.b16 %v684
        %v782 = vunpack.c.h.b16 %v684
        %v783 = vunpack.c.l.b16 %v685
        %v784 = vunpack.c.h.b16 %v685
        %v785 = vunpack.c.l.b16 %v686
        %v786 = vunpack.c.h.b16 %v686
        %v787 = vunpack.c.l.b16 %v687
        %v788 = vunpack.c.h.b16 %v687
        %v789 = vunpack.c.l.b16 %v688
        %v790 = vunpack.c.h.b16 %v688
        %v791 = vunpack.c.l.b16 %v689
        %v792 = vunpack.c.h.b16 %v689
        %v793 = vunpack.c.l.b16 %v690
        %v794 = vunpack.c.h.b16 %v690
        %v795 = vunpack.c.l.b16 %v691
        %v796 = vunpack.c.h.b16 %v691
        %v797 = vunpack.c.l.b16 %v692
        %v798 = vunpack.c.h.b16 %v692
        %v799 = vunpack.c.l.b16 %v693
        %v800 = vunpack.c.h.b16 %v693
        %v801 = vunpack.c.l.b16 %v694
        %v802 = vunpack.c.h.b16 %v694
        %v803 = vunpack.c.l.b16 %v695
        %v804 = vunpack.c.h.b16 %v695
        %v805 = vpack.c.b16 %v743, %v741
        %v806 = vpack.c.b16 %v744, %v742
        %v807 = vpack.c.b16 %v747, %v745
        %v808 = vpack.c.b16 %v748, %v746
        %v809 = vpack.c.b16 %v751, %v749
        %v810 = vpack.c.b16 %v752, %v750
        %v811 = vpack.c.b16 %v755, %v753
        %v812 = vpack.c.b16 %v756, %v754
        %v813 = vpack.c.b16 %v759, %v757
        %v814 = vpack.c.b16 %v760, %v758
        %v815 = vpack.c.b16 %v763, %v761
        %v816 = vpack.c.b16 %v764, %v762
        %v817 = vpack.c.b16 %v767, %v765
        %v818 = vpack.c.b16 %v768, %v766
        %v819 = vpack.c.b16 %v771, %v769
        %v820 = vpack.c.b16 %v772, %v770
        %v821 = vpack.c.b16 %v775, %v773
        %v822 = vpack.c.b16 %v776, %v774
        %v823 = vpack.c.b16 %v779, %v777
        %v824 = vpack.c.b16 %v780, %v778
        %v825 = vpack.c.b16 %v783, %v781
        %v826 = vpack.c.b16 %v784, %v782
        %v827 = vpack.c.b16 %v787, %v785
        %v828 = vpack.c.b16 %v788, %v786
        %v829 = vpack.c.b16 %v791, %v789
        %v830 = vpack.c.b16 %v792, %v790
        %v831 = vpack.c.b16 %v795, %v793
        %v832 = vpack.c.b16 %v796, %v794
        %v833 = vpack.c.b16 %v799, %v797
        %v834 = vpack.c.b16 %v800, %v798
        %v835 = vpack.c.b16 %v803, %v801
        %v836 = vpack.c.b16 %v804, %v802
        %869 = vmatpush.bf16.msra.mxu0 %v819
        %870 = vmatpush.bf16.msra.mxu0 %v817
        %871 = vmatpush.bf16.msra.mxu0 %v815
        %872 = vmatpush.bf16.msra.mxu0 %v813
        %873 = vmatpush.bf16.msra.mxu0 %v811
        %874 = vmatpush.bf16.msra.mxu0 %v809
        %875 = vmatpush.bf16.msra.mxu0 %v807
        %876 = vmatpush.bf16.msra.mxu0 %v805
        %877 = vmatmul.bf16.gmra.mxu0 %v705
        %v878 = vpop.f32.mrf.mxu0
        %v879 = vadd.f32 %v698, %v878
        %v880 = vpop.f32.mrf.mxu0
        %881 = vdwg.mxu0
        %882 = vmatpush.bf16.msra.mxu0 %v835
        %883 = vmatpush.bf16.msra.mxu0 %v833
        %884 = vmatpush.bf16.msra.mxu0 %v831
        %885 = vmatpush.bf16.msra.mxu0 %v829
        %886 = vmatpush.bf16.msra.mxu0 %v827
        %887 = vmatpush.bf16.msra.mxu0 %v825
        %888 = vmatpush.bf16.msra.mxu0 %v823
        %889 = vmatpush.bf16.msra.mxu0 %v821
        %890 = vmatmul.bf16.gmra.mxu0 %v706
        %v891 = vpop.f32.mrf.mxu0
        %v892 = vadd.f32 %v879, %v891
        %v893 = vpop.f32.mrf.mxu0
        %894 = vdwg.mxu0
        %895 = vmatpush.bf16.msra.mxu0 %v820
        %896 = vmatpush.bf16.msra.mxu0 %v818
        %897 = vmatpush.bf16.msra.mxu0 %v816
        %898 = vmatpush.bf16.msra.mxu0 %v814
        %899 = vmatpush.bf16.msra.mxu0 %v812
        %900 = vmatpush.bf16.msra.mxu0 %v810
        %901 = vmatpush.bf16.msra.mxu0 %v808
        %902 = vmatpush.bf16.msra.mxu0 %v806
        %903 = vmatmul.bf16.gmra.mxu0 %v705
        %v904 = vpop.f32.mrf.mxu0
        %v905 = vadd.f32 %v699, %v904
        %v906 = vpop.f32.mrf.mxu0
        %907 = vdwg.mxu0
        %908 = vmatpush.bf16.msra.mxu0 %v836
        %909 = vmatpush.bf16.msra.mxu0 %v834
        %910 = vmatpush.bf16.msra.mxu0 %v832
        %911 = vmatpush.bf16.msra.mxu0 %v830
        %912 = vmatpush.bf16.msra.mxu0 %v828
        %913 = vmatpush.bf16.msra.mxu0 %v826
        %914 = vmatpush.bf16.msra.mxu0 %v824
        %915 = vmatpush.bf16.msra.mxu0 %v822
        %916 = vmatmul.bf16.gmra.mxu0 %v706
        %v917 = vpop.f32.mrf.mxu0
        %v918 = vadd.f32 %v905, %v917
        %v919 = vpop.f32.mrf.mxu0
        %920 = vdwg.mxu0
        %vm921 = vcmp.gt.f32.partialorder %v892, 0.0
        %vm922 = vcmp.gt.f32.partialorder %v918, 0.0
        %v923 = vmul.f32 %v892, 0.2
        %v924 = vmul.f32 %v918, 0.2
        %v925 = vsel %vm921, %v892, %v923
        %v926 = vsel %vm922, %v918, %v924
        %v927 = vld [vmem:[#allocation2] sm:$0xff]
        %v928 = vld [vmem:[#allocation2 + $0x8] sm:$0xff]
        %v929 = vld [vmem:[#allocation2 + $0x10] sm:$0xff]
        %v930 = vld [vmem:[#allocation2 + $0x18] sm:$0xff]
        %v931 = vpack.c.bf16 %v925, %v925
        %v932 = vpack.c.bf16 %v926, %v926
        %v933 = vld [vmem:[%s582] sm:$0xff]
        %v934 = vld [vmem:[%s582 + $0x8] sm:$0xff]
        %v935 = vld [vmem:[%s582 + $0x10] sm:$0xff]
        %v936 = vld [vmem:[%s582 + $0x18] sm:$0xff]
        %v937 = vld [vmem:[%s582 + $0x20] sm:$0xff]
        %v938 = vld [vmem:[%s582 + $0x28] sm:$0xff]
        %v939 = vld [vmem:[%s582 + $0x30] sm:$0xff]
        %v940 = vld [vmem:[%s582 + $0x38] sm:$0xff]
        %v941 = vld [vmem:[%s582 + $0x40] sm:$0xff]
        %v942 = vld [vmem:[%s582 + $0x48] sm:$0xff]
        %v943 = vld [vmem:[%s582 + $0x50] sm:$0xff]
        %v944 = vld [vmem:[%s582 + $0x58] sm:$0xff]
        %v945 = vld [vmem:[%s582 + $0x60] sm:$0xff]
        %v946 = vld [vmem:[%s582 + $0x68] sm:$0xff]
        %v947 = vld [vmem:[%s582 + $0x70] sm:$0xff]
        %v948 = vld [vmem:[%s582 + $0x78] sm:$0xff]
        %v949 = vld [vmem:[%s582 + $0x80] sm:$0xff]
        %v950 = vld [vmem:[%s582 + $0x88] sm:$0xff]
        %v951 = vld [vmem:[%s582 + $0x90] sm:$0xff]
        %v952 = vld [vmem:[%s582 + $0x98] sm:$0xff]
        %v953 = vld [vmem:[%s582 + $0xa0] sm:$0xff]
        %v954 = vld [vmem:[%s582 + $0xa8] sm:$0xff]
        %v955 = vld [vmem:[%s582 + $0xb0] sm:$0xff]
        %v956 = vld [vmem:[%s582 + $0xb8] sm:$0xff]
        %v957 = vld [vmem:[%s582 + $0xc0] sm:$0xff]
        %v958 = vld [vmem:[%s582 + $0xc8] sm:$0xff]
        %v959 = vld [vmem:[%s582 + $0xd0] sm:$0xff]
        %v960 = vld [vmem:[%s582 + $0xd8] sm:$0xff]
        %v961 = vld [vmem:[%s582 + $0xe0] sm:$0xff]
        %v962 = vld [vmem:[%s582 + $0xe8] sm:$0xff]
        %v963 = vld [vmem:[%s582 + $0xf0] sm:$0xff]
        %v964 = vld [vmem:[%s582 + $0xf8] sm:$0xff]
        %v965 = vld [vmem:[%s582 + $0x100] sm:$0xff]
        %v966 = vld [vmem:[%s582 + $0x108] sm:$0xff]
        %v967 = vld [vmem:[%s582 + $0x110] sm:$0xff]
        %v968 = vld [vmem:[%s582 + $0x118] sm:$0xff]
        %v969 = vld [vmem:[%s582 + $0x120] sm:$0xff]
        %v970 = vld [vmem:[%s582 + $0x128] sm:$0xff]
        %v971 = vld [vmem:[%s582 + $0x130] sm:$0xff]
        %v972 = vld [vmem:[%s582 + $0x138] sm:$0xff]
        %v973 = vld [vmem:[%s582 + $0x140] sm:$0xff]
        %v974 = vld [vmem:[%s582 + $0x148] sm:$0xff]
        %v975 = vld [vmem:[%s582 + $0x150] sm:$0xff]
        %v976 = vld [vmem:[%s582 + $0x158] sm:$0xff]
        %v977 = vld [vmem:[%s582 + $0x160] sm:$0xff]
        %v978 = vld [vmem:[%s582 + $0x168] sm:$0xff]
        %v979 = vld [vmem:[%s582 + $0x170] sm:$0xff]
        %v980 = vld [vmem:[%s582 + $0x178] sm:$0xff]
        %v981 = vld [vmem:[%s582 + $0x180] sm:$0xff]
        %v982 = vld [vmem:[%s582 + $0x188] sm:$0xff]
        %v983 = vld [vmem:[%s582 + $0x190] sm:$0xff]
        %v984 = vld [vmem:[%s582 + $0x198] sm:$0xff]
        %v985 = vld [vmem:[%s582 + $0x1a0] sm:$0xff]
        %v986 = vld [vmem:[%s582 + $0x1a8] sm:$0xff]
        %v987 = vld [vmem:[%s582 + $0x1b0] sm:$0xff]
        %v988 = vld [vmem:[%s582 + $0x1b8] sm:$0xff]
        %v989 = vld [vmem:[%s582 + $0x1c0] sm:$0xff]
        %v990 = vld [vmem:[%s582 + $0x1c8] sm:$0xff]
        %v991 = vld [vmem:[%s582 + $0x1d0] sm:$0xff]
        %v992 = vld [vmem:[%s582 + $0x1d8] sm:$0xff]
        %v993 = vld [vmem:[%s582 + $0x1e0] sm:$0xff]
        %v994 = vld [vmem:[%s582 + $0x1e8] sm:$0xff]
        %v995 = vld [vmem:[%s582 + $0x1f0] sm:$0xff]
        %v996 = vld [vmem:[%s582 + $0x1f8] sm:$0xff]
        %v1061 = vunpack.c.l.b16 %v933
        %v1062 = vunpack.c.h.b16 %v933
        %v1063 = vunpack.c.l.b16 %v934
        %v1064 = vunpack.c.h.b16 %v934
        %v1065 = vunpack.c.l.b16 %v935
        %v1066 = vunpack.c.h.b16 %v935
        %v1067 = vunpack.c.l.b16 %v936
        %v1068 = vunpack.c.h.b16 %v936
        %v1069 = vunpack.c.l.b16 %v937
        %v1070 = vunpack.c.h.b16 %v937
        %v1071 = vunpack.c.l.b16 %v938
        %v1072 = vunpack.c.h.b16 %v938
        %v1073 = vunpack.c.l.b16 %v939
        %v1074 = vunpack.c.h.b16 %v939
        %v1075 = vunpack.c.l.b16 %v940
        %v1076 = vunpack.c.h.b16 %v940
        %v1077 = vunpack.c.l.b16 %v941
        %v1078 = vunpack.c.h.b16 %v941
        %v1079 = vunpack.c.l.b16 %v942
        %v1080 = vunpack.c.h.b16 %v942
        %v1081 = vunpack.c.l.b16 %v943
        %v1082 = vunpack.c.h.b16 %v943
        %v1083 = vunpack.c.l.b16 %v944
        %v1084 = vunpack.c.h.b16 %v944
        %v1085 = vunpack.c.l.b16 %v945
        %v1086 = vunpack.c.h.b16 %v945
        %v1087 = vunpack.c.l.b16 %v946
        %v1088 = vunpack.c.h.b16 %v946
        %v1089 = vunpack.c.l.b16 %v947
        %v1090 = vunpack.c.h.b16 %v947
        %v1091 = vunpack.c.l.b16 %v948
        %v1092 = vunpack.c.h.b16 %v948
        %v1093 = vunpack.c.l.b16 %v949
        %v1094 = vunpack.c.h.b16 %v949
        %v1095 = vunpack.c.l.b16 %v950
        %v1096 = vunpack.c.h.b16 %v950
        %v1097 = vunpack.c.l.b16 %v951
        %v1098 = vunpack.c.h.b16 %v951
        %v1099 = vunpack.c.l.b16 %v952
        %v1100 = vunpack.c.h.b16 %v952
        %v1101 = vunpack.c.l.b16 %v953
        %v1102 = vunpack.c.h.b16 %v953
        %v1103 = vunpack.c.l.b16 %v954
        %v1104 = vunpack.c.h.b16 %v954
        %v1105 = vunpack.c.l.b16 %v955
        %v1106 = vunpack.c.h.b16 %v955
        %v1107 = vunpack.c.l.b16 %v956
        %v1108 = vunpack.c.h.b16 %v956
        %v1109 = vunpack.c.l.b16 %v957
        %v1110 = vunpack.c.h.b16 %v957
        %v1111 = vunpack.c.l.b16 %v958
        %v1112 = vunpack.c.h.b16 %v958
        %v1113 = vunpack.c.l.b16 %v959
        %v1114 = vunpack.c.h.b16 %v959
        %v1115 = vunpack.c.l.b16 %v960
        %v1116 = vunpack.c.h.b16 %v960
        %v1117 = vunpack.c.l.b16 %v961
        %v1118 = vunpack.c.h.b16 %v961
        %v1119 = vunpack.c.l.b16 %v962
        %v1120 = vunpack.c.h.b16 %v962
        %v1121 = vunpack.c.l.b16 %v963
        %v1122 = vunpack.c.h.b16 %v963
        %v1123 = vunpack.c.l.b16 %v964
        %v1124 = vunpack.c.h.b16 %v964
        %v1125 = vunpack.c.l.b16 %v965
        %v1126 = vunpack.c.h.b16 %v965
        %v1127 = vunpack.c.l.b16 %v966
        %v1128 = vunpack.c.h.b16 %v966
        %v1129 = vunpack.c.l.b16 %v967
        %v1130 = vunpack.c.h.b16 %v967
        %v1131 = vunpack.c.l.b16 %v968
        %v1132 = vunpack.c.h.b16 %v968
        %v1133 = vunpack.c.l.b16 %v969
        %v1134 = vunpack.c.h.b16 %v969
        %v1135 = vunpack.c.l.b16 %v970
        %v1136 = vunpack.c.h.b16 %v970
        %v1137 = vunpack.c.l.b16 %v971
        %v1138 = vunpack.c.h.b16 %v971
        %v1139 = vunpack.c.l.b16 %v972
        %v1140 = vunpack.c.h.b16 %v972
        %v1141 = vunpack.c.l.b16 %v973
        %v1142 = vunpack.c.h.b16 %v973
        %v1143 = vunpack.c.l.b16 %v974
        %v1144 = vunpack.c.h.b16 %v974
        %v1145 = vunpack.c.l.b16 %v975
        %v1146 = vunpack.c.h.b16 %v975
        %v1147 = vunpack.c.l.b16 %v976
        %v1148 = vunpack.c.h.b16 %v976
        %v1149 = vunpack.c.l.b16 %v977
        %v1150 = vunpack.c.h.b16 %v977
        %v1151 = vunpack.c.l.b16 %v978
        %v1152 = vunpack.c.h.b16 %v978
        %v1153 = vunpack.c.l.b16 %v979
        %v1154 = vunpack.c.h.b16 %v979
        %v1155 = vunpack.c.l.b16 %v980
        %v1156 = vunpack.c.h.b16 %v980
        %v1157 = vunpack.c.l.b16 %v981
        %v1158 = vunpack.c.h.b16 %v981
        %v1159 = vunpack.c.l.b16 %v982
        %v1160 = vunpack.c.h.b16 %v982
        %v1161 = vunpack.c.l.b16 %v983
        %v1162 = vunpack.c.h.b16 %v983
        %v1163 = vunpack.c.l.b16 %v984
        %v1164 = vunpack.c.h.b16 %v984
        %v1165 = vunpack.c.l.b16 %v985
        %v1166 = vunpack.c.h.b16 %v985
        %v1167 = vunpack.c.l.b16 %v986
        %v1168 = vunpack.c.h.b16 %v986
        %v1169 = vunpack.c.l.b16 %v987
        %v1170 = vunpack.c.h.b16 %v987
        %v1171 = vunpack.c.l.b16 %v988
        %v1172 = vunpack.c.h.b16 %v988
        %v1173 = vunpack.c.l.b16 %v989
        %v1174 = vunpack.c.h.b16 %v989
        %v1175 = vunpack.c.l.b16 %v990
        %v1176 = vunpack.c.h.b16 %v990
        %v1177 = vunpack.c.l.b16 %v991
        %v1178 = vunpack.c.h.b16 %v991
        %v1179 = vunpack.c.l.b16 %v992
        %v1180 = vunpack.c.h.b16 %v992
        %v1181 = vunpack.c.l.b16 %v993
        %v1182 = vunpack.c.h.b16 %v993
        %v1183 = vunpack.c.l.b16 %v994
        %v1184 = vunpack.c.h.b16 %v994
        %v1185 = vunpack.c.l.b16 %v995
        %v1186 = vunpack.c.h.b16 %v995
        %v1187 = vunpack.c.l.b16 %v996
        %v1188 = vunpack.c.h.b16 %v996
        %v1189 = vpack.c.b16 %v1065, %v1061
        %v1190 = vpack.c.b16 %v1066, %v1062
        %v1191 = vpack.c.b16 %v1067, %v1063
        %v1192 = vpack.c.b16 %v1068, %v1064
        %v1193 = vpack.c.b16 %v1073, %v1069
        %v1194 = vpack.c.b16 %v1074, %v1070
        %v1195 = vpack.c.b16 %v1075, %v1071
        %v1196 = vpack.c.b16 %v1076, %v1072
        %v1197 = vpack.c.b16 %v1081, %v1077
        %v1198 = vpack.c.b16 %v1082, %v1078
        %v1199 = vpack.c.b16 %v1083, %v1079
        %v1200 = vpack.c.b16 %v1084, %v1080
        %v1201 = vpack.c.b16 %v1089, %v1085
        %v1202 = vpack.c.b16 %v1090, %v1086
        %v1203 = vpack.c.b16 %v1091, %v1087
        %v1204 = vpack.c.b16 %v1092, %v1088
        %v1205 = vpack.c.b16 %v1097, %v1093
        %v1206 = vpack.c.b16 %v1098, %v1094
        %v1207 = vpack.c.b16 %v1099, %v1095
        %v1208 = vpack.c.b16 %v1100, %v1096
        %v1209 = vpack.c.b16 %v1105, %v1101
        %v1210 = vpack.c.b16 %v1106, %v1102
        %v1211 = vpack.c.b16 %v1107, %v1103
        %v1212 = vpack.c.b16 %v1108, %v1104
        %v1213 = vpack.c.b16 %v1113, %v1109
        %v1214 = vpack.c.b16 %v1114, %v1110
        %v1215 = vpack.c.b16 %v1115, %v1111
        %v1216 = vpack.c.b16 %v1116, %v1112
        %v1217 = vpack.c.b16 %v1121, %v1117
        %v1218 = vpack.c.b16 %v1122, %v1118
        %v1219 = vpack.c.b16 %v1123, %v1119
        %v1220 = vpack.c.b16 %v1124, %v1120
        %v1221 = vpack.c.b16 %v1129, %v1125
        %v1222 = vpack.c.b16 %v1130, %v1126
        %v1223 = vpack.c.b16 %v1131, %v1127
        %v1224 = vpack.c.b16 %v1132, %v1128
        %v1225 = vpack.c.b16 %v1137, %v1133
        %v1226 = vpack.c.b16 %v1138, %v1134
        %v1227 = vpack.c.b16 %v1139, %v1135
        %v1228 = vpack.c.b16 %v1140, %v1136
        %v1229 = vpack.c.b16 %v1145, %v1141
        %v1230 = vpack.c.b16 %v1146, %v1142
        %v1231 = vpack.c.b16 %v1147, %v1143
        %v1232 = vpack.c.b16 %v1148, %v1144
        %v1233 = vpack.c.b16 %v1153, %v1149
        %v1234 = vpack.c.b16 %v1154, %v1150
        %v1235 = vpack.c.b16 %v1155, %v1151
        %v1236 = vpack.c.b16 %v1156, %v1152
        %v1237 = vpack.c.b16 %v1161, %v1157
        %v1238 = vpack.c.b16 %v1162, %v1158
        %v1239 = vpack.c.b16 %v1163, %v1159
        %v1240 = vpack.c.b16 %v1164, %v1160
        %v1241 = vpack.c.b16 %v1169, %v1165
        %v1242 = vpack.c.b16 %v1170, %v1166
        %v1243 = vpack.c.b16 %v1171, %v1167
        %v1244 = vpack.c.b16 %v1172, %v1168
        %v1245 = vpack.c.b16 %v1177, %v1173
        %v1246 = vpack.c.b16 %v1178, %v1174
        %v1247 = vpack.c.b16 %v1179, %v1175
        %v1248 = vpack.c.b16 %v1180, %v1176
        %v1249 = vpack.c.b16 %v1185, %v1181
        %v1250 = vpack.c.b16 %v1186, %v1182
        %v1251 = vpack.c.b16 %v1187, %v1183
        %v1252 = vpack.c.b16 %v1188, %v1184
        %1317 = vmatpush.bf16.msra.mxu0 %v1217
        %1318 = vmatpush.bf16.msra.mxu0 %v1213
        %1319 = vmatpush.bf16.msra.mxu0 %v1209
        %1320 = vmatpush.bf16.msra.mxu0 %v1205
        %1321 = vmatpush.bf16.msra.mxu0 %v1201
        %1322 = vmatpush.bf16.msra.mxu0 %v1197
        %1323 = vmatpush.bf16.msra.mxu0 %v1193
        %1324 = vmatpush.bf16.msra.mxu0 %v1189
        %1325 = vmatmul.bf16.gmra.mxu0 %v931
        %v1326 = vpop.f32.mrf.mxu0
        %v1327 = vadd.f32 0.0, %v1326
        %v1328 = vpop.f32.mrf.mxu0
        %1329 = vdwg.mxu0
        %1330 = vmatpush.bf16.msra.mxu0 %v1249
        %1331 = vmatpush.bf16.msra.mxu0 %v1245
        %1332 = vmatpush.bf16.msra.mxu0 %v1241
        %1333 = vmatpush.bf16.msra.mxu0 %v1237
        %1334 = vmatpush.bf16.msra.mxu0 %v1233
        %1335 = vmatpush.bf16.msra.mxu0 %v1229
        %1336 = vmatpush.bf16.msra.mxu0 %v1225
        %1337 = vmatpush.bf16.msra.mxu0 %v1221
        %1338 = vmatmul.bf16.gmra.mxu0 %v932
        %v1339 = vpop.f32.mrf.mxu0
        %v1340 = vadd.f32 %v1327, %v1339
        %v1341 = vpop.f32.mrf.mxu0
        %1342 = vdwg.mxu0
        %1343 = vmatpush.bf16.msra.mxu0 %v1218
        %1344 = vmatpush.bf16.msra.mxu0 %v1214
        %1345 = vmatpush.bf16.msra.mxu0 %v1210
        %1346 = vmatpush.bf16.msra.mxu0 %v1206
        %1347 = vmatpush.bf16.msra.mxu0 %v1202
        %1348 = vmatpush.bf16.msra.mxu0 %v1198
        %1349 = vmatpush.bf16.msra.mxu0 %v1194
        %1350 = vmatpush.bf16.msra.mxu0 %v1190
        %1351 = vmatmul.bf16.gmra.mxu0 %v931
        %v1352 = vpop.f32.mrf.mxu0
        %v1353 = vadd.f32 0.0, %v1352
        %v1354 = vpop.f32.mrf.mxu0
        %1355 = vdwg.mxu0
        %1356 = vmatpush.bf16.msra.mxu0 %v1250
        %1357 = vmatpush.bf16.msra.mxu0 %v1246
        %1358 = vmatpush.bf16.msra.mxu0 %v1242
        %1359 = vmatpush.bf16.msra.mxu0 %v1238
        %1360 = vmatpush.bf16.msra.mxu0 %v1234
        %1361 = vmatpush.bf16.msra.mxu0 %v1230
        %1362 = vmatpush.bf16.msra.mxu0 %v1226
        %1363 = vmatpush.bf16.msra.mxu0 %v1222
        %1364 = vmatmul.bf16.gmra.mxu0 %v932
        %v1365 = vpop.f32.mrf.mxu0
        %v1366 = vadd.f32 %v1353, %v1365
        %v1367 = vpop.f32.mrf.mxu0
        %1368 = vdwg.mxu0
        %1369 = vmatpush.bf16.msra.mxu0 %v1219
        %1370 = vmatpush.bf16.msra.mxu0 %v1215
        %1371 = vmatpush.bf16.msra.mxu0 %v1211
        %1372 = vmatpush.bf16.msra.mxu0 %v1207
        %1373 = vmatpush.bf16.msra.mxu0 %v1203
        %1374 = vmatpush.bf16.msra.mxu0 %v1199
        %1375 = vmatpush.bf16.msra.mxu0 %v1195
        %1376 = vmatpush.bf16.msra.mxu0 %v1191
        %1377 = vmatmul.bf16.gmra.mxu0 %v931
        %v1378 = vpop.f32.mrf.mxu0
        %v1379 = vadd.f32 0.0, %v1378
        %v1380 = vpop.f32.mrf.mxu0
        %1381 = vdwg.mxu0
        %1382 = vmatpush.bf16.msra.mxu0 %v1251
        %1383 = vmatpush.bf16.msra.mxu0 %v1247
        %1384 = vmatpush.bf16.msra.mxu0 %v1243
        %1385 = vmatpush.bf16.msra.mxu0 %v1239
        %1386 = vmatpush.bf16.msra.mxu0 %v1235
        %1387 = vmatpush.bf16.msra.mxu0 %v1231
        %1388 = vmatpush.bf16.msra.mxu0 %v1227
        %1389 = vmatpush.bf16.msra.mxu0 %v1223
        %1390 = vmatmul.bf16.gmra.mxu0 %v932
        %v1391 = vpop.f32.mrf.mxu0
        %v1392 = vadd.f32 %v1379, %v1391
        %v1393 = vpop.f32.mrf.mxu0
        %1394 = vdwg.mxu0
        %1395 = vmatpush.bf16.msra.mxu0 %v1220
        %1396 = vmatpush.bf16.msra.mxu0 %v1216
        %1397 = vmatpush.bf16.msra.mxu0 %v1212
        %1398 = vmatpush.bf16.msra.mxu0 %v1208
        %1399 = vmatpush.bf16.msra.mxu0 %v1204
        %1400 = vmatpush.bf16.msra.mxu0 %v1200
        %1401 = vmatpush.bf16.msra.mxu0 %v1196
        %1402 = vmatpush.bf16.msra.mxu0 %v1192
        %1403 = vmatmul.bf16.gmra.mxu0 %v931
        %v1404 = vpop.f32.mrf.mxu0
        %v1405 = vadd.f32 0.0, %v1404
        %v1406 = vpop.f32.mrf.mxu0
        %1407 = vdwg.mxu0
        %1408 = vmatpush.bf16.msra.mxu0 %v1252
        %1409 = vmatpush.bf16.msra.mxu0 %v1248
        %1410 = vmatpush.bf16.msra.mxu0 %v1244
        %1411 = vmatpush.bf16.msra.mxu0 %v1240
        %1412 = vmatpush.bf16.msra.mxu0 %v1236
        %1413 = vmatpush.bf16.msra.mxu0 %v1232
        %1414 = vmatpush.bf16.msra.mxu0 %v1228
        %1415 = vmatpush.bf16.msra.mxu0 %v1224
        %1416 = vmatmul.bf16.gmra.mxu0 %v932
        %v1417 = vpop.f32.mrf.mxu0
        %v1418 = vadd.f32 %v1405, %v1417
        %v1419 = vpop.f32.mrf.mxu0
        %1420 = vdwg.mxu0
        %v1421 = vadd.f32 %v927, %v1340
        %v1422 = vadd.f32 %v928, %v1366
        %v1423 = vadd.f32 %v929, %v1392
        %v1424 = vadd.f32 %v930, %v1418
        %1425 = vst [vmem:[#allocation2] sm:$0xff] %v1421
        %1426 = vst [vmem:[#allocation2 + $0x8] sm:$0xff] %v1422
        %1427 = vst [vmem:[#allocation2 + $0x10] sm:$0xff] %v1423
        %1428 = vst [vmem:[#allocation2 + $0x18] sm:$0xff] %v1424
        %p1429 = scmp.eq.s32.totalorder %s37, 3
        // Predicated region
        $region109: #{tpu_custom_call.1} parent=87 // pred_check
          %p1430 = pneg %p1429
        $region110: #{tpu_custom_call.1} parent=87 // pred_check_branch
          %1432 = sbr.rel (%p1430) target = $region112
        $region111: #{tpu_custom_call.1} parent=87 // pred_region
          %v1433 = vld [vmem:[%s1] sm:$0xff]
          %v1434 = vld [vmem:[%s4] sm:$0xff]
          %v1435 = vld [vmem:[%s4 + $0x8] sm:$0xff]
          %v1436 = vld [vmem:[%s4 + $0x10] sm:$0xff]
          %v1437 = vld [vmem:[%s4 + $0x18] sm:$0xff]
          %v1438 = vld [vmem:[%s4 + $0x20] sm:$0xff]
          %v1439 = vld [vmem:[%s4 + $0x28] sm:$0xff]
          %v1440 = vld [vmem:[%s4 + $0x30] sm:$0xff]
          %v1441 = vld [vmem:[%s4 + $0x38] sm:$0xff]
          %v1442 = vld [vmem:[%s4 + $0x40] sm:$0x3]
          %v1443 = vld [vmem:[%s4 + $0x48] sm:$0x3]
          %v1444 = vld [vmem:[%s4 + $0x50] sm:$0x3]
          %v1445 = vld [vmem:[%s4 + $0x58] sm:$0x3]
          %v1446 = vld [vmem:[%s4 + $0x60] sm:$0x3]
          %v1447 = vld [vmem:[%s4 + $0x68] sm:$0x3]
          %v1448 = vld [vmem:[%s4 + $0x70] sm:$0x3]
          %v1449 = vld [vmem:[%s4 + $0x78] sm:$0x3]
          %v1450 = vld [vmem:[%s5] sm:$0xff]
          %v1452 = vperm.slane %v1450, 0
          %v1453 = vperm.slane %v1450, 1
          %v1454 = vperm.slane %v1450, 2
          %v1455 = vperm.slane %v1450, 3
          %v1456 = vperm.slane %v1450, 4
          %v1457 = vperm.slane %v1450, 5
          %v1458 = vperm.slane %v1450, 6
          %v1459 = vperm.slane %v1450, 7
          %vm1468 = vcmask 80896
          %v1470 = vsel %vm1468, %v1433, 0
          %vm1472 = vcmask 1041408
          %v1474 = vsel %vm1472, %v1442, 0
          %v1477 = vsel %vm1472, %v1443, 0
          %v1480 = vsel %vm1472, %v1444, 0
          %v1483 = vsel %vm1472, %v1445, 0
          %v1486 = vsel %vm1472, %v1446, 0
          %v1489 = vsel %vm1472, %v1447, 0
          %v1492 = vsel %vm1472, %v1448, 0
          %v1495 = vsel %vm1472, %v1449, 0
          %1497 = vmatpush.msra.mxu0 0.0
          %1498 = vmatpush.msra.mxu0 0.0
          %1499 = vmatpush.msra.mxu0 0.0
          %1500 = vmatpush.msra.mxu0 0.0
          %1501 = vmatpush.msra.mxu0 0.0
          %1502 = vmatpush.msra.mxu0 0.0
          %1503 = vmatpush.msra.mxu0 0.0
          %1504 = vmatpush.msra.mxu0 0.0
          %1505 = vmatpush.msra.mxu0 0.0
          %1506 = vmatpush.msra.mxu0 0.0
          %1507 = vmatpush.msra.mxu0 0.0
          %1508 = vmatpush.msra.mxu0 0.0
          %1509 = vmatpush.msra.mxu0 0.0
          %1510 = vmatpush.msra.mxu0 0.0
          %1511 = vmatpush.msra.mxu0 %v1474
          %1512 = vmatpush.msra.mxu0 %v1434
          %1513 = vmatmul.f32.gmra.mxu0 %v1470
          %v1514 = vpop.f32.mrf.mxu0
          %v1515 = vadd.f32 %v1452, %v1514
          %1516 = vdwg.mxu0
          %1517 = vmatpush.msra.mxu0 0.0
          %1518 = vmatpush.msra.mxu0 0.0
          %1519 = vmatpush.msra.mxu0 0.0
          %1520 = vmatpush.msra.mxu0 0.0
          %1521 = vmatpush.msra.mxu0 0.0
          %1522 = vmatpush.msra.mxu0 0.0
          %1523 = vmatpush.msra.mxu0 0.0
          %1524 = vmatpush.msra.mxu0 0.0
          %1525 = vmatpush.msra.mxu0 0.0
          %1526 = vmatpush.msra.mxu0 0.0
          %1527 = vmatpush.msra.mxu0 0.0
          %1528 = vmatpush.msra.mxu0 0.0
          %1529 = vmatpush.msra.mxu0 0.0
          %1530 = vmatpush.msra.mxu0 0.0
          %1531 = vmatpush.msra.mxu0 %v1477
          %1532 = vmatpush.msra.mxu0 %v1435
          %1533 = vmatmul.f32.gmra.mxu0 %v1470
          %v1534 = vpop.f32.mrf.mxu0
          %v1535 = vadd.f32 %v1453, %v1534
          %1536 = vdwg.mxu0
          %1537 = vmatpush.msra.mxu0 0.0
          %1538 = vmatpush.msra.mxu0 0.0
          %1539 = vmatpush.msra.mxu0 0.0
          %1540 = vmatpush.msra.mxu0 0.0
          %1541 = vmatpush.msra.mxu0 0.0
          %1542 = vmatpush.msra.mxu0 0.0
          %1543 = vmatpush.msra.mxu0 0.0
          %1544 = vmatpush.msra.mxu0 0.0
          %1545 = vmatpush.msra.mxu0 0.0
          %1546 = vmatpush.msra.mxu0 0.0
          %1547 = vmatpush.msra.mxu0 0.0
          %1548 = vmatpush.msra.mxu0 0.0
          %1549 = vmatpush.msra.mxu0 0.0
          %1550 = vmatpush.msra.mxu0 0.0
          %1551 = vmatpush.msra.mxu0 %v1480
          %1552 = vmatpush.msra.mxu0 %v1436
          %1553 = vmatmul.f32.gmra.mxu0 %v1470
          %v1554 = vpop.f32.mrf.mxu0
          %v1555 = vadd.f32 %v1454, %v1554
          %1556 = vdwg.mxu0
          %1557 = vmatpush.msra.mxu0 0.0
          %1558 = vmatpush.msra.mxu0 0.0
          %1559 = vmatpush.msra.mxu0 0.0
          %1560 = vmatpush.msra.mxu0 0.0
          %1561 = vmatpush.msra.mxu0 0.0
          %1562 = vmatpush.msra.mxu0 0.0
          %1563 = vmatpush.msra.mxu0 0.0
          %1564 = vmatpush.msra.mxu0 0.0
          %1565 = vmatpush.msra.mxu0 0.0
          %1566 = vmatpush.msra.mxu0 0.0
          %1567 = vmatpush.msra.mxu0 0.0
          %1568 = vmatpush.msra.mxu0 0.0
          %1569 = vmatpush.msra.mxu0 0.0
          %1570 = vmatpush.msra.mxu0 0.0
          %1571 = vmatpush.msra.mxu0 %v1483
          %1572 = vmatpush.msra.mxu0 %v1437
          %1573 = vmatmul.f32.gmra.mxu0 %v1470
          %v1574 = vpop.f32.mrf.mxu0
          %v1575 = vadd.f32 %v1455, %v1574
          %1576 = vdwg.mxu0
          %1577 = vmatpush.msra.mxu0 0.0
          %1578 = vmatpush.msra.mxu0 0.0
          %1579 = vmatpush.msra.mxu0 0.0
          %1580 = vmatpush.msra.mxu0 0.0
          %1581 = vmatpush.msra.mxu0 0.0
          %1582 = vmatpush.msra.mxu0 0.0
          %1583 = vmatpush.msra.mxu0 0.0
          %1584 = vmatpush.msra.mxu0 0.0
          %1585 = vmatpush.msra.mxu0 0.0
          %1586 = vmatpush.msra.mxu0 0.0
          %1587 = vmatpush.msra.mxu0 0.0
          %1588 = vmatpush.msra.mxu0 0.0
          %1589 = vmatpush.msra.mxu0 0.0
          %1590 = vmatpush.msra.mxu0 0.0
          %1591 = vmatpush.msra.mxu0 %v1486
          %1592 = vmatpush.msra.mxu0 %v1438
          %1593 = vmatmul.f32.gmra.mxu0 %v1470
          %v1594 = vpop.f32.mrf.mxu0
          %v1595 = vadd.f32 %v1456, %v1594
          %1596 = vdwg.mxu0
          %1597 = vmatpush.msra.mxu0 0.0
          %1598 = vmatpush.msra.mxu0 0.0
          %1599 = vmatpush.msra.mxu0 0.0
          %1600 = vmatpush.msra.mxu0 0.0
          %1601 = vmatpush.msra.mxu0 0.0
          %1602 = vmatpush.msra.mxu0 0.0
          %1603 = vmatpush.msra.mxu0 0.0
          %1604 = vmatpush.msra.mxu0 0.0
          %1605 = vmatpush.msra.mxu0 0.0
          %1606 = vmatpush.msra.mxu0 0.0
          %1607 = vmatpush.msra.mxu0 0.0
          %1608 = vmatpush.msra.mxu0 0.0
          %1609 = vmatpush.msra.mxu0 0.0
          %1610 = vmatpush.msra.mxu0 0.0
          %1611 = vmatpush.msra.mxu0 %v1489
          %1612 = vmatpush.msra.mxu0 %v1439
          %1613 = vmatmul.f32.gmra.mxu0 %v1470
          %v1614 = vpop.f32.mrf.mxu0
          %v1615 = vadd.f32 %v1457, %v1614
          %1616 = vdwg.mxu0
          %1617 = vmatpush.msra.mxu0 0.0
          %1618 = vmatpush.msra.mxu0 0.0
          %1619 = vmatpush.msra.mxu0 0.0
          %1620 = vmatpush.msra.mxu0 0.0
          %1621 = vmatpush.msra.mxu0 0.0
          %1622 = vmatpush.msra.mxu0 0.0
          %1623 = vmatpush.msra.mxu0 0.0
          %1624 = vmatpush.msra.mxu0 0.0
          %1625 = vmatpush.msra.mxu0 0.0
          %1626 = vmatpush.msra.mxu0 0.0
          %1627 = vmatpush.msra.mxu0 0.0
          %1628 = vmatpush.msra.mxu0 0.0
          %1629 = vmatpush.msra.mxu0 0.0
          %1630 = vmatpush.msra.mxu0 0.0
          %1631 = vmatpush.msra.mxu0 %v1492
          %1632 = vmatpush.msra.mxu0 %v1440
          %1633 = vmatmul.f32.gmra.mxu0 %v1470
          %v1634 = vpop.f32.mrf.mxu0
          %v1635 = vadd.f32 %v1458, %v1634
          %1636 = vdwg.mxu0
          %1637 = vmatpush.msra.mxu0 0.0
          %1638 = vmatpush.msra.mxu0 0.0
          %1639 = vmatpush.msra.mxu0 0.0
          %1640 = vmatpush.msra.mxu0 0.0
          %1641 = vmatpush.msra.mxu0 0.0
          %1642 = vmatpush.msra.mxu0 0.0
          %1643 = vmatpush.msra.mxu0 0.0
          %1644 = vmatpush.msra.mxu0 0.0
          %1645 = vmatpush.msra.mxu0 0.0
          %1646 = vmatpush.msra.mxu0 0.0
          %1647 = vmatpush.msra.mxu0 0.0
          %1648 = vmatpush.msra.mxu0 0.0
          %1649 = vmatpush.msra.mxu0 0.0
          %1650 = vmatpush.msra.mxu0 0.0
          %1651 = vmatpush.msra.mxu0 %v1495
          %1652 = vmatpush.msra.mxu0 %v1441
          %1653 = vmatmul.f32.gmra.mxu0 %v1470
          %v1654 = vpop.f32.mrf.mxu0
          %v1655 = vadd.f32 %v1459, %v1654
          %1656 = vdwg.mxu0
          %vm1657 = vcmp.gt.f32.partialorder %v1515, 0.0
          %vm1658 = vcmp.gt.f32.partialorder %v1535, 0.0
          %vm1659 = vcmp.gt.f32.partialorder %v1555, 0.0
          %vm1660 = vcmp.gt.f32.partialorder %v1575, 0.0
          %vm1661 = vcmp.gt.f32.partialorder %v1595, 0.0
          %vm1662 = vcmp.gt.f32.partialorder %v1615, 0.0
          %vm1663 = vcmp.gt.f32.partialorder %v1635, 0.0
          %vm1664 = vcmp.gt.f32.partialorder %v1655, 0.0
          %v1665 = vmul.f32 %v1515, 0.2
          %v1666 = vmul.f32 %v1535, 0.2
          %v1667 = vmul.f32 %v1555, 0.2
          %v1668 = vmul.f32 %v1575, 0.2
          %v1669 = vmul.f32 %v1595, 0.2
          %v1670 = vmul.f32 %v1615, 0.2
          %v1671 = vmul.f32 %v1635, 0.2
          %v1672 = vmul.f32 %v1655, 0.2
          %v1673 = vsel %vm1657, %v1515, %v1665
          %v1674 = vsel %vm1658, %v1535, %v1666
          %v1675 = vsel %vm1659, %v1555, %v1667
          %v1676 = vsel %vm1660, %v1575, %v1668
          %v1677 = vsel %vm1661, %v1595, %v1669
          %v1678 = vsel %vm1662, %v1615, %v1670
          %v1679 = vsel %vm1663, %v1635, %v1671
          %v1680 = vsel %vm1664, %v1655, %v1672
          %v1681 = vld [vmem:[#allocation2] sm:$0xff]
          %v1682 = vld [vmem:[#allocation2 + $0x8] sm:$0xff]
          %v1683 = vld [vmem:[#allocation2 + $0x10] sm:$0xff]
          %v1684 = vld [vmem:[#allocation2 + $0x18] sm:$0xff]
          %v1685 = vpack.c.bf16 %v1673, %v1673
          %v1686 = vpack.c.bf16 %v1674, %v1674
          %v1687 = vpack.c.bf16 %v1675, %v1675
          %v1688 = vpack.c.bf16 %v1676, %v1676
          %v1689 = vpack.c.bf16 %v1677, %v1677
          %v1690 = vpack.c.bf16 %v1678, %v1678
          %v1691 = vpack.c.bf16 %v1679, %v1679
          %v1692 = vpack.c.bf16 %v1680, %v1680
          %v1693 = vld [vmem:[#allocation8] sm:$0xff]
          %v1694 = vld [vmem:[#allocation8 + $0x8] sm:$0xff]
          %v1695 = vld [vmem:[#allocation8 + $0x10] sm:$0xff]
          %v1696 = vld [vmem:[#allocation8 + $0x18] sm:$0xff]
          %v1697 = vld [vmem:[#allocation8 + $0x20] sm:$0xff]
          %v1698 = vld [vmem:[#allocation8 + $0x28] sm:$0xff]
          %v1699 = vld [vmem:[#allocation8 + $0x30] sm:$0xff]
          %v1700 = vld [vmem:[#allocation8 + $0x38] sm:$0xff]
          %v1701 = vld [vmem:[#allocation8 + $0x40] sm:$0xff]
          %v1702 = vld [vmem:[#allocation8 + $0x48] sm:$0xff]
          %v1703 = vld [vmem:[#allocation8 + $0x50] sm:$0xff]
          %v1704 = vld [vmem:[#allocation8 + $0x58] sm:$0xff]
          %v1705 = vld [vmem:[#allocation8 + $0x60] sm:$0xff]
          %v1706 = vld [vmem:[#allocation8 + $0x68] sm:$0xff]
          %v1707 = vld [vmem:[#allocation8 + $0x70] sm:$0xff]
          %v1708 = vld [vmem:[#allocation8 + $0x78] sm:$0xff]
          %v1709 = vld [vmem:[#allocation8 + $0x80] sm:$0xff]
          %v1710 = vld [vmem:[#allocation8 + $0x88] sm:$0xff]
          %v1711 = vld [vmem:[#allocation8 + $0x90] sm:$0xff]
          %v1712 = vld [vmem:[#allocation8 + $0x98] sm:$0xff]
          %v1713 = vld [vmem:[#allocation8 + $0xa0] sm:$0xff]
          %v1714 = vld [vmem:[#allocation8 + $0xa8] sm:$0xff]
          %v1715 = vld [vmem:[#allocation8 + $0xb0] sm:$0xff]
          %v1716 = vld [vmem:[#allocation8 + $0xb8] sm:$0xff]
          %v1717 = vld [vmem:[#allocation8 + $0xc0] sm:$0xff]
          %v1718 = vld [vmem:[#allocation8 + $0xc8] sm:$0xff]
          %v1719 = vld [vmem:[#allocation8 + $0xd0] sm:$0xff]
          %v1720 = vld [vmem:[#allocation8 + $0xd8] sm:$0xff]
          %v1721 = vld [vmem:[#allocation8 + $0xe0] sm:$0xff]
          %v1722 = vld [vmem:[#allocation8 + $0xe8] sm:$0xff]
          %v1723 = vld [vmem:[#allocation8 + $0xf0] sm:$0xff]
          %v1724 = vld [vmem:[#allocation8 + $0xf8] sm:$0xff]
          %v1725 = vld [vmem:[#allocation8 + $0x100] sm:$0xff]
          %v1726 = vld [vmem:[#allocation8 + $0x108] sm:$0xff]
          %v1727 = vld [vmem:[#allocation8 + $0x110] sm:$0xff]
          %v1728 = vld [vmem:[#allocation8 + $0x118] sm:$0xff]
          %v1729 = vld [vmem:[#allocation8 + $0x120] sm:$0xff]
          %v1730 = vld [vmem:[#allocation8 + $0x128] sm:$0xff]
          %v1731 = vld [vmem:[#allocation8 + $0x130] sm:$0xff]
          %v1732 = vld [vmem:[#allocation8 + $0x138] sm:$0xff]
          %v1733 = vld [vmem:[#allocation8 + $0x140] sm:$0xff]
          %v1734 = vld [vmem:[#allocation8 + $0x148] sm:$0xff]
          %v1735 = vld [vmem:[#allocation8 + $0x150] sm:$0xff]
          %v1736 = vld [vmem:[#allocation8 + $0x158] sm:$0xff]
          %v1737 = vld [vmem:[#allocation8 + $0x160] sm:$0xff]
          %v1738 = vld [vmem:[#allocation8 + $0x168] sm:$0xff]
          %v1739 = vld [vmem:[#allocation8 + $0x170] sm:$0xff]
          %v1740 = vld [vmem:[#allocation8 + $0x178] sm:$0xff]
          %v1741 = vld [vmem:[#allocation8 + $0x180] sm:$0xff]
          %v1742 = vld [vmem:[#allocation8 + $0x188] sm:$0xff]
          %v1743 = vld [vmem:[#allocation8 + $0x190] sm:$0xff]
          %v1744 = vld [vmem:[#allocation8 + $0x198] sm:$0xff]
          %v1745 = vld [vmem:[#allocation8 + $0x1a0] sm:$0xff]
          %v1746 = vld [vmem:[#allocation8 + $0x1a8] sm:$0xff]
          %v1747 = vld [vmem:[#allocation8 + $0x1b0] sm:$0xff]
          %v1748 = vld [vmem:[#allocation8 + $0x1b8] sm:$0xff]
          %v1749 = vld [vmem:[#allocation8 + $0x1c0] sm:$0xff]
          %v1750 = vld [vmem:[#allocation8 + $0x1c8] sm:$0xff]
          %v1751 = vld [vmem:[#allocation8 + $0x1d0] sm:$0xff]
          %v1752 = vld [vmem:[#allocation8 + $0x1d8] sm:$0xff]
          %v1753 = vld [vmem:[#allocation8 + $0x1e0] sm:$0xff]
          %v1754 = vld [vmem:[#allocation8 + $0x1e8] sm:$0xff]
          %v1755 = vld [vmem:[#allocation8 + $0x1f0] sm:$0xff]
          %v1756 = vld [vmem:[#allocation8 + $0x1f8] sm:$0xff]
          %v1757 = vld [vmem:[#allocation8 + $0x200] sm:$0xff]
          %v1758 = vld [vmem:[#allocation8 + $0x208] sm:$0xff]
          %v1759 = vld [vmem:[#allocation8 + $0x210] sm:$0xff]
          %v1760 = vld [vmem:[#allocation8 + $0x218] sm:$0xff]
          %v1761 = vld [vmem:[#allocation8 + $0x220] sm:$0xff]
          %v1762 = vld [vmem:[#allocation8 + $0x228] sm:$0xff]
          %v1763 = vld [vmem:[#allocation8 + $0x230] sm:$0xff]
          %v1764 = vld [vmem:[#allocation8 + $0x238] sm:$0xff]
          %v1765 = vld [vmem:[#allocation8 + $0x240] sm:$0xff]
          %v1766 = vld [vmem:[#allocation8 + $0x248] sm:$0xff]
          %v1767 = vld [vmem:[#allocation8 + $0x250] sm:$0xff]
          %v1768 = vld [vmem:[#allocation8 + $0x258] sm:$0xff]
          %v1769 = vld [vmem:[#allocation8 + $0x260] sm:$0xff]
          %v1770 = vld [vmem:[#allocation8 + $0x268] sm:$0xff]
          %v1771 = vld [vmem:[#allocation8 + $0x270] sm:$0xff]
          %v1772 = vld [vmem:[#allocation8 + $0x278] sm:$0xff]
          %v1773 = vld [vmem:[#allocation8 + $0x280] sm:$0xff]
          %v1774 = vld [vmem:[#allocation8 + $0x288] sm:$0xff]
          %v1775 = vld [vmem:[#allocation8 + $0x290] sm:$0xff]
          %v1776 = vld [vmem:[#allocation8 + $0x298] sm:$0xff]
          %v1777 = vld [vmem:[#allocation8 + $0x2a0] sm:$0xff]
          %v1778 = vld [vmem:[#allocation8 + $0x2a8] sm:$0xff]
          %v1779 = vld [vmem:[#allocation8 + $0x2b0] sm:$0xff]
          %v1780 = vld [vmem:[#allocation8 + $0x2b8] sm:$0xff]
          %v1781 = vld [vmem:[#allocation8 + $0x2c0] sm:$0xff]
          %v1782 = vld [vmem:[#allocation8 + $0x2c8] sm:$0xff]
          %v1783 = vld [vmem:[#allocation8 + $0x2d0] sm:$0xff]
          %v1784 = vld [vmem:[#allocation8 + $0x2d8] sm:$0xff]
          %v1785 = vld [vmem:[#allocation8 + $0x2e0] sm:$0xff]
          %v1786 = vld [vmem:[#allocation8 + $0x2e8] sm:$0xff]
          %v1787 = vld [vmem:[#allocation8 + $0x2f0] sm:$0xff]
          %v1788 = vld [vmem:[#allocation8 + $0x2f8] sm:$0xff]
          %v1789 = vld [vmem:[#allocation8 + $0x300] sm:$0xff]
          %v1790 = vld [vmem:[#allocation8 + $0x308] sm:$0xff]
          %v1791 = vld [vmem:[#allocation8 + $0x310] sm:$0xff]
          %v1792 = vld [vmem:[#allocation8 + $0x318] sm:$0xff]
          %v1793 = vld [vmem:[#allocation8 + $0x320] sm:$0xff]
          %v1794 = vld [vmem:[#allocation8 + $0x328] sm:$0xff]
          %v1795 = vld [vmem:[#allocation8 + $0x330] sm:$0xff]
          %v1796 = vld [vmem:[#allocation8 + $0x338] sm:$0xff]
          %v1797 = vld [vmem:[#allocation8 + $0x340] sm:$0xff]
          %v1798 = vld [vmem:[#allocation8 + $0x348] sm:$0xff]
          %v1799 = vld [vmem:[#allocation8 + $0x350] sm:$0xff]
          %v1800 = vld [vmem:[#allocation8 + $0x358] sm:$0xff]
          %v1801 = vld [vmem:[#allocation8 + $0x360] sm:$0xff]
          %v1802 = vld [vmem:[#allocation8 + $0x368] sm:$0xff]
          %v1803 = vld [vmem:[#allocation8 + $0x370] sm:$0xff]
          %v1804 = vld [vmem:[#allocation8 + $0x378] sm:$0xff]
          %v1805 = vld [vmem:[#allocation8 + $0x380] sm:$0xff]
          %v1806 = vld [vmem:[#allocation8 + $0x388] sm:$0xff]
          %v1807 = vld [vmem:[#allocation8 + $0x390] sm:$0xff]
          %v1808 = vld [vmem:[#allocation8 + $0x398] sm:$0xff]
          %v1809 = vld [vmem:[#allocation8 + $0x3a0] sm:$0xff]
          %v1810 = vld [vmem:[#allocation8 + $0x3a8] sm:$0xff]
          %v1811 = vld [vmem:[#allocation8 + $0x3b0] sm:$0xff]
          %v1812 = vld [vmem:[#allocation8 + $0x3b8] sm:$0xff]
          %v1813 = vld [vmem:[#allocation8 + $0x3c0] sm:$0xff]
          %v1814 = vld [vmem:[#allocation8 + $0x3c8] sm:$0xff]
          %v1815 = vld [vmem:[#allocation8 + $0x3d0] sm:$0xff]
          %v1816 = vld [vmem:[#allocation8 + $0x3d8] sm:$0xff]
          %v1817 = vld [vmem:[#allocation8 + $0x3e0] sm:$0xff]
          %v1818 = vld [vmem:[#allocation8 + $0x3e8] sm:$0xff]
          %v1819 = vld [vmem:[#allocation8 + $0x3f0] sm:$0xff]
          %v1820 = vld [vmem:[#allocation8 + $0x3f8] sm:$0xff]
          %v1821 = vld [vmem:[#allocation8 + $0x400] sm:$0xff]
          %v1822 = vld [vmem:[#allocation8 + $0x408] sm:$0xff]
          %v1823 = vld [vmem:[#allocation8 + $0x410] sm:$0xff]
          %v1824 = vld [vmem:[#allocation8 + $0x418] sm:$0xff]
          %v1825 = vld [vmem:[#allocation8 + $0x420] sm:$0xff]
          %v1826 = vld [vmem:[#allocation8 + $0x428] sm:$0xff]
          %v1827 = vld [vmem:[#allocation8 + $0x430] sm:$0xff]
          %v1828 = vld [vmem:[#allocation8 + $0x438] sm:$0xff]
          %v1829 = vld [vmem:[#allocation8 + $0x440] sm:$0xff]
          %v1830 = vld [vmem:[#allocation8 + $0x448] sm:$0xff]
          %v1831 = vld [vmem:[#allocation8 + $0x450] sm:$0xff]
          %v1832 = vld [vmem:[#allocation8 + $0x458] sm:$0xff]
          %v1833 = vld [vmem:[#allocation8 + $0x460] sm:$0xff]
          %v1834 = vld [vmem:[#allocation8 + $0x468] sm:$0xff]
          %v1835 = vld [vmem:[#allocation8 + $0x470] sm:$0xff]
          %v1836 = vld [vmem:[#allocation8 + $0x478] sm:$0xff]
          %v1837 = vld [vmem:[#allocation8 + $0x480] sm:$0xff]
          %v1838 = vld [vmem:[#allocation8 + $0x488] sm:$0xff]
          %v1839 = vld [vmem:[#allocation8 + $0x490] sm:$0xff]
          %v1840 = vld [vmem:[#allocation8 + $0x498] sm:$0xff]
          %v1841 = vld [vmem:[#allocation8 + $0x4a0] sm:$0xff]
          %v1842 = vld [vmem:[#allocation8 + $0x4a8] sm:$0xff]
          %v1843 = vld [vmem:[#allocation8 + $0x4b0] sm:$0xff]
          %v1844 = vld [vmem:[#allocation8 + $0x4b8] sm:$0xff]
          %v1845 = vld [vmem:[#allocation8 + $0x4c0] sm:$0xff]
          %v1846 = vld [vmem:[#allocation8 + $0x4c8] sm:$0xff]
          %v1847 = vld [vmem:[#allocation8 + $0x4d0] sm:$0xff]
          %v1848 = vld [vmem:[#allocation8 + $0x4d8] sm:$0xff]
          %v1849 = vld [vmem:[#allocation8 + $0x4e0] sm:$0xff]
          %v1850 = vld [vmem:[#allocation8 + $0x4e8] sm:$0xff]
          %v1851 = vld [vmem:[#allocation8 + $0x4f0] sm:$0xff]
          %v1852 = vld [vmem:[#allocation8 + $0x4f8] sm:$0xff]
          %v1853 = vld [vmem:[#allocation8 + $0x500] sm:$0xff]
          %v1854 = vld [vmem:[#allocation8 + $0x508] sm:$0xff]
          %v1855 = vld [vmem:[#allocation8 + $0x510] sm:$0xff]
          %v1856 = vld [vmem:[#allocation8 + $0x518] sm:$0xff]
          %v1857 = vld [vmem:[#allocation8 + $0x520] sm:$0xff]
          %v1858 = vld [vmem:[#allocation8 + $0x528] sm:$0xff]
          %v1859 = vld [vmem:[#allocation8 + $0x530] sm:$0xff]
          %v1860 = vld [vmem:[#allocation8 + $0x538] sm:$0xff]
          %v1861 = vld [vmem:[#allocation8 + $0x540] sm:$0xff]
          %v1862 = vld [vmem:[#allocation8 + $0x548] sm:$0xff]
          %v1863 = vld [vmem:[#allocation8 + $0x550] sm:$0xff]
          %v1864 = vld [vmem:[#allocation8 + $0x558] sm:$0xff]
          %v1865 = vld [vmem:[#allocation8 + $0x560] sm:$0xff]
          %v1866 = vld [vmem:[#allocation8 + $0x568] sm:$0xff]
          %v1867 = vld [vmem:[#allocation8 + $0x570] sm:$0xff]
          %v1868 = vld [vmem:[#allocation8 + $0x578] sm:$0xff]
          %v1869 = vld [vmem:[#allocation8 + $0x580] sm:$0xff]
          %v1870 = vld [vmem:[#allocation8 + $0x588] sm:$0xff]
          %v1871 = vld [vmem:[#allocation8 + $0x590] sm:$0xff]
          %v1872 = vld [vmem:[#allocation8 + $0x598] sm:$0xff]
          %v1873 = vld [vmem:[#allocation8 + $0x5a0] sm:$0xff]
          %v1874 = vld [vmem:[#allocation8 + $0x5a8] sm:$0xff]
          %v1875 = vld [vmem:[#allocation8 + $0x5b0] sm:$0xff]
          %v1876 = vld [vmem:[#allocation8 + $0x5b8] sm:$0xff]
          %v1877 = vld [vmem:[#allocation8 + $0x5c0] sm:$0xff]
          %v1878 = vld [vmem:[#allocation8 + $0x5c8] sm:$0xff]
          %v1879 = vld [vmem:[#allocation8 + $0x5d0] sm:$0xff]
          %v1880 = vld [vmem:[#allocation8 + $0x5d8] sm:$0xff]
          %v1881 = vld [vmem:[#allocation8 + $0x5e0] sm:$0xff]
          %v1882 = vld [vmem:[#allocation8 + $0x5e8] sm:$0xff]
          %v1883 = vld [vmem:[#allocation8 + $0x5f0] sm:$0xff]
          %v1884 = vld [vmem:[#allocation8 + $0x5f8] sm:$0xff]
          %v1885 = vld [vmem:[#allocation8 + $0x600] sm:$0xff]
          %v1886 = vld [vmem:[#allocation8 + $0x608] sm:$0xff]
          %v1887 = vld [vmem:[#allocation8 + $0x610] sm:$0xff]
          %v1888 = vld [vmem:[#allocation8 + $0x618] sm:$0xff]
          %v1889 = vld [vmem:[#allocation8 + $0x620] sm:$0xff]
          %v1890 = vld [vmem:[#allocation8 + $0x628] sm:$0xff]
          %v1891 = vld [vmem:[#allocation8 + $0x630] sm:$0xff]
          %v1892 = vld [vmem:[#allocation8 + $0x638] sm:$0xff]
          %v1893 = vld [vmem:[#allocation8 + $0x640] sm:$0xff]
          %v1894 = vld [vmem:[#allocation8 + $0x648] sm:$0xff]
          %v1895 = vld [vmem:[#allocation8 + $0x650] sm:$0xff]
          %v1896 = vld [vmem:[#allocation8 + $0x658] sm:$0xff]
          %v1897 = vld [vmem:[#allocation8 + $0x660] sm:$0xff]
          %v1898 = vld [vmem:[#allocation8 + $0x668] sm:$0xff]
          %v1899 = vld [vmem:[#allocation8 + $0x670] sm:$0xff]
          %v1900 = vld [vmem:[#allocation8 + $0x678] sm:$0xff]
          %v1901 = vld [vmem:[#allocation8 + $0x680] sm:$0xff]
          %v1902 = vld [vmem:[#allocation8 + $0x688] sm:$0xff]
          %v1903 = vld [vmem:[#allocation8 + $0x690] sm:$0xff]
          %v1904 = vld [vmem:[#allocation8 + $0x698] sm:$0xff]
          %v1905 = vld [vmem:[#allocation8 + $0x6a0] sm:$0xff]
          %v1906 = vld [vmem:[#allocation8 + $0x6a8] sm:$0xff]
          %v1907 = vld [vmem:[#allocation8 + $0x6b0] sm:$0xff]
          %v1908 = vld [vmem:[#allocation8 + $0x6b8] sm:$0xff]
          %v1909 = vld [vmem:[#allocation8 + $0x6c0] sm:$0xff]
          %v1910 = vld [vmem:[#allocation8 + $0x6c8] sm:$0xff]
          %v1911 = vld [vmem:[#allocation8 + $0x6d0] sm:$0xff]
          %v1912 = vld [vmem:[#allocation8 + $0x6d8] sm:$0xff]
          %v1913 = vld [vmem:[#allocation8 + $0x6e0] sm:$0xff]
          %v1914 = vld [vmem:[#allocation8 + $0x6e8] sm:$0xff]
          %v1915 = vld [vmem:[#allocation8 + $0x6f0] sm:$0xff]
          %v1916 = vld [vmem:[#allocation8 + $0x6f8] sm:$0xff]
          %v1917 = vld [vmem:[#allocation8 + $0x700] sm:$0xff]
          %v1918 = vld [vmem:[#allocation8 + $0x708] sm:$0xff]
          %v1919 = vld [vmem:[#allocation8 + $0x710] sm:$0xff]
          %v1920 = vld [vmem:[#allocation8 + $0x718] sm:$0xff]
          %v1921 = vld [vmem:[#allocation8 + $0x720] sm:$0xff]
          %v1922 = vld [vmem:[#allocation8 + $0x728] sm:$0xff]
          %v1923 = vld [vmem:[#allocation8 + $0x730] sm:$0xff]
          %v1924 = vld [vmem:[#allocation8 + $0x738] sm:$0xff]
          %v1925 = vld [vmem:[#allocation8 + $0x740] sm:$0xff]
          %v1926 = vld [vmem:[#allocation8 + $0x748] sm:$0xff]
          %v1927 = vld [vmem:[#allocation8 + $0x750] sm:$0xff]
          %v1928 = vld [vmem:[#allocation8 + $0x758] sm:$0xff]
          %v1929 = vld [vmem:[#allocation8 + $0x760] sm:$0xff]
          %v1930 = vld [vmem:[#allocation8 + $0x768] sm:$0xff]
          %v1931 = vld [vmem:[#allocation8 + $0x770] sm:$0xff]
          %v1932 = vld [vmem:[#allocation8 + $0x778] sm:$0xff]
          %v1933 = vld [vmem:[#allocation8 + $0x780] sm:$0xff]
          %v1934 = vld [vmem:[#allocation8 + $0x788] sm:$0xff]
          %v1935 = vld [vmem:[#allocation8 + $0x790] sm:$0xff]
          %v1936 = vld [vmem:[#allocation8 + $0x798] sm:$0xff]
          %v1937 = vld [vmem:[#allocation8 + $0x7a0] sm:$0xff]
          %v1938 = vld [vmem:[#allocation8 + $0x7a8] sm:$0xff]
          %v1939 = vld [vmem:[#allocation8 + $0x7b0] sm:$0xff]
          %v1940 = vld [vmem:[#allocation8 + $0x7b8] sm:$0xff]
          %v1941 = vld [vmem:[#allocation8 + $0x7c0] sm:$0xff]
          %v1942 = vld [vmem:[#allocation8 + $0x7c8] sm:$0xff]
          %v1943 = vld [vmem:[#allocation8 + $0x7d0] sm:$0xff]
          %v1944 = vld [vmem:[#allocation8 + $0x7d8] sm:$0xff]
          %v1945 = vld [vmem:[#allocation8 + $0x7e0] sm:$0xff]
          %v1946 = vld [vmem:[#allocation8 + $0x7e8] sm:$0xff]
          %v1947 = vld [vmem:[#allocation8 + $0x7f0] sm:$0xff]
          %v1948 = vld [vmem:[#allocation8 + $0x7f8] sm:$0xff]
          %v2205 = vunpack.c.l.b16 %v1693
          %v2206 = vunpack.c.h.b16 %v1693
          %v2207 = vunpack.c.l.b16 %v1694
          %v2208 = vunpack.c.h.b16 %v1694
          %v2209 = vunpack.c.l.b16 %v1695
          %v2210 = vunpack.c.h.b16 %v1695
          %v2211 = vunpack.c.l.b16 %v1696
          %v2212 = vunpack.c.h.b16 %v1696
          %v2213 = vunpack.c.l.b16 %v1697
          %v2214 = vunpack.c.h.b16 %v1697
          %v2215 = vunpack.c.l.b16 %v1698
          %v2216 = vunpack.c.h.b16 %v1698
          %v2217 = vunpack.c.l.b16 %v1699
          %v2218 = vunpack.c.h.b16 %v1699
          %v2219 = vunpack.c.l.b16 %v1700
          %v2220 = vunpack.c.h.b16 %v1700
          %v2221 = vunpack.c.l.b16 %v1701
          %v2222 = vunpack.c.h.b16 %v1701
          %v2223 = vunpack.c.l.b16 %v1702
          %v2224 = vunpack.c.h.b16 %v1702
          %v2225 = vunpack.c.l.b16 %v1703
          %v2226 = vunpack.c.h.b16 %v1703
          %v2227 = vunpack.c.l.b16 %v1704
          %v2228 = vunpack.c.h.b16 %v1704
          %v2229 = vunpack.c.l.b16 %v1705
          %v2230 = vunpack.c.h.b16 %v1705
          %v2231 = vunpack.c.l.b16 %v1706
          %v2232 = vunpack.c.h.b16 %v1706
          %v2233 = vunpack.c.l.b16 %v1707
          %v2234 = vunpack.c.h.b16 %v1707
          %v2235 = vunpack.c.l.b16 %v1708
          %v2236 = vunpack.c.h.b16 %v1708
          %v2237 = vunpack.c.l.b16 %v1709
          %v2238 = vunpack.c.h.b16 %v1709
          %v2239 = vunpack.c.l.b16 %v1710
          %v2240 = vunpack.c.h.b16 %v1710
          %v2241 = vunpack.c.l.b16 %v1711
          %v2242 = vunpack.c.h.b16 %v1711
          %v2243 = vunpack.c.l.b16 %v1712
          %v2244 = vunpack.c.h.b16 %v1712
          %v2245 = vunpack.c.l.b16 %v1713
          %v2246 = vunpack.c.h.b16 %v1713
          %v2247 = vunpack.c.l.b16 %v1714
          %v2248 = vunpack.c.h.b16 %v1714
          %v2249 = vunpack.c.l.b16 %v1715
          %v2250 = vunpack.c.h.b16 %v1715
          %v2251 = vunpack.c.l.b16 %v1716
          %v2252 = vunpack.c.h.b16 %v1716
          %v2253 = vunpack.c.l.b16 %v1717
          %v2254 = vunpack.c.h.b16 %v1717
          %v2255 = vunpack.c.l.b16 %v1718
          %v2256 = vunpack.c.h.b16 %v1718
          %v2257 = vunpack.c.l.b16 %v1719
          %v2258 = vunpack.c.h.b16 %v1719
          %v2259 = vunpack.c.l.b16 %v1720
          %v2260 = vunpack.c.h.b16 %v1720
          %v2261 = vunpack.c.l.b16 %v1721
          %v2262 = vunpack.c.h.b16 %v1721
          %v2263 = vunpack.c.l.b16 %v1722
          %v2264 = vunpack.c.h.b16 %v1722
          %v2265 = vunpack.c.l.b16 %v1723
          %v2266 = vunpack.c.h.b16 %v1723
          %v2267 = vunpack.c.l.b16 %v1724
          %v2268 = vunpack.c.h.b16 %v1724
          %v2269 = vunpack.c.l.b16 %v1725
          %v2270 = vunpack.c.h.b16 %v1725
          %v2271 = vunpack.c.l.b16 %v1726
          %v2272 = vunpack.c.h.b16 %v1726
          %v2273 = vunpack.c.l.b16 %v1727
          %v2274 = vunpack.c.h.b16 %v1727
          %v2275 = vunpack.c.l.b16 %v1728
          %v2276 = vunpack.c.h.b16 %v1728
          %v2277 = vunpack.c.l.b16 %v1729
          %v2278 = vunpack.c.h.b16 %v1729
          %v2279 = vunpack.c.l.b16 %v1730
          %v2280 = vunpack.c.h.b16 %v1730
          %v2281 = vunpack.c.l.b16 %v1731
          %v2282 = vunpack.c.h.b16 %v1731
          %v2283 = vunpack.c.l.b16 %v1732
          %v2284 = vunpack.c.h.b16 %v1732
          %v2285 = vunpack.c.l.b16 %v1733
          %v2286 = vunpack.c.h.b16 %v1733
          %v2287 = vunpack.c.l.b16 %v1734
          %v2288 = vunpack.c.h.b16 %v1734
          %v2289 = vunpack.c.l.b16 %v1735
          %v2290 = vunpack.c.h.b16 %v1735
          %v2291 = vunpack.c.l.b16 %v1736
          %v2292 = vunpack.c.h.b16 %v1736
          %v2293 = vunpack.c.l.b16 %v1737
          %v2294 = vunpack.c.h.b16 %v1737
          %v2295 = vunpack.c.l.b16 %v1738
          %v2296 = vunpack.c.h.b16 %v1738
          %v2297 = vunpack.c.l.b16 %v1739
          %v2298 = vunpack.c.h.b16 %v1739
          %v2299 = vunpack.c.l.b16 %v1740
          %v2300 = vunpack.c.h.b16 %v1740
          %v2301 = vunpack.c.l.b16 %v1741
          %v2302 = vunpack.c.h.b16 %v1741
          %v2303 = vunpack.c.l.b16 %v1742
          %v2304 = vunpack.c.h.b16 %v1742
          %v2305 = vunpack.c.l.b16 %v1743
          %v2306 = vunpack.c.h.b16 %v1743
          %v2307 = vunpack.c.l.b16 %v1744
          %v2308 = vunpack.c.h.b16 %v1744
          %v2309 = vunpack.c.l.b16 %v1745
          %v2310 = vunpack.c.h.b16 %v1745
          %v2311 = vunpack.c.l.b16 %v1746
          %v2312 = vunpack.c.h.b16 %v1746
          %v2313 = vunpack.c.l.b16 %v1747
          %v2314 = vunpack.c.h.b16 %v1747
          %v2315 = vunpack.c.l.b16 %v1748
          %v2316 = vunpack.c.h.b16 %v1748
          %v2317 = vunpack.c.l.b16 %v1749
          %v2318 = vunpack.c.h.b16 %v1749
          %v2319 = vunpack.c.l.b16 %v1750
          %v2320 = vunpack.c.h.b16 %v1750
          %v2321 = vunpack.c.l.b16 %v1751
          %v2322 = vunpack.c.h.b16 %v1751
          %v2323 = vunpack.c.l.b16 %v1752
          %v2324 = vunpack.c.h.b16 %v1752
          %v2325 = vunpack.c.l.b16 %v1753
          %v2326 = vunpack.c.h.b16 %v1753
          %v2327 = vunpack.c.l.b16 %v1754
          %v2328 = vunpack.c.h.b16 %v1754
          %v2329 = vunpack.c.l.b16 %v1755
          %v2330 = vunpack.c.h.b16 %v1755
          %v2331 = vunpack.c.l.b16 %v1756
          %v2332 = vunpack.c.h.b16 %v1756
          %v2333 = vunpack.c.l.b16 %v1757
          %v2334 = vunpack.c.h.b16 %v1757
          %v2335 = vunpack.c.l.b16 %v1758
          %v2336 = vunpack.c.h.b16 %v1758
          %v2337 = vunpack.c.l.b16 %v1759
          %v2338 = vunpack.c.h.b16 %v1759
          %v2339 = vunpack.c.l.b16 %v1760
          %v2340 = vunpack.c.h.b16 %v1760
          %v2341 = vunpack.c.l.b16 %v1761
          %v2342 = vunpack.c.h.b16 %v1761
          %v2343 = vunpack.c.l.b16 %v1762
          %v2344 = vunpack.c.h.b16 %v1762
          %v2345 = vunpack.c.l.b16 %v1763
          %v2346 = vunpack.c.h.b16 %v1763
          %v2347 = vunpack.c.l.b16 %v1764
          %v2348 = vunpack.c.h.b16 %v1764
          %v2349 = vunpack.c.l.b16 %v1765
          %v2350 = vunpack.c.h.b16 %v1765
          %v2351 = vunpack.c.l.b16 %v1766
          %v2352 = vunpack.c.h.b16 %v1766
          %v2353 = vunpack.c.l.b16 %v1767
          %v2354 = vunpack.c.h.b16 %v1767
          %v2355 = vunpack.c.l.b16 %v1768
          %v2356 = vunpack.c.h.b16 %v1768
          %v2357 = vunpack.c.l.b16 %v1769
          %v2358 = vunpack.c.h.b16 %v1769
          %v2359 = vunpack.c.l.b16 %v1770
          %v2360 = vunpack.c.h.b16 %v1770
          %v2361 = vunpack.c.l.b16 %v1771
          %v2362 = vunpack.c.h.b16 %v1771
          %v2363 = vunpack.c.l.b16 %v1772
          %v2364 = vunpack.c.h.b16 %v1772
          %v2365 = vunpack.c.l.b16 %v1773
          %v2366 = vunpack.c.h.b16 %v1773
          %v2367 = vunpack.c.l.b16 %v1774
          %v2368 = vunpack.c.h.b16 %v1774
          %v2369 = vunpack.c.l.b16 %v1775
          %v2370 = vunpack.c.h.b16 %v1775
          %v2371 = vunpack.c.l.b16 %v1776
          %v2372 = vunpack.c.h.b16 %v1776
          %v2373 = vunpack.c.l.b16 %v1777
          %v2374 = vunpack.c.h.b16 %v1777
          %v2375 = vunpack.c.l.b16 %v1778
          %v2376 = vunpack.c.h.b16 %v1778
          %v2377 = vunpack.c.l.b16 %v1779
          %v2378 = vunpack.c.h.b16 %v1779
          %v2379 = vunpack.c.l.b16 %v1780
          %v2380 = vunpack.c.h.b16 %v1780
          %v2381 = vunpack.c.l.b16 %v1781
          %v2382 = vunpack.c.h.b16 %v1781
          %v2383 = vunpack.c.l.b16 %v1782
          %v2384 = vunpack.c.h.b16 %v1782
          %v2385 = vunpack.c.l.b16 %v1783
          %v2386 = vunpack.c.h.b16 %v1783
          %v2387 = vunpack.c.l.b16 %v1784
          %v2388 = vunpack.c.h.b16 %v1784
          %v2389 = vunpack.c.l.b16 %v1785
          %v2390 = vunpack.c.h.b16 %v1785
          %v2391 = vunpack.c.l.b16 %v1786
          %v2392 = vunpack.c.h.b16 %v1786
          %v2393 = vunpack.c.l.b16 %v1787
          %v2394 = vunpack.c.h.b16 %v1787
          %v2395 = vunpack.c.l.b16 %v1788
          %v2396 = vunpack.c.h.b16 %v1788
          %v2397 = vunpack.c.l.b16 %v1789
          %v2398 = vunpack.c.h.b16 %v1789
          %v2399 = vunpack.c.l.b16 %v1790
          %v2400 = vunpack.c.h.b16 %v1790
          %v2401 = vunpack.c.l.b16 %v1791
          %v2402 = vunpack.c.h.b16 %v1791
          %v2403 = vunpack.c.l.b16 %v1792
          %v2404 = vunpack.c.h.b16 %v1792
          %v2405 = vunpack.c.l.b16 %v1793
          %v2406 = vunpack.c.h.b16 %v1793
          %v2407 = vunpack.c.l.b16 %v1794
          %v2408 = vunpack.c.h.b16 %v1794
          %v2409 = vunpack.c.l.b16 %v1795
          %v2410 = vunpack.c.h.b16 %v1795
          %v2411 = vunpack.c.l.b16 %v1796
          %v2412 = vunpack.c.h.b16 %v1796
          %v2413 = vunpack.c.l.b16 %v1797
          %v2414 = vunpack.c.h.b16 %v1797
          %v2415 = vunpack.c.l.b16 %v1798
          %v2416 = vunpack.c.h.b16 %v1798
          %v2417 = vunpack.c.l.b16 %v1799
          %v2418 = vunpack.c.h.b16 %v1799
          %v2419 = vunpack.c.l.b16 %v1800
          %v2420 = vunpack.c.h.b16 %v1800
          %v2421 = vunpack.c.l.b16 %v1801
          %v2422 = vunpack.c.h.b16 %v1801
          %v2423 = vunpack.c.l.b16 %v1802
          %v2424 = vunpack.c.h.b16 %v1802
          %v2425 = vunpack.c.l.b16 %v1803
          %v2426 = vunpack.c.h.b16 %v1803
          %v2427 = vunpack.c.l.b16 %v1804
          %v2428 = vunpack.c.h.b16 %v1804
          %v2429 = vunpack.c.l.b16 %v1805
          %v2430 = vunpack.c.h.b16 %v1805
          %v2431 = vunpack.c.l.b16 %v1806
          %v2432 = vunpack.c.h.b16 %v1806
          %v2433 = vunpack.c.l.b16 %v1807
          %v2434 = vunpack.c.h.b16 %v1807
          %v2435 = vunpack.c.l.b16 %v1808
          %v2436 = vunpack.c.h.b16 %v1808
          %v2437 = vunpack.c.l.b16 %v1809
          %v2438 = vunpack.c.h.b16 %v1809
          %v2439 = vunpack.c.l.b16 %v1810
          %v2440 = vunpack.c.h.b16 %v1810
          %v2441 = vunpack.c.l.b16 %v1811
          %v2442 = vunpack.c.h.b16 %v1811
          %v2443 = vunpack.c.l.b16 %v1812
          %v2444 = vunpack.c.h.b16 %v1812
          %v2445 = vunpack.c.l.b16 %v1813
          %v2446 = vunpack.c.h.b16 %v1813
          %v2447 = vunpack.c.l.b16 %v1814
          %v2448 = vunpack.c.h.b16 %v1814
          %v2449 = vunpack.c.l.b16 %v1815
          %v2450 = vunpack.c.h.b16 %v1815
          %v2451 = vunpack.c.l.b16 %v1816
          %v2452 = vunpack.c.h.b16 %v1816
          %v2453 = vunpack.c.l.b16 %v1817
          %v2454 = vunpack.c.h.b16 %v1817
          %v2455 = vunpack.c.l.b16 %v1818
          %v2456 = vunpack.c.h.b16 %v1818
          %v2457 = vunpack.c.l.b16 %v1819
          %v2458 = vunpack.c.h.b16 %v1819
          %v2459 = vunpack.c.l.b16 %v1820
          %v2460 = vunpack.c.h.b16 %v1820
          %v2461 = vunpack.c.l.b16 %v1821
          %v2462 = vunpack.c.h.b16 %v1821
          %v2463 = vunpack.c.l.b16 %v1822
          %v2464 = vunpack.c.h.b16 %v1822
          %v2465 = vunpack.c.l.b16 %v1823
          %v2466 = vunpack.c.h.b16 %v1823
          %v2467 = vunpack.c.l.b16 %v1824
          %v2468 = vunpack.c.h.b16 %v1824
          %v2469 = vunpack.c.l.b16 %v1825
          %v2470 = vunpack.c.h.b16 %v1825
          %v2471 = vunpack.c.l.b16 %v1826
          %v2472 = vunpack.c.h.b16 %v1826
          %v2473 = vunpack.c.l.b16 %v1827
          %v2474 = vunpack.c.h.b16 %v1827
          %v2475 = vunpack.c.l.b16 %v1828
          %v2476 = vunpack.c.h.b16 %v1828
          %v2477 = vunpack.c.l.b16 %v1829
          %v2478 = vunpack.c.h.b16 %v1829
          %v2479 = vunpack.c.l.b16 %v1830
          %v2480 = vunpack.c.h.b16 %v1830
          %v2481 = vunpack.c.l.b16 %v1831
          %v2482 = vunpack.c.h.b16 %v1831
          %v2483 = vunpack.c.l.b16 %v1832
          %v2484 = vunpack.c.h.b16 %v1832
          %v2485 = vunpack.c.l.b16 %v1833
          %v2486 = vunpack.c.h.b16 %v1833
          %v2487 = vunpack.c.l.b16 %v1834
          %v2488 = vunpack.c.h.b16 %v1834
          %v2489 = vunpack.c.l.b16 %v1835
          %v2490 = vunpack.c.h.b16 %v1835
          %v2491 = vunpack.c.l.b16 %v1836
          %v2492 = vunpack.c.h.b16 %v1836
          %v2493 = vunpack.c.l.b16 %v1837
          %v2494 = vunpack.c.h.b16 %v1837
          %v2495 = vunpack.c.l.b16 %v1838
          %v2496 = vunpack.c.h.b16 %v1838
          %v2497 = vunpack.c.l.b16 %v1839
          %v2498 = vunpack.c.h.b16 %v1839
          %v2499 = vunpack.c.l.b16 %v1840
          %v2500 = vunpack.c.h.b16 %v1840
          %v2501 = vunpack.c.l.b16 %v1841
          %v2502 = vunpack.c.h.b16 %v1841
          %v2503 = vunpack.c.l.b16 %v1842
          %v2504 = vunpack.c.h.b16 %v1842
          %v2505 = vunpack.c.l.b16 %v1843
          %v2506 = vunpack.c.h.b16 %v1843
          %v2507 = vunpack.c.l.b16 %v1844
          %v2508 = vunpack.c.h.b16 %v1844
          %v2509 = vunpack.c.l.b16 %v1845
          %v2510 = vunpack.c.h.b16 %v1845
          %v2511 = vunpack.c.l.b16 %v1846
          %v2512 = vunpack.c.h.b16 %v1846
          %v2513 = vunpack.c.l.b16 %v1847
          %v2514 = vunpack.c.h.b16 %v1847
          %v2515 = vunpack.c.l.b16 %v1848
          %v2516 = vunpack.c.h.b16 %v1848
          %v2517 = vunpack.c.l.b16 %v1849
          %v2518 = vunpack.c.h.b16 %v1849
          %v2519 = vunpack.c.l.b16 %v1850
          %v2520 = vunpack.c.h.b16 %v1850
          %v2521 = vunpack.c.l.b16 %v1851
          %v2522 = vunpack.c.h.b16 %v1851
          %v2523 = vunpack.c.l.b16 %v1852
          %v2524 = vunpack.c.h.b16 %v1852
          %v2525 = vunpack.c.l.b16 %v1853
          %v2526 = vunpack.c.h.b16 %v1853
          %v2527 = vunpack.c.l.b16 %v1854
          %v2528 = vunpack.c.h.b16 %v1854
          %v2529 = vunpack.c.l.b16 %v1855
          %v2530 = vunpack.c.h.b16 %v1855
          %v2531 = vunpack.c.l.b16 %v1856
          %v2532 = vunpack.c.h.b16 %v1856
          %v2533 = vunpack.c.l.b16 %v1857
          %v2534 = vunpack.c.h.b16 %v1857
          %v2535 = vunpack.c.l.b16 %v1858
          %v2536 = vunpack.c.h.b16 %v1858
          %v2537 = vunpack.c.l.b16 %v1859
          %v2538 = vunpack.c.h.b16 %v1859
          %v2539 = vunpack.c.l.b16 %v1860
          %v2540 = vunpack.c.h.b16 %v1860
          %v2541 = vunpack.c.l.b16 %v1861
          %v2542 = vunpack.c.h.b16 %v1861
          %v2543 = vunpack.c.l.b16 %v1862
          %v2544 = vunpack.c.h.b16 %v1862
          %v2545 = vunpack.c.l.b16 %v1863
          %v2546 = vunpack.c.h.b16 %v1863
          %v2547 = vunpack.c.l.b16 %v1864
          %v2548 = vunpack.c.h.b16 %v1864
          %v2549 = vunpack.c.l.b16 %v1865
          %v2550 = vunpack.c.h.b16 %v1865
          %v2551 = vunpack.c.l.b16 %v1866
          %v2552 = vunpack.c.h.b16 %v1866
          %v2553 = vunpack.c.l.b16 %v1867
          %v2554 = vunpack.c.h.b16 %v1867
          %v2555 = vunpack.c.l.b16 %v1868
          %v2556 = vunpack.c.h.b16 %v1868
          %v2557 = vunpack.c.l.b16 %v1869
          %v2558 = vunpack.c.h.b16 %v1869
          %v2559 = vunpack.c.l.b16 %v1870
          %v2560 = vunpack.c.h.b16 %v1870
          %v2561 = vunpack.c.l.b16 %v1871
          %v2562 = vunpack.c.h.b16 %v1871
          %v2563 = vunpack.c.l.b16 %v1872
          %v2564 = vunpack.c.h.b16 %v1872
          %v2565 = vunpack.c.l.b16 %v1873
          %v2566 = vunpack.c.h.b16 %v1873
          %v2567 = vunpack.c.l.b16 %v1874
          %v2568 = vunpack.c.h.b16 %v1874
          %v2569 = vunpack.c.l.b16 %v1875
          %v2570 = vunpack.c.h.b16 %v1875
          %v2571 = vunpack.c.l.b16 %v1876
          %v2572 = vunpack.c.h.b16 %v1876
          %v2573 = vunpack.c.l.b16 %v1877
          %v2574 = vunpack.c.h.b16 %v1877
          %v2575 = vunpack.c.l.b16 %v1878
          %v2576 = vunpack.c.h.b16 %v1878
          %v2577 = vunpack.c.l.b16 %v1879
          %v2578 = vunpack.c.h.b16 %v1879
          %v2579 = vunpack.c.l.b16 %v1880
          %v2580 = vunpack.c.h.b16 %v1880
          %v2581 = vunpack.c.l.b16 %v1881
          %v2582 = vunpack.c.h.b16 %v1881
          %v2583 = vunpack.c.l.b16 %v1882
          %v2584 = vunpack.c.h.b16 %v1882
          %v2585 = vunpack.c.l.b16 %v1883
          %v2586 = vunpack.c.h.b16 %v1883
          %v2587 = vunpack.c.l.b16 %v1884
          %v2588 = vunpack.c.h.b16 %v1884
          %v2589 = vunpack.c.l.b16 %v1885
          %v2590 = vunpack.c.h.b16 %v1885
          %v2591 = vunpack.c.l.b16 %v1886
          %v2592 = vunpack.c.h.b16 %v1886
          %v2593 = vunpack.c.l.b16 %v1887
          %v2594 = vunpack.c.h.b16 %v1887
          %v2595 = vunpack.c.l.b16 %v1888
          %v2596 = vunpack.c.h.b16 %v1888
          %v2597 = vunpack.c.l.b16 %v1889
          %v2598 = vunpack.c.h.b16 %v1889
          %v2599 = vunpack.c.l.b16 %v1890
          %v2600 = vunpack.c.h.b16 %v1890
          %v2601 = vunpack.c.l.b16 %v1891
          %v2602 = vunpack.c.h.b16 %v1891
          %v2603 = vunpack.c.l.b16 %v1892
          %v2604 = vunpack.c.h.b16 %v1892
          %v2605 = vunpack.c.l.b16 %v1893
          %v2606 = vunpack.c.h.b16 %v1893
          %v2607 = vunpack.c.l.b16 %v1894
          %v2608 = vunpack.c.h.b16 %v1894
          %v2609 = vunpack.c.l.b16 %v1895
          %v2610 = vunpack.c.h.b16 %v1895
          %v2611 = vunpack.c.l.b16 %v1896
          %v2612 = vunpack.c.h.b16 %v1896
          %v2613 = vunpack.c.l.b16 %v1897
          %v2614 = vunpack.c.h.b16 %v1897
          %v2615 = vunpack.c.l.b16 %v1898
          %v2616 = vunpack.c.h.b16 %v1898
          %v2617 = vunpack.c.l.b16 %v1899
          %v2618 = vunpack.c.h.b16 %v1899
          %v2619 = vunpack.c.l.b16 %v1900
          %v2620 = vunpack.c.h.b16 %v1900
          %v2621 = vunpack.c.l.b16 %v1901
          %v2622 = vunpack.c.h.b16 %v1901
          %v2623 = vunpack.c.l.b16 %v1902
          %v2624 = vunpack.c.h.b16 %v1902
          %v2625 = vunpack.c.l.b16 %v1903
          %v2626 = vunpack.c.h.b16 %v1903
          %v2627 = vunpack.c.l.b16 %v1904
          %v2628 = vunpack.c.h.b16 %v1904
          %v2629 = vunpack.c.l.b16 %v1905
          %v2630 = vunpack.c.h.b16 %v1905
          %v2631 = vunpack.c.l.b16 %v1906
          %v2632 = vunpack.c.h.b16 %v1906
          %v2633 = vunpack.c.l.b16 %v1907
          %v2634 = vunpack.c.h.b16 %v1907
          %v2635 = vunpack.c.l.b16 %v1908
          %v2636 = vunpack.c.h.b16 %v1908
          %v2637 = vunpack.c.l.b16 %v1909
          %v2638 = vunpack.c.h.b16 %v1909
          %v2639 = vunpack.c.l.b16 %v1910
          %v2640 = vunpack.c.h.b16 %v1910
          %v2641 = vunpack.c.l.b16 %v1911
          %v2642 = vunpack.c.h.b16 %v1911
          %v2643 = vunpack.c.l.b16 %v1912
          %v2644 = vunpack.c.h.b16 %v1912
          %v2645 = vunpack.c.l.b16 %v1913
          %v2646 = vunpack.c.h.b16 %v1913
          %v2647 = vunpack.c.l.b16 %v1914
          %v2648 = vunpack.c.h.b16 %v1914
          %v2649 = vunpack.c.l.b16 %v1915
          %v2650 = vunpack.c.h.b16 %v1915
          %v2651 = vunpack.c.l.b16 %v1916
          %v2652 = vunpack.c.h.b16 %v1916
          %v2653 = vunpack.c.l.b16 %v1917
          %v2654 = vunpack.c.h.b16 %v1917
          %v2655 = vunpack.c.l.b16 %v1918
          %v2656 = vunpack.c.h.b16 %v1918
          %v2657 = vunpack.c.l.b16 %v1919
          %v2658 = vunpack.c.h.b16 %v1919
          %v2659 = vunpack.c.l.b16 %v1920
          %v2660 = vunpack.c.h.b16 %v1920
          %v2661 = vunpack.c.l.b16 %v1921
          %v2662 = vunpack.c.h.b16 %v1921
          %v2663 = vunpack.c.l.b16 %v1922
          %v2664 = vunpack.c.h.b16 %v1922
          %v2665 = vunpack.c.l.b16 %v1923
          %v2666 = vunpack.c.h.b16 %v1923
          %v2667 = vunpack.c.l.b16 %v1924
          %v2668 = vunpack.c.h.b16 %v1924
          %v2669 = vunpack.c.l.b16 %v1925
          %v2670 = vunpack.c.h.b16 %v1925
          %v2671 = vunpack.c.l.b16 %v1926
          %v2672 = vunpack.c.h.b16 %v1926
          %v2673 = vunpack.c.l.b16 %v1927
          %v2674 = vunpack.c.h.b16 %v1927
          %v2675 = vunpack.c.l.b16 %v1928
          %v2676 = vunpack.c.h.b16 %v1928
          %v2677 = vunpack.c.l.b16 %v1929
          %v2678 = vunpack.c.h.b16 %v1929
          %v2679 = vunpack.c.l.b16 %v1930
          %v2680 = vunpack.c.h.b16 %v1930
          %v2681 = vunpack.c.l.b16 %v1931
          %v2682 = vunpack.c.h.b16 %v1931
          %v2683 = vunpack.c.l.b16 %v1932
          %v2684 = vunpack.c.h.b16 %v1932
          %v2685 = vunpack.c.l.b16 %v1933
          %v2686 = vunpack.c.h.b16 %v1933
          %v2687 = vunpack.c.l.b16 %v1934
          %v2688 = vunpack.c.h.b16 %v1934
          %v2689 = vunpack.c.l.b16 %v1935
          %v2690 = vunpack.c.h.b16 %v1935
          %v2691 = vunpack.c.l.b16 %v1936
          %v2692 = vunpack.c.h.b16 %v1936
          %v2693 = vunpack.c.l.b16 %v1937
          %v2694 = vunpack.c.h.b16 %v1937
          %v2695 = vunpack.c.l.b16 %v1938
          %v2696 = vunpack.c.h.b16 %v1938
          %v2697 = vunpack.c.l.b16 %v1939
          %v2698 = vunpack.c.h.b16 %v1939
          %v2699 = vunpack.c.l.b16 %v1940
          %v2700 = vunpack.c.h.b16 %v1940
          %v2701 = vunpack.c.l.b16 %v1941
          %v2702 = vunpack.c.h.b16 %v1941
          %v2703 = vunpack.c.l.b16 %v1942
          %v2704 = vunpack.c.h.b16 %v1942
          %v2705 = vunpack.c.l.b16 %v1943
          %v2706 = vunpack.c.h.b16 %v1943
          %v2707 = vunpack.c.l.b16 %v1944
          %v2708 = vunpack.c.h.b16 %v1944
          %v2709 = vunpack.c.l.b16 %v1945
          %v2710 = vunpack.c.h.b16 %v1945
          %v2711 = vunpack.c.l.b16 %v1946
          %v2712 = vunpack.c.h.b16 %v1946
          %v2713 = vunpack.c.l.b16 %v1947
          %v2714 = vunpack.c.h.b16 %v1947
          %v2715 = vunpack.c.l.b16 %v1948
          %v2716 = vunpack.c.h.b16 %v1948
          %v2717 = vpack.c.b16 %v2209, %v2205
          %v2718 = vpack.c.b16 %v2210, %v2206
          %v2719 = vpack.c.b16 %v2211, %v2207
          %v2720 = vpack.c.b16 %v2212, %v2208
          %v2721 = vpack.c.b16 %v2217, %v2213
          %v2722 = vpack.c.b16 %v2218, %v2214
          %v2723 = vpack.c.b16 %v2219, %v2215
          %v2724 = vpack.c.b16 %v2220, %v2216
          %v2725 = vpack.c.b16 %v2225, %v2221
          %v2726 = vpack.c.b16 %v2226, %v2222
          %v2727 = vpack.c.b16 %v2227, %v2223
          %v2728 = vpack.c.b16 %v2228, %v2224
          %v2729 = vpack.c.b16 %v2233, %v2229
          %v2730 = vpack.c.b16 %v2234, %v2230
          %v2731 = vpack.c.b16 %v2235, %v2231
          %v2732 = vpack.c.b16 %v2236, %v2232
          %v2733 = vpack.c.b16 %v2241, %v2237
          %v2734 = vpack.c.b16 %v2242, %v2238
          %v2735 = vpack.c.b16 %v2243, %v2239
          %v2736 = vpack.c.b16 %v2244, %v2240
          %v2737 = vpack.c.b16 %v2249, %v2245
          %v2738 = vpack.c.b16 %v2250, %v2246
          %v2739 = vpack.c.b16 %v2251, %v2247
          %v2740 = vpack.c.b16 %v2252, %v2248
          %v2741 = vpack.c.b16 %v2257, %v2253
          %v2742 = vpack.c.b16 %v2258, %v2254
          %v2743 = vpack.c.b16 %v2259, %v2255
          %v2744 = vpack.c.b16 %v2260, %v2256
          %v2745 = vpack.c.b16 %v2265, %v2261
          %v2746 = vpack.c.b16 %v2266, %v2262
          %v2747 = vpack.c.b16 %v2267, %v2263
          %v2748 = vpack.c.b16 %v2268, %v2264
          %v2749 = vpack.c.b16 %v2273, %v2269
          %v2750 = vpack.c.b16 %v2274, %v2270
          %v2751 = vpack.c.b16 %v2275, %v2271
          %v2752 = vpack.c.b16 %v2276, %v2272
          %v2753 = vpack.c.b16 %v2281, %v2277
          %v2754 = vpack.c.b16 %v2282, %v2278
          %v2755 = vpack.c.b16 %v2283, %v2279
          %v2756 = vpack.c.b16 %v2284, %v2280
          %v2757 = vpack.c.b16 %v2289, %v2285
          %v2758 = vpack.c.b16 %v2290, %v2286
          %v2759 = vpack.c.b16 %v2291, %v2287
          %v2760 = vpack.c.b16 %v2292, %v2288
          %v2761 = vpack.c.b16 %v2297, %v2293
          %v2762 = vpack.c.b16 %v2298, %v2294
          %v2763 = vpack.c.b16 %v2299, %v2295
          %v2764 = vpack.c.b16 %v2300, %v2296
          %v2765 = vpack.c.b16 %v2305, %v2301
          %v2766 = vpack.c.b16 %v2306, %v2302
          %v2767 = vpack.c.b16 %v2307, %v2303
          %v2768 = vpack.c.b16 %v2308, %v2304
          %v2769 = vpack.c.b16 %v2313, %v2309
          %v2770 = vpack.c.b16 %v2314, %v2310
          %v2771 = vpack.c.b16 %v2315, %v2311
          %v2772 = vpack.c.b16 %v2316, %v2312
          %v2773 = vpack.c.b16 %v2321, %v2317
          %v2774 = vpack.c.b16 %v2322, %v2318
          %v2775 = vpack.c.b16 %v2323, %v2319
          %v2776 = vpack.c.b16 %v2324, %v2320
          %v2777 = vpack.c.b16 %v2329, %v2325
          %v2778 = vpack.c.b16 %v2330, %v2326
          %v2779 = vpack.c.b16 %v2331, %v2327
          %v2780 = vpack.c.b16 %v2332, %v2328
          %v2781 = vpack.c.b16 %v2337, %v2333
          %v2782 = vpack.c.b16 %v2338, %v2334
          %v2783 = vpack.c.b16 %v2339, %v2335
          %v2784 = vpack.c.b16 %v2340, %v2336
          %v2785 = vpack.c.b16 %v2345, %v2341
          %v2786 = vpack.c.b16 %v2346, %v2342
          %v2787 = vpack.c.b16 %v2347, %v2343
          %v2788 = vpack.c.b16 %v2348, %v2344
          %v2789 = vpack.c.b16 %v2353, %v2349
          %v2790 = vpack.c.b16 %v2354, %v2350
          %v2791 = vpack.c.b16 %v2355, %v2351
          %v2792 = vpack.c.b16 %v2356, %v2352
          %v2793 = vpack.c.b16 %v2361, %v2357
          %v2794 = vpack.c.b16 %v2362, %v2358
          %v2795 = vpack.c.b16 %v2363, %v2359
          %v2796 = vpack.c.b16 %v2364, %v2360
          %v2797 = vpack.c.b16 %v2369, %v2365
          %v2798 = vpack.c.b16 %v2370, %v2366
          %v2799 = vpack.c.b16 %v2371, %v2367
          %v2800 = vpack.c.b16 %v2372, %v2368
          %v2801 = vpack.c.b16 %v2377, %v2373
          %v2802 = vpack.c.b16 %v2378, %v2374
          %v2803 = vpack.c.b16 %v2379, %v2375
          %v2804 = vpack.c.b16 %v2380, %v2376
          %v2805 = vpack.c.b16 %v2385, %v2381
          %v2806 = vpack.c.b16 %v2386, %v2382
          %v2807 = vpack.c.b16 %v2387, %v2383
          %v2808 = vpack.c.b16 %v2388, %v2384
          %v2809 = vpack.c.b16 %v2393, %v2389
          %v2810 = vpack.c.b16 %v2394, %v2390
          %v2811 = vpack.c.b16 %v2395, %v2391
          %v2812 = vpack.c.b16 %v2396, %v2392
          %v2813 = vpack.c.b16 %v2401, %v2397
          %v2814 = vpack.c.b16 %v2402, %v2398
          %v2815 = vpack.c.b16 %v2403, %v2399
          %v2816 = vpack.c.b16 %v2404, %v2400
          %v2817 = vpack.c.b16 %v2409, %v2405
          %v2818 = vpack.c.b16 %v2410, %v2406
          %v2819 = vpack.c.b16 %v2411, %v2407
          %v2820 = vpack.c.b16 %v2412, %v2408
          %v2821 = vpack.c.b16 %v2417, %v2413
          %v2822 = vpack.c.b16 %v2418, %v2414
          %v2823 = vpack.c.b16 %v2419, %v2415
          %v2824 = vpack.c.b16 %v2420, %v2416
          %v2825 = vpack.c.b16 %v2425, %v2421
          %v2826 = vpack.c.b16 %v2426, %v2422
          %v2827 = vpack.c.b16 %v2427, %v2423
          %v2828 = vpack.c.b16 %v2428, %v2424
          %v2829 = vpack.c.b16 %v2433, %v2429
          %v2830 = vpack.c.b16 %v2434, %v2430
          %v2831 = vpack.c.b16 %v2435, %v2431
          %v2832 = vpack.c.b16 %v2436, %v2432
          %v2833 = vpack.c.b16 %v2441, %v2437
          %v2834 = vpack.c.b16 %v2442, %v2438
          %v2835 = vpack.c.b16 %v2443, %v2439
          %v2836 = vpack.c.b16 %v2444, %v2440
          %v2837 = vpack.c.b16 %v2449, %v2445
          %v2838 = vpack.c.b16 %v2450, %v2446
          %v2839 = vpack.c.b16 %v2451, %v2447
          %v2840 = vpack.c.b16 %v2452, %v2448
          %v2841 = vpack.c.b16 %v2457, %v2453
          %v2842 = vpack.c.b16 %v2458, %v2454
          %v2843 = vpack.c.b16 %v2459, %v2455
          %v2844 = vpack.c.b16 %v2460, %v2456
          %v2845 = vpack.c.b16 %v2465, %v2461
          %v2846 = vpack.c.b16 %v2466, %v2462
          %v2847 = vpack.c.b16 %v2467, %v2463
          %v2848 = vpack.c.b16 %v2468, %v2464
          %v2849 = vpack.c.b16 %v2473, %v2469
          %v2850 = vpack.c.b16 %v2474, %v2470
          %v2851 = vpack.c.b16 %v2475, %v2471
          %v2852 = vpack.c.b16 %v2476, %v2472
          %v2853 = vpack.c.b16 %v2481, %v2477
          %v2854 = vpack.c.b16 %v2482, %v2478
          %v2855 = vpack.c.b16 %v2483, %v2479
          %v2856 = vpack.c.b16 %v2484, %v2480
          %v2857 = vpack.c.b16 %v2489, %v2485
          %v2858 = vpack.c.b16 %v2490, %v2486
          %v2859 = vpack.c.b16 %v2491, %v2487
          %v2860 = vpack.c.b16 %v2492, %v2488
          %v2861 = vpack.c.b16 %v2497, %v2493
          %v2862 = vpack.c.b16 %v2498, %v2494
          %v2863 = vpack.c.b16 %v2499, %v2495
          %v2864 = vpack.c.b16 %v2500, %v2496
          %v2865 = vpack.c.b16 %v2505, %v2501
          %v2866 = vpack.c.b16 %v2506, %v2502
          %v2867 = vpack.c.b16 %v2507, %v2503
          %v2868 = vpack.c.b16 %v2508, %v2504
          %v2869 = vpack.c.b16 %v2513, %v2509
          %v2870 = vpack.c.b16 %v2514, %v2510
          %v2871 = vpack.c.b16 %v2515, %v2511
          %v2872 = vpack.c.b16 %v2516, %v2512
          %v2873 = vpack.c.b16 %v2521, %v2517
          %v2874 = vpack.c.b16 %v2522, %v2518
          %v2875 = vpack.c.b16 %v2523, %v2519
          %v2876 = vpack.c.b16 %v2524, %v2520
          %v2877 = vpack.c.b16 %v2529, %v2525
          %v2878 = vpack.c.b16 %v2530, %v2526
          %v2879 = vpack.c.b16 %v2531, %v2527
          %v2880 = vpack.c.b16 %v2532, %v2528
          %v2881 = vpack.c.b16 %v2537, %v2533
          %v2882 = vpack.c.b16 %v2538, %v2534
          %v2883 = vpack.c.b16 %v2539, %v2535
          %v2884 = vpack.c.b16 %v2540, %v2536
          %v2885 = vpack.c.b16 %v2545, %v2541
          %v2886 = vpack.c.b16 %v2546, %v2542
          %v2887 = vpack.c.b16 %v2547, %v2543
          %v2888 = vpack.c.b16 %v2548, %v2544
          %v2889 = vpack.c.b16 %v2553, %v2549
          %v2890 = vpack.c.b16 %v2554, %v2550
          %v2891 = vpack.c.b16 %v2555, %v2551
          %v2892 = vpack.c.b16 %v2556, %v2552
          %v2893 = vpack.c.b16 %v2561, %v2557
          %v2894 = vpack.c.b16 %v2562, %v2558
          %v2895 = vpack.c.b16 %v2563, %v2559
          %v2896 = vpack.c.b16 %v2564, %v2560
          %v2897 = vpack.c.b16 %v2569, %v2565
          %v2898 = vpack.c.b16 %v2570, %v2566
          %v2899 = vpack.c.b16 %v2571, %v2567
          %v2900 = vpack.c.b16 %v2572, %v2568
          %v2901 = vpack.c.b16 %v2577, %v2573
          %v2902 = vpack.c.b16 %v2578, %v2574
          %v2903 = vpack.c.b16 %v2579, %v2575
          %v2904 = vpack.c.b16 %v2580, %v2576
          %v2905 = vpack.c.b16 %v2585, %v2581
          %v2906 = vpack.c.b16 %v2586, %v2582
          %v2907 = vpack.c.b16 %v2587, %v2583
          %v2908 = vpack.c.b16 %v2588, %v2584
          %v2909 = vpack.c.b16 %v2593, %v2589
          %v2910 = vpack.c.b16 %v2594, %v2590
          %v2911 = vpack.c.b16 %v2595, %v2591
          %v2912 = vpack.c.b16 %v2596, %v2592
          %v2913 = vpack.c.b16 %v2601, %v2597
          %v2914 = vpack.c.b16 %v2602, %v2598
          %v2915 = vpack.c.b16 %v2603, %v2599
          %v2916 = vpack.c.b16 %v2604, %v2600
          %v2917 = vpack.c.b16 %v2609, %v2605
          %v2918 = vpack.c.b16 %v2610, %v2606
          %v2919 = vpack.c.b16 %v2611, %v2607
          %v2920 = vpack.c.b16 %v2612, %v2608
          %v2921 = vpack.c.b16 %v2617, %v2613
          %v2922 = vpack.c.b16 %v2618, %v2614
          %v2923 = vpack.c.b16 %v2619, %v2615
          %v2924 = vpack.c.b16 %v2620, %v2616
          %v2925 = vpack.c.b16 %v2625, %v2621
          %v2926 = vpack.c.b16 %v2626, %v2622
          %v2927 = vpack.c.b16 %v2627, %v2623
          %v2928 = vpack.c.b16 %v2628, %v2624
          %v2929 = vpack.c.b16 %v2633, %v2629
          %v2930 = vpack.c.b16 %v2634, %v2630
          %v2931 = vpack.c.b16 %v2635, %v2631
          %v2932 = vpack.c.b16 %v2636, %v2632
          %v2933 = vpack.c.b16 %v2641, %v2637
          %v2934 = vpack.c.b16 %v2642, %v2638
          %v2935 = vpack.c.b16 %v2643, %v2639
          %v2936 = vpack.c.b16 %v2644, %v2640
          %v2937 = vpack.c.b16 %v2649, %v2645
          %v2938 = vpack.c.b16 %v2650, %v2646
          %v2939 = vpack.c.b16 %v2651, %v2647
          %v2940 = vpack.c.b16 %v2652, %v2648
          %v2941 = vpack.c.b16 %v2657, %v2653
          %v2942 = vpack.c.b16 %v2658, %v2654
          %v2943 = vpack.c.b16 %v2659, %v2655
          %v2944 = vpack.c.b16 %v2660, %v2656
          %v2945 = vpack.c.b16 %v2665, %v2661
          %v2946 = vpack.c.b16 %v2666, %v2662
          %v2947 = vpack.c.b16 %v2667, %v2663
          %v2948 = vpack.c.b16 %v2668, %v2664
          %v2949 = vpack.c.b16 %v2673, %v2669
          %v2950 = vpack.c.b16 %v2674, %v2670
          %v2951 = vpack.c.b16 %v2675, %v2671
          %v2952 = vpack.c.b16 %v2676, %v2672
          %v2953 = vpack.c.b16 %v2681, %v2677
          %v2954 = vpack.c.b16 %v2682, %v2678
          %v2955 = vpack.c.b16 %v2683, %v2679
          %v2956 = vpack.c.b16 %v2684, %v2680
          %v2957 = vpack.c.b16 %v2689, %v2685
          %v2958 = vpack.c.b16 %v2690, %v2686
          %v2959 = vpack.c.b16 %v2691, %v2687
          %v2960 = vpack.c.b16 %v2692, %v2688
          %v2961 = vpack.c.b16 %v2697, %v2693
          %v2962 = vpack.c.b16 %v2698, %v2694
          %v2963 = vpack.c.b16 %v2699, %v2695
          %v2964 = vpack.c.b16 %v2700, %v2696
          %v2965 = vpack.c.b16 %v2705, %v2701
          %v2966 = vpack.c.b16 %v2706, %v2702
          %v2967 = vpack.c.b16 %v2707, %v2703
          %v2968 = vpack.c.b16 %v2708, %v2704
          %v2969 = vpack.c.b16 %v2713, %v2709
          %v2970 = vpack.c.b16 %v2714, %v2710
          %v2971 = vpack.c.b16 %v2715, %v2711
          %v2972 = vpack.c.b16 %v2716, %v2712
          %3229 = vmatpush.bf16.msra.mxu0 %v2745
          %3230 = vmatpush.bf16.msra.mxu0 %v2741
          %3231 = vmatpush.bf16.msra.mxu0 %v2737
          %3232 = vmatpush.bf16.msra.mxu0 %v2733
          %3233 = vmatpush.bf16.msra.mxu0 %v2729
          %3234 = vmatpush.bf16.msra.mxu0 %v2725
          %3235 = vmatpush.bf16.msra.mxu0 %v2721
          %3236 = vmatpush.bf16.msra.mxu0 %v2717
          %3237 = vmatmul.bf16.gmra.mxu0 %v1685
          %v3238 = vpop.f32.mrf.mxu0
          %v3239 = vadd.f32 0.0, %v3238
          %v3240 = vpop.f32.mrf.mxu0
          %3241 = vdwg.mxu0
          %3242 = vmatpush.bf16.msra.mxu0 %v2777
          %3243 = vmatpush.bf16.msra.mxu0 %v2773
          %3244 = vmatpush.bf16.msra.mxu0 %v2769
          %3245 = vmatpush.bf16.msra.mxu0 %v2765
          %3246 = vmatpush.bf16.msra.mxu0 %v2761
          %3247 = vmatpush.bf16.msra.mxu0 %v2757
          %3248 = vmatpush.bf16.msra.mxu0 %v2753
          %3249 = vmatpush.bf16.msra.mxu0 %v2749
          %3250 = vmatmul.bf16.gmra.mxu0 %v1686
          %v3251 = vpop.f32.mrf.mxu0
          %v3252 = vadd.f32 %v3239, %v3251
          %v3253 = vpop.f32.mrf.mxu0
          %3254 = vdwg.mxu0
          %3255 = vmatpush.bf16.msra.mxu0 %v2809
          %3256 = vmatpush.bf16.msra.mxu0 %v2805
          %3257 = vmatpush.bf16.msra.mxu0 %v2801
          %3258 = vmatpush.bf16.msra.mxu0 %v2797
          %3259 = vmatpush.bf16.msra.mxu0 %v2793
          %3260 = vmatpush.bf16.msra.mxu0 %v2789
          %3261 = vmatpush.bf16.msra.mxu0 %v2785
          %3262 = vmatpush.bf16.msra.mxu0 %v2781
          %3263 = vmatmul.bf16.gmra.mxu0 %v1687
          %v3264 = vpop.f32.mrf.mxu0
          %v3265 = vadd.f32 %v3252, %v3264
          %v3266 = vpop.f32.mrf.mxu0
          %3267 = vdwg.mxu0
          %3268 = vmatpush.bf16.msra.mxu0 %v2841
          %3269 = vmatpush.bf16.msra.mxu0 %v2837
          %3270 = vmatpush.bf16.msra.mxu0 %v2833
          %3271 = vmatpush.bf16.msra.mxu0 %v2829
          %3272 = vmatpush.bf16.msra.mxu0 %v2825
          %3273 = vmatpush.bf16.msra.mxu0 %v2821
          %3274 = vmatpush.bf16.msra.mxu0 %v2817
          %3275 = vmatpush.bf16.msra.mxu0 %v2813
          %3276 = vmatmul.bf16.gmra.mxu0 %v1688
          %v3277 = vpop.f32.mrf.mxu0
          %v3278 = vadd.f32 %v3265, %v3277
          %v3279 = vpop.f32.mrf.mxu0
          %3280 = vdwg.mxu0
          %3281 = vmatpush.bf16.msra.mxu0 %v2873
          %3282 = vmatpush.bf16.msra.mxu0 %v2869
          %3283 = vmatpush.bf16.msra.mxu0 %v2865
          %3284 = vmatpush.bf16.msra.mxu0 %v2861
          %3285 = vmatpush.bf16.msra.mxu0 %v2857
          %3286 = vmatpush.bf16.msra.mxu0 %v2853
          %3287 = vmatpush.bf16.msra.mxu0 %v2849
          %3288 = vmatpush.bf16.msra.mxu0 %v2845
          %3289 = vmatmul.bf16.gmra.mxu0 %v1689
          %v3290 = vpop.f32.mrf.mxu0
          %v3291 = vadd.f32 %v3278, %v3290
          %v3292 = vpop.f32.mrf.mxu0
          %3293 = vdwg.mxu0
          %3294 = vmatpush.bf16.msra.mxu0 %v2905
          %3295 = vmatpush.bf16.msra.mxu0 %v2901
          %3296 = vmatpush.bf16.msra.mxu0 %v2897
          %3297 = vmatpush.bf16.msra.mxu0 %v2893
          %3298 = vmatpush.bf16.msra.mxu0 %v2889
          %3299 = vmatpush.bf16.msra.mxu0 %v2885
          %3300 = vmatpush.bf16.msra.mxu0 %v2881
          %3301 = vmatpush.bf16.msra.mxu0 %v2877
          %3302 = vmatmul.bf16.gmra.mxu0 %v1690
          %v3303 = vpop.f32.mrf.mxu0
          %v3304 = vadd.f32 %v3291, %v3303
          %v3305 = vpop.f32.mrf.mxu0
          %3306 = vdwg.mxu0
          %3307 = vmatpush.bf16.msra.mxu0 %v2937
          %3308 = vmatpush.bf16.msra.mxu0 %v2933
          %3309 = vmatpush.bf16.msra.mxu0 %v2929
          %3310 = vmatpush.bf16.msra.mxu0 %v2925
          %3311 = vmatpush.bf16.msra.mxu0 %v2921
          %3312 = vmatpush.bf16.msra.mxu0 %v2917
          %3313 = vmatpush.bf16.msra.mxu0 %v2913
          %3314 = vmatpush.bf16.msra.mxu0 %v2909
          %3315 = vmatmul.bf16.gmra.mxu0 %v1691
          %v3316 = vpop.f32.mrf.mxu0
          %v3317 = vadd.f32 %v3304, %v3316
          %v3318 = vpop.f32.mrf.mxu0
          %3319 = vdwg.mxu0
          %3320 = vmatpush.bf16.msra.mxu0 %v2969
          %3321 = vmatpush.bf16.msra.mxu0 %v2965
          %3322 = vmatpush.bf16.msra.mxu0 %v2961
          %3323 = vmatpush.bf16.msra.mxu0 %v2957
          %3324 = vmatpush.bf16.msra.mxu0 %v2953
          %3325 = vmatpush.bf16.msra.mxu0 %v2949
          %3326 = vmatpush.bf16.msra.mxu0 %v2945
          %3327 = vmatpush.bf16.msra.mxu0 %v2941
          %3328 = vmatmul.bf16.gmra.mxu0 %v1692
          %v3329 = vpop.f32.mrf.mxu0
          %v3330 = vadd.f32 %v3317, %v3329
          %v3331 = vpop.f32.mrf.mxu0
          %3332 = vdwg.mxu0
          %3333 = vmatpush.bf16.msra.mxu0 %v2746
          %3334 = vmatpush.bf16.msra.mxu0 %v2742
          %3335 = vmatpush.bf16.msra.mxu0 %v2738
          %3336 = vmatpush.bf16.msra.mxu0 %v2734
          %3337 = vmatpush.bf16.msra.mxu0 %v2730
          %3338 = vmatpush.bf16.msra.mxu0 %v2726
          %3339 = vmatpush.bf16.msra.mxu0 %v2722
          %3340 = vmatpush.bf16.msra.mxu0 %v2718
          %3341 = vmatmul.bf16.gmra.mxu0 %v1685
          %v3342 = vpop.f32.mrf.mxu0
          %v3343 = vadd.f32 0.0, %v3342
          %v3344 = vpop.f32.mrf.mxu0
          %3345 = vdwg.mxu0
          %3346 = vmatpush.bf16.msra.mxu0 %v2778
          %3347 = vmatpush.bf16.msra.mxu0 %v2774
          %3348 = vmatpush.bf16.msra.mxu0 %v2770
          %3349 = vmatpush.bf16.msra.mxu0 %v2766
          %3350 = vmatpush.bf16.msra.mxu0 %v2762
          %3351 = vmatpush.bf16.msra.mxu0 %v2758
          %3352 = vmatpush.bf16.msra.mxu0 %v2754
          %3353 = vmatpush.bf16.msra.mxu0 %v2750
          %3354 = vmatmul.bf16.gmra.mxu0 %v1686
          %v3355 = vpop.f32.mrf.mxu0
          %v3356 = vadd.f32 %v3343, %v3355
          %v3357 = vpop.f32.mrf.mxu0
          %3358 = vdwg.mxu0
          %3359 = vmatpush.bf16.msra.mxu0 %v2810
          %3360 = vmatpush.bf16.msra.mxu0 %v2806
          %3361 = vmatpush.bf16.msra.mxu0 %v2802
          %3362 = vmatpush.bf16.msra.mxu0 %v2798
          %3363 = vmatpush.bf16.msra.mxu0 %v2794
          %3364 = vmatpush.bf16.msra.mxu0 %v2790
          %3365 = vmatpush.bf16.msra.mxu0 %v2786
          %3366 = vmatpush.bf16.msra.mxu0 %v2782
          %3367 = vmatmul.bf16.gmra.mxu0 %v1687
          %v3368 = vpop.f32.mrf.mxu0
          %v3369 = vadd.f32 %v3356, %v3368
          %v3370 = vpop.f32.mrf.mxu0
          %3371 = vdwg.mxu0
          %3372 = vmatpush.bf16.msra.mxu0 %v2842
          %3373 = vmatpush.bf16.msra.mxu0 %v2838
          %3374 = vmatpush.bf16.msra.mxu0 %v2834
          %3375 = vmatpush.bf16.msra.mxu0 %v2830
          %3376 = vmatpush.bf16.msra.mxu0 %v2826
          %3377 = vmatpush.bf16.msra.mxu0 %v2822
          %3378 = vmatpush.bf16.msra.mxu0 %v2818
          %3379 = vmatpush.bf16.msra.mxu0 %v2814
          %3380 = vmatmul.bf16.gmra.mxu0 %v1688
          %v3381 = vpop.f32.mrf.mxu0
          %v3382 = vadd.f32 %v3369, %v3381
          %v3383 = vpop.f32.mrf.mxu0
          %3384 = vdwg.mxu0
          %3385 = vmatpush.bf16.msra.mxu0 %v2874
          %3386 = vmatpush.bf16.msra.mxu0 %v2870
          %3387 = vmatpush.bf16.msra.mxu0 %v2866
          %3388 = vmatpush.bf16.msra.mxu0 %v2862
          %3389 = vmatpush.bf16.msra.mxu0 %v2858
          %3390 = vmatpush.bf16.msra.mxu0 %v2854
          %3391 = vmatpush.bf16.msra.mxu0 %v2850
          %3392 = vmatpush.bf16.msra.mxu0 %v2846
          %3393 = vmatmul.bf16.gmra.mxu0 %v1689
          %v3394 = vpop.f32.mrf.mxu0
          %v3395 = vadd.f32 %v3382, %v3394
          %v3396 = vpop.f32.mrf.mxu0
          %3397 = vdwg.mxu0
          %3398 = vmatpush.bf16.msra.mxu0 %v2906
          %3399 = vmatpush.bf16.msra.mxu0 %v2902
          %3400 = vmatpush.bf16.msra.mxu0 %v2898
          %3401 = vmatpush.bf16.msra.mxu0 %v2894
          %3402 = vmatpush.bf16.msra.mxu0 %v2890
          %3403 = vmatpush.bf16.msra.mxu0 %v2886
          %3404 = vmatpush.bf16.msra.mxu0 %v2882
          %3405 = vmatpush.bf16.msra.mxu0 %v2878
          %3406 = vmatmul.bf16.gmra.mxu0 %v1690
          %v3407 = vpop.f32.mrf.mxu0
          %v3408 = vadd.f32 %v3395, %v3407
          %v3409 = vpop.f32.mrf.mxu0
          %3410 = vdwg.mxu0
          %3411 = vmatpush.bf16.msra.mxu0 %v2938
          %3412 = vmatpush.bf16.msra.mxu0 %v2934
          %3413 = vmatpush.bf16.msra.mxu0 %v2930
          %3414 = vmatpush.bf16.msra.mxu0 %v2926
          %3415 = vmatpush.bf16.msra.mxu0 %v2922
          %3416 = vmatpush.bf16.msra.mxu0 %v2918
          %3417 = vmatpush.bf16.msra.mxu0 %v2914
          %3418 = vmatpush.bf16.msra.mxu0 %v2910
          %3419 = vmatmul.bf16.gmra.mxu0 %v1691
          %v3420 = vpop.f32.mrf.mxu0
          %v3421 = vadd.f32 %v3408, %v3420
          %v3422 = vpop.f32.mrf.mxu0
          %3423 = vdwg.mxu0
          %3424 = vmatpush.bf16.msra.mxu0 %v2970
          %3425 = vmatpush.bf16.msra.mxu0 %v2966
          %3426 = vmatpush.bf16.msra.mxu0 %v2962
          %3427 = vmatpush.bf16.msra.mxu0 %v2958
          %3428 = vmatpush.bf16.msra.mxu0 %v2954
          %3429 = vmatpush.bf16.msra.mxu0 %v2950
          %3430 = vmatpush.bf16.msra.mxu0 %v2946
          %3431 = vmatpush.bf16.msra.mxu0 %v2942
          %3432 = vmatmul.bf16.gmra.mxu0 %v1692
          %v3433 = vpop.f32.mrf.mxu0
          %v3434 = vadd.f32 %v3421, %v3433
          %v3435 = vpop.f32.mrf.mxu0
          %3436 = vdwg.mxu0
          %3437 = vmatpush.bf16.msra.mxu0 %v2747
          %3438 = vmatpush.bf16.msra.mxu0 %v2743
          %3439 = vmatpush.bf16.msra.mxu0 %v2739
          %3440 = vmatpush.bf16.msra.mxu0 %v2735
          %3441 = vmatpush.bf16.msra.mxu0 %v2731
          %3442 = vmatpush.bf16.msra.mxu0 %v2727
          %3443 = vmatpush.bf16.msra.mxu0 %v2723
          %3444 = vmatpush.bf16.msra.mxu0 %v2719
          %3445 = vmatmul.bf16.gmra.mxu0 %v1685
          %v3446 = vpop.f32.mrf.mxu0
          %v3447 = vadd.f32 0.0, %v3446
          %v3448 = vpop.f32.mrf.mxu0
          %3449 = vdwg.mxu0
          %3450 = vmatpush.bf16.msra.mxu0 %v2779
          %3451 = vmatpush.bf16.msra.mxu0 %v2775
          %3452 = vmatpush.bf16.msra.mxu0 %v2771
          %3453 = vmatpush.bf16.msra.mxu0 %v2767
          %3454 = vmatpush.bf16.msra.mxu0 %v2763
          %3455 = vmatpush.bf16.msra.mxu0 %v2759
          %3456 = vmatpush.bf16.msra.mxu0 %v2755
          %3457 = vmatpush.bf16.msra.mxu0 %v2751
          %3458 = vmatmul.bf16.gmra.mxu0 %v1686
          %v3459 = vpop.f32.mrf.mxu0
          %v3460 = vadd.f32 %v3447, %v3459
          %v3461 = vpop.f32.mrf.mxu0
          %3462 = vdwg.mxu0
          %3463 = vmatpush.bf16.msra.mxu0 %v2811
          %3464 = vmatpush.bf16.msra.mxu0 %v2807
          %3465 = vmatpush.bf16.msra.mxu0 %v2803
          %3466 = vmatpush.bf16.msra.mxu0 %v2799
          %3467 = vmatpush.bf16.msra.mxu0 %v2795
          %3468 = vmatpush.bf16.msra.mxu0 %v2791
          %3469 = vmatpush.bf16.msra.mxu0 %v2787
          %3470 = vmatpush.bf16.msra.mxu0 %v2783
          %3471 = vmatmul.bf16.gmra.mxu0 %v1687
          %v3472 = vpop.f32.mrf.mxu0
          %v3473 = vadd.f32 %v3460, %v3472
          %v3474 = vpop.f32.mrf.mxu0
          %3475 = vdwg.mxu0
          %3476 = vmatpush.bf16.msra.mxu0 %v2843
          %3477 = vmatpush.bf16.msra.mxu0 %v2839
          %3478 = vmatpush.bf16.msra.mxu0 %v2835
          %3479 = vmatpush.bf16.msra.mxu0 %v2831
          %3480 = vmatpush.bf16.msra.mxu0 %v2827
          %3481 = vmatpush.bf16.msra.mxu0 %v2823
          %3482 = vmatpush.bf16.msra.mxu0 %v2819
          %3483 = vmatpush.bf16.msra.mxu0 %v2815
          %3484 = vmatmul.bf16.gmra.mxu0 %v1688
          %v3485 = vpop.f32.mrf.mxu0
          %v3486 = vadd.f32 %v3473, %v3485
          %v3487 = vpop.f32.mrf.mxu0
          %3488 = vdwg.mxu0
          %3489 = vmatpush.bf16.msra.mxu0 %v2875
          %3490 = vmatpush.bf16.msra.mxu0 %v2871
          %3491 = vmatpush.bf16.msra.mxu0 %v2867
          %3492 = vmatpush.bf16.msra.mxu0 %v2863
          %3493 = vmatpush.bf16.msra.mxu0 %v2859
          %3494 = vmatpush.bf16.msra.mxu0 %v2855
          %3495 = vmatpush.bf16.msra.mxu0 %v2851
          %3496 = vmatpush.bf16.msra.mxu0 %v2847
          %3497 = vmatmul.bf16.gmra.mxu0 %v1689
          %v3498 = vpop.f32.mrf.mxu0
          %v3499 = vadd.f32 %v3486, %v3498
          %v3500 = vpop.f32.mrf.mxu0
          %3501 = vdwg.mxu0
          %3502 = vmatpush.bf16.msra.mxu0 %v2907
          %3503 = vmatpush.bf16.msra.mxu0 %v2903
          %3504 = vmatpush.bf16.msra.mxu0 %v2899
          %3505 = vmatpush.bf16.msra.mxu0 %v2895
          %3506 = vmatpush.bf16.msra.mxu0 %v2891
          %3507 = vmatpush.bf16.msra.mxu0 %v2887
          %3508 = vmatpush.bf16.msra.mxu0 %v2883
          %3509 = vmatpush.bf16.msra.mxu0 %v2879
          %3510 = vmatmul.bf16.gmra.mxu0 %v1690
          %v3511 = vpop.f32.mrf.mxu0
          %v3512 = vadd.f32 %v3499, %v3511
          %v3513 = vpop.f32.mrf.mxu0
          %3514 = vdwg.mxu0
          %3515 = vmatpush.bf16.msra.mxu0 %v2939
          %3516 = vmatpush.bf16.msra.mxu0 %v2935
          %3517 = vmatpush.bf16.msra.mxu0 %v2931
          %3518 = vmatpush.bf16.msra.mxu0 %v2927
          %3519 = vmatpush.bf16.msra.mxu0 %v2923
          %3520 = vmatpush.bf16.msra.mxu0 %v2919
          %3521 = vmatpush.bf16.msra.mxu0 %v2915
          %3522 = vmatpush.bf16.msra.mxu0 %v2911
          %3523 = vmatmul.bf16.gmra.mxu0 %v1691
          %v3524 = vpop.f32.mrf.mxu0
          %v3525 = vadd.f32 %v3512, %v3524
          %v3526 = vpop.f32.mrf.mxu0
          %3527 = vdwg.mxu0
          %3528 = vmatpush.bf16.msra.mxu0 %v2971
          %3529 = vmatpush.bf16.msra.mxu0 %v2967
          %3530 = vmatpush.bf16.msra.mxu0 %v2963
          %3531 = vmatpush.bf16.msra.mxu0 %v2959
          %3532 = vmatpush.bf16.msra.mxu0 %v2955
          %3533 = vmatpush.bf16.msra.mxu0 %v2951
          %3534 = vmatpush.bf16.msra.mxu0 %v2947
          %3535 = vmatpush.bf16.msra.mxu0 %v2943
          %3536 = vmatmul.bf16.gmra.mxu0 %v1692
          %v3537 = vpop.f32.mrf.mxu0
          %v3538 = vadd.f32 %v3525, %v3537
          %v3539 = vpop.f32.mrf.mxu0
          %3540 = vdwg.mxu0
          %3541 = vmatpush.bf16.msra.mxu0 %v2748
          %3542 = vmatpush.bf16.msra.mxu0 %v2744
          %3543 = vmatpush.bf16.msra.mxu0 %v2740
          %3544 = vmatpush.bf16.msra.mxu0 %v2736
          %3545 = vmatpush.bf16.msra.mxu0 %v2732
          %3546 = vmatpush.bf16.msra.mxu0 %v2728
          %3547 = vmatpush.bf16.msra.mxu0 %v2724
          %3548 = vmatpush.bf16.msra.mxu0 %v2720
          %3549 = vmatmul.bf16.gmra.mxu0 %v1685
          %v3550 = vpop.f32.mrf.mxu0
          %v3551 = vadd.f32 0.0, %v3550
          %v3552 = vpop.f32.mrf.mxu0
          %3553 = vdwg.mxu0
          %3554 = vmatpush.bf16.msra.mxu0 %v2780
          %3555 = vmatpush.bf16.msra.mxu0 %v2776
          %3556 = vmatpush.bf16.msra.mxu0 %v2772
          %3557 = vmatpush.bf16.msra.mxu0 %v2768
          %3558 = vmatpush.bf16.msra.mxu0 %v2764
          %3559 = vmatpush.bf16.msra.mxu0 %v2760
          %3560 = vmatpush.bf16.msra.mxu0 %v2756
          %3561 = vmatpush.bf16.msra.mxu0 %v2752
          %3562 = vmatmul.bf16.gmra.mxu0 %v1686
          %v3563 = vpop.f32.mrf.mxu0
          %v3564 = vadd.f32 %v3551, %v3563
          %v3565 = vpop.f32.mrf.mxu0
          %3566 = vdwg.mxu0
          %3567 = vmatpush.bf16.msra.mxu0 %v2812
          %3568 = vmatpush.bf16.msra.mxu0 %v2808
          %3569 = vmatpush.bf16.msra.mxu0 %v2804
          %3570 = vmatpush.bf16.msra.mxu0 %v2800
          %3571 = vmatpush.bf16.msra.mxu0 %v2796
          %3572 = vmatpush.bf16.msra.mxu0 %v2792
          %3573 = vmatpush.bf16.msra.mxu0 %v2788
          %3574 = vmatpush.bf16.msra.mxu0 %v2784
          %3575 = vmatmul.bf16.gmra.mxu0 %v1687
          %v3576 = vpop.f32.mrf.mxu0
          %v3577 = vadd.f32 %v3564, %v3576
          %v3578 = vpop.f32.mrf.mxu0
          %3579 = vdwg.mxu0
          %3580 = vmatpush.bf16.msra.mxu0 %v2844
          %3581 = vmatpush.bf16.msra.mxu0 %v2840
          %3582 = vmatpush.bf16.msra.mxu0 %v2836
          %3583 = vmatpush.bf16.msra.mxu0 %v2832
          %3584 = vmatpush.bf16.msra.mxu0 %v2828
          %3585 = vmatpush.bf16.msra.mxu0 %v2824
          %3586 = vmatpush.bf16.msra.mxu0 %v2820
          %3587 = vmatpush.bf16.msra.mxu0 %v2816
          %3588 = vmatmul.bf16.gmra.mxu0 %v1688
          %v3589 = vpop.f32.mrf.mxu0
          %v3590 = vadd.f32 %v3577, %v3589
          %v3591 = vpop.f32.mrf.mxu0
          %3592 = vdwg.mxu0
          %3593 = vmatpush.bf16.msra.mxu0 %v2876
          %3594 = vmatpush.bf16.msra.mxu0 %v2872
          %3595 = vmatpush.bf16.msra.mxu0 %v2868
          %3596 = vmatpush.bf16.msra.mxu0 %v2864
          %3597 = vmatpush.bf16.msra.mxu0 %v2860
          %3598 = vmatpush.bf16.msra.mxu0 %v2856
          %3599 = vmatpush.bf16.msra.mxu0 %v2852
          %3600 = vmatpush.bf16.msra.mxu0 %v2848
          %3601 = vmatmul.bf16.gmra.mxu0 %v1689
          %v3602 = vpop.f32.mrf.mxu0
          %v3603 = vadd.f32 %v3590, %v3602
          %v3604 = vpop.f32.mrf.mxu0
          %3605 = vdwg.mxu0
          %3606 = vmatpush.bf16.msra.mxu0 %v2908
          %3607 = vmatpush.bf16.msra.mxu0 %v2904
          %3608 = vmatpush.bf16.msra.mxu0 %v2900
          %3609 = vmatpush.bf16.msra.mxu0 %v2896
          %3610 = vmatpush.bf16.msra.mxu0 %v2892
          %3611 = vmatpush.bf16.msra.mxu0 %v2888
          %3612 = vmatpush.bf16.msra.mxu0 %v2884
          %3613 = vmatpush.bf16.msra.mxu0 %v2880
          %3614 = vmatmul.bf16.gmra.mxu0 %v1690
          %v3615 = vpop.f32.mrf.mxu0
          %v3616 = vadd.f32 %v3603, %v3615
          %v3617 = vpop.f32.mrf.mxu0
          %3618 = vdwg.mxu0
          %3619 = vmatpush.bf16.msra.mxu0 %v2940
          %3620 = vmatpush.bf16.msra.mxu0 %v2936
          %3621 = vmatpush.bf16.msra.mxu0 %v2932
          %3622 = vmatpush.bf16.msra.mxu0 %v2928
          %3623 = vmatpush.bf16.msra.mxu0 %v2924
          %3624 = vmatpush.bf16.msra.mxu0 %v2920
          %3625 = vmatpush.bf16.msra.mxu0 %v2916
          %3626 = vmatpush.bf16.msra.mxu0 %v2912
          %3627 = vmatmul.bf16.gmra.mxu0 %v1691
          %v3628 = vpop.f32.mrf.mxu0
          %v3629 = vadd.f32 %v3616, %v3628
          %v3630 = vpop.f32.mrf.mxu0
          %3631 = vdwg.mxu0
          %3632 = vmatpush.bf16.msra.mxu0 %v2972
          %3633 = vmatpush.bf16.msra.mxu0 %v2968
          %3634 = vmatpush.bf16.msra.mxu0 %v2964
          %3635 = vmatpush.bf16.msra.mxu0 %v2960
          %3636 = vmatpush.bf16.msra.mxu0 %v2956
          %3637 = vmatpush.bf16.msra.mxu0 %v2952
          %3638 = vmatpush.bf16.msra.mxu0 %v2948
          %3639 = vmatpush.bf16.msra.mxu0 %v2944
          %3640 = vmatmul.bf16.gmra.mxu0 %v1692
          %v3641 = vpop.f32.mrf.mxu0
          %v3642 = vadd.f32 %v3629, %v3641
          %v3643 = vpop.f32.mrf.mxu0
          %3644 = vdwg.mxu0
          %v3645 = vadd.f32 %v1681, %v3330
          %v3646 = vadd.f32 %v1682, %v3434
          %v3647 = vadd.f32 %v1683, %v3538
          %v3648 = vadd.f32 %v1684, %v3642
          %v3649 = vld [vmem:[%s8] sm:$0xf]
          %v3651 = vperm.slane %v3649, 0
          %v3652 = vperm.slane %v3649, 1
          %v3653 = vperm.slane %v3649, 2
          %v3654 = vperm.slane %v3649, 3
          %v3659 = vadd.f32 %v3645, %v3651
          %v3660 = vadd.f32 %v3646, %v3652
          %v3661 = vadd.f32 %v3647, %v3653
          %v3662 = vadd.f32 %v3648, %v3654
          %v3663 = vld [vmem:[%s9] sm:$0xf]
          %v3664 = vld [vmem:[%s10] sm:$0xf]
          %v3665 = vrot.slane %v3659, 4
          %v3666 = vadd.f32 %v3659, %v3665
          %v3667 = vrot.slane %v3666, 2
          %v3668 = vadd.f32 %v3666, %v3667
          %v3669 = vrot.slane %v3668, 1
          %v3670 = vadd.f32 %v3668, %v3669
          %v3671 = vrot.slane %v3660, 4
          %v3672 = vadd.f32 %v3660, %v3671
          %v3673 = vrot.slane %v3672, 2
          %v3674 = vadd.f32 %v3672, %v3673
          %v3675 = vrot.slane %v3674, 1
          %v3676 = vadd.f32 %v3674, %v3675
          %v3677 = vrot.slane %v3661, 4
          %v3678 = vadd.f32 %v3661, %v3677
          %v3679 = vrot.slane %v3678, 2
          %v3680 = vadd.f32 %v3678, %v3679
          %v3681 = vrot.slane %v3680, 1
          %v3682 = vadd.f32 %v3680, %v3681
          %v3683 = vrot.slane %v3662, 4
          %v3684 = vadd.f32 %v3662, %v3683
          %v3685 = vrot.slane %v3684, 2
          %v3686 = vadd.f32 %v3684, %v3685
          %v3687 = vrot.slane %v3686, 1
          %v3688 = vadd.f32 %v3686, %v3687
          %v3689 = vrcp.pop 8.0
          %v3690 = vmul.f32 8.0, %v3689
          %v3691 = vsub.f32 1.0, %v3690
          %v3692 = vmul.f32 %v3689, %v3691
          %v3693 = vadd.f32 %v3689, %v3692
          %vm3694 = vweird.f32 %v3689
          %v3695 = vsel %vm3694, %v3689, %v3693
          %v3696 = vmul.f32 %v3670, %v3695
          %v3697 = vmul.f32 %v3676, %v3695
          %v3698 = vmul.f32 %v3682, %v3695
          %v3699 = vmul.f32 %v3688, %v3695
          %v3700 = vmul.f32 %v3659, %v3659
          %v3701 = vmul.f32 %v3660, %v3660
          %v3702 = vmul.f32 %v3661, %v3661
          %v3703 = vmul.f32 %v3662, %v3662
          %v3704 = vrot.slane %v3700, 4
          %v3705 = vadd.f32 %v3700, %v3704
          %v3706 = vrot.slane %v3705, 2
          %v3707 = vadd.f32 %v3705, %v3706
          %v3708 = vrot.slane %v3707, 1
          %v3709 = vadd.f32 %v3707, %v3708
          %v3710 = vrot.slane %v3701, 4
          %v3711 = vadd.f32 %v3701, %v3710
          %v3712 = vrot.slane %v3711, 2
          %v3713 = vadd.f32 %v3711, %v3712
          %v3714 = vrot.slane %v3713, 1
          %v3715 = vadd.f32 %v3713, %v3714
          %v3716 = vrot.slane %v3702, 4
          %v3717 = vadd.f32 %v3702, %v3716
          %v3718 = vrot.slane %v3717, 2
          %v3719 = vadd.f32 %v3717, %v3718
          %v3720 = vrot.slane %v3719, 1
          %v3721 = vadd.f32 %v3719, %v3720
          %v3722 = vrot.slane %v3703, 4
          %v3723 = vadd.f32 %v3703, %v3722
          %v3724 = vrot.slane %v3723, 2
          %v3725 = vadd.f32 %v3723, %v3724
          %v3726 = vrot.slane %v3725, 1
          %v3727 = vadd.f32 %v3725, %v3726
          %v3728 = vmul.f32 %v3709, %v3695
          %v3729 = vmul.f32 %v3715, %v3695
          %v3730 = vmul.f32 %v3721, %v3695
          %v3731 = vmul.f32 %v3727, %v3695
          %v3732 = vmul.f32 %v3696, %v3696
          %v3733 = vmul.f32 %v3697, %v3697
          %v3734 = vmul.f32 %v3698, %v3698
          %v3735 = vmul.f32 %v3699, %v3699
          %v3736 = vsub.f32 %v3728, %v3732
          %v3737 = vsub.f32 %v3729, %v3733
          %v3738 = vsub.f32 %v3730, %v3734
          %v3739 = vsub.f32 %v3731, %v3735
          %v3740 = vsub.f32 %v3659, %v3696
          %v3741 = vsub.f32 %v3660, %v3697
          %v3742 = vsub.f32 %v3661, %v3698
          %v3743 = vsub.f32 %v3662, %v3699
          %v3744 = vadd.f32 %v3736, 1e-05
          %v3745 = vadd.f32 %v3737, 1e-05
          %v3746 = vadd.f32 %v3738, 1e-05
          %v3747 = vadd.f32 %v3739, 1e-05
          %v3748 = vrsqrt.pop %v3744
          %v3749 = vmul.f32 %v3748, %v3744
          %v3750 = vmul.f32 %v3749, %v3748
          %v3751 = vmul.f32 0.5, %v3750
          %v3752 = vsub.f32 1.5, %v3751
          %v3753 = vmul.f32 %v3748, %v3752
          %vm3754 = vweird.f32 %v3744
          %vm3755 = vweird.f32 %v3748
          %vm3756 = vmor %vm3754, %vm3755
          %v3757 = vsel %vm3756, %v3748, %v3753
          %v3758 = vrsqrt.pop %v3745
          %v3759 = vmul.f32 %v3758, %v3745
          %v3760 = vmul.f32 %v3759, %v3758
          %v3761 = vmul.f32 0.5, %v3760
          %v3762 = vsub.f32 1.5, %v3761
          %v3763 = vmul.f32 %v3758, %v3762
          %vm3764 = vweird.f32 %v3745
          %vm3765 = vweird.f32 %v3758
          %vm3766 = vmor %vm3764, %vm3765
          %v3767 = vsel %vm3766, %v3758, %v3763
          %v3768 = vrsqrt.pop %v3746
          %v3769 = vmul.f32 %v3768, %v3746
          %v3770 = vmul.f32 %v3769, %v3768
          %v3771 = vmul.f32 0.5, %v3770
          %v3772 = vsub.f32 1.5, %v3771
          %v3773 = vmul.f32 %v3768, %v3772
          %vm3774 = vweird.f32 %v3746
          %vm3775 = vweird.f32 %v3768
          %vm3776 = vmor %vm3774, %vm3775
          %v3777 = vsel %vm3776, %v3768, %v3773
          %v3778 = vrsqrt.pop %v3747
          %v3779 = vmul.f32 %v3778, %v3747
          %v3780 = vmul.f32 %v3779, %v3778
          %v3781 = vmul.f32 0.5, %v3780
          %v3782 = vsub.f32 1.5, %v3781
          %v3783 = vmul.f32 %v3778, %v3782
          %vm3784 = vweird.f32 %v3747
          %vm3785 = vweird.f32 %v3778
          %vm3786 = vmor %vm3784, %vm3785
          %v3787 = vsel %vm3786, %v3778, %v3783
          %v3788 = vmul.f32 %v3740, %v3757
          %v3789 = vmul.f32 %v3741, %v3767
          %v3790 = vmul.f32 %v3742, %v3777
          %v3791 = vmul.f32 %v3743, %v3787
          %v3793 = vperm.slane %v3663, 0
          %v3794 = vperm.slane %v3663, 1
          %v3795 = vperm.slane %v3663, 2
          %v3796 = vperm.slane %v3663, 3
          %v3801 = vmul.f32 %v3788, %v3793
          %v3802 = vmul.f32 %v3789, %v3794
          %v3803 = vmul.f32 %v3790, %v3795
          %v3804 = vmul.f32 %v3791, %v3796
          %v3806 = vperm.slane %v3664, 0
          %v3807 = vperm.slane %v3664, 1
          %v3808 = vperm.slane %v3664, 2
          %v3809 = vperm.slane %v3664, 3
          %v3814 = vadd.f32 %v3801, %v3806
          %v3815 = vadd.f32 %v3802, %v3807
          %v3816 = vadd.f32 %v3803, %v3808
          %v3817 = vadd.f32 %v3804, %v3809
          %vm3818 = vcmp.gt.f32.partialorder %v3814, 0.0
          %vm3819 = vcmp.gt.f32.partialorder %v3815, 0.0
          %vm3820 = vcmp.gt.f32.partialorder %v3816, 0.0
          %vm3821 = vcmp.gt.f32.partialorder %v3817, 0.0
          %v3822 = vmul.f32 %v3814, 0.2
          %v3823 = vmul.f32 %v3815, 0.2
          %v3824 = vmul.f32 %v3816, 0.2
          %v3825 = vmul.f32 %v3817, 0.2
          %v3826 = vsel %vm3818, %v3814, %v3822
          %v3827 = vsel %vm3819, %v3815, %v3823
          %v3828 = vsel %vm3820, %v3816, %v3824
          %v3829 = vsel %vm3821, %v3817, %v3825
          %v3830 = vpack.c.bf16 %v3826, %v3826
          %v3831 = vpack.c.bf16 %v3827, %v3827
          %v3832 = vpack.c.bf16 %v3828, %v3828
          %v3833 = vpack.c.bf16 %v3829, %v3829
          %v3834 = vld [vmem:[#allocation9] sm:$0xff]
          %v3835 = vld [vmem:[#allocation9 + $0x8] sm:$0xff]
          %v3836 = vld [vmem:[#allocation9 + $0x10] sm:$0xff]
          %v3837 = vld [vmem:[#allocation9 + $0x18] sm:$0xff]
          %v3838 = vld [vmem:[#allocation9 + $0x20] sm:$0xff]
          %v3839 = vld [vmem:[#allocation9 + $0x28] sm:$0xff]
          %v3840 = vld [vmem:[#allocation9 + $0x30] sm:$0xff]
          %v3841 = vld [vmem:[#allocation9 + $0x38] sm:$0xff]
          %v3842 = vld [vmem:[#allocation9 + $0x40] sm:$0xff]
          %v3843 = vld [vmem:[#allocation9 + $0x48] sm:$0xff]
          %v3844 = vld [vmem:[#allocation9 + $0x50] sm:$0xff]
          %v3845 = vld [vmem:[#allocation9 + $0x58] sm:$0xff]
          %v3846 = vld [vmem:[#allocation9 + $0x60] sm:$0xff]
          %v3847 = vld [vmem:[#allocation9 + $0x68] sm:$0xff]
          %v3848 = vld [vmem:[#allocation9 + $0x70] sm:$0xff]
          %v3849 = vld [vmem:[#allocation9 + $0x78] sm:$0xff]
          %v3850 = vld [vmem:[#allocation9 + $0x80] sm:$0xff]
          %v3851 = vld [vmem:[#allocation9 + $0x88] sm:$0xff]
          %v3852 = vld [vmem:[#allocation9 + $0x90] sm:$0xff]
          %v3853 = vld [vmem:[#allocation9 + $0x98] sm:$0xff]
          %v3854 = vld [vmem:[#allocation9 + $0xa0] sm:$0xff]
          %v3855 = vld [vmem:[#allocation9 + $0xa8] sm:$0xff]
          %v3856 = vld [vmem:[#allocation9 + $0xb0] sm:$0xff]
          %v3857 = vld [vmem:[#allocation9 + $0xb8] sm:$0xff]
          %v3858 = vld [vmem:[#allocation9 + $0xc0] sm:$0xff]
          %v3859 = vld [vmem:[#allocation9 + $0xc8] sm:$0xff]
          %v3860 = vld [vmem:[#allocation9 + $0xd0] sm:$0xff]
          %v3861 = vld [vmem:[#allocation9 + $0xd8] sm:$0xff]
          %v3862 = vld [vmem:[#allocation9 + $0xe0] sm:$0xff]
          %v3863 = vld [vmem:[#allocation9 + $0xe8] sm:$0xff]
          %v3864 = vld [vmem:[#allocation9 + $0xf0] sm:$0xff]
          %v3865 = vld [vmem:[#allocation9 + $0xf8] sm:$0xff]
          %v3866 = vld [vmem:[#allocation9 + $0x100] sm:$0xff]
          %v3867 = vld [vmem:[#allocation9 + $0x108] sm:$0xff]
          %v3868 = vld [vmem:[#allocation9 + $0x110] sm:$0xff]
          %v3869 = vld [vmem:[#allocation9 + $0x118] sm:$0xff]
          %v3870 = vld [vmem:[#allocation9 + $0x120] sm:$0xff]
          %v3871 = vld [vmem:[#allocation9 + $0x128] sm:$0xff]
          %v3872 = vld [vmem:[#allocation9 + $0x130] sm:$0xff]
          %v3873 = vld [vmem:[#allocation9 + $0x138] sm:$0xff]
          %v3874 = vld [vmem:[#allocation9 + $0x140] sm:$0xff]
          %v3875 = vld [vmem:[#allocation9 + $0x148] sm:$0xff]
          %v3876 = vld [vmem:[#allocation9 + $0x150] sm:$0xff]
          %v3877 = vld [vmem:[#allocation9 + $0x158] sm:$0xff]
          %v3878 = vld [vmem:[#allocation9 + $0x160] sm:$0xff]
          %v3879 = vld [vmem:[#allocation9 + $0x168] sm:$0xff]
          %v3880 = vld [vmem:[#allocation9 + $0x170] sm:$0xff]
          %v3881 = vld [vmem:[#allocation9 + $0x178] sm:$0xff]
          %v3882 = vld [vmem:[#allocation9 + $0x180] sm:$0xff]
          %v3883 = vld [vmem:[#allocation9 + $0x188] sm:$0xff]
          %v3884 = vld [vmem:[#allocation9 + $0x190] sm:$0xff]
          %v3885 = vld [vmem:[#allocation9 + $0x198] sm:$0xff]
          %v3886 = vld [vmem:[#allocation9 + $0x1a0] sm:$0xff]
          %v3887 = vld [vmem:[#allocation9 + $0x1a8] sm:$0xff]
          %v3888 = vld [vmem:[#allocation9 + $0x1b0] sm:$0xff]
          %v3889 = vld [vmem:[#allocation9 + $0x1b8] sm:$0xff]
          %v3890 = vld [vmem:[#allocation9 + $0x1c0] sm:$0xff]
          %v3891 = vld [vmem:[#allocation9 + $0x1c8] sm:$0xff]
          %v3892 = vld [vmem:[#allocation9 + $0x1d0] sm:$0xff]
          %v3893 = vld [vmem:[#allocation9 + $0x1d8] sm:$0xff]
          %v3894 = vld [vmem:[#allocation9 + $0x1e0] sm:$0xff]
          %v3895 = vld [vmem:[#allocation9 + $0x1e8] sm:$0xff]
          %v3896 = vld [vmem:[#allocation9 + $0x1f0] sm:$0xff]
          %v3897 = vld [vmem:[#allocation9 + $0x1f8] sm:$0xff]
          %v3898 = vld [vmem:[%s12] sm:$0x3]
          %v3900 = vperm.slane %v3898, 0
          %v3901 = vperm.slane %v3898, 1
          %v3968 = vunpack.c.l.b16 %v3834
          %v3969 = vunpack.c.h.b16 %v3834
          %v3970 = vunpack.c.l.b16 %v3835
          %v3971 = vunpack.c.h.b16 %v3835
          %v3972 = vunpack.c.l.b16 %v3836
          %v3973 = vunpack.c.h.b16 %v3836
          %v3974 = vunpack.c.l.b16 %v3837
          %v3975 = vunpack.c.h.b16 %v3837
          %v3976 = vunpack.c.l.b16 %v3838
          %v3977 = vunpack.c.h.b16 %v3838
          %v3978 = vunpack.c.l.b16 %v3839
          %v3979 = vunpack.c.h.b16 %v3839
          %v3980 = vunpack.c.l.b16 %v3840
          %v3981 = vunpack.c.h.b16 %v3840
          %v3982 = vunpack.c.l.b16 %v3841
          %v3983 = vunpack.c.h.b16 %v3841
          %v3984 = vunpack.c.l.b16 %v3842
          %v3985 = vunpack.c.h.b16 %v3842
          %v3986 = vunpack.c.l.b16 %v3843
          %v3987 = vunpack.c.h.b16 %v3843
          %v3988 = vunpack.c.l.b16 %v3844
          %v3989 = vunpack.c.h.b16 %v3844
          %v3990 = vunpack.c.l.b16 %v3845
          %v3991 = vunpack.c.h.b16 %v3845
          %v3992 = vunpack.c.l.b16 %v3846
          %v3993 = vunpack.c.h.b16 %v3846
          %v3994 = vunpack.c.l.b16 %v3847
          %v3995 = vunpack.c.h.b16 %v3847
          %v3996 = vunpack.c.l.b16 %v3848
          %v3997 = vunpack.c.h.b16 %v3848
          %v3998 = vunpack.c.l.b16 %v3849
          %v3999 = vunpack.c.h.b16 %v3849
          %v4000 = vunpack.c.l.b16 %v3850
          %v4001 = vunpack.c.h.b16 %v3850
          %v4002 = vunpack.c.l.b16 %v3851
          %v4003 = vunpack.c.h.b16 %v3851
          %v4004 = vunpack.c.l.b16 %v3852
          %v4005 = vunpack.c.h.b16 %v3852
          %v4006 = vunpack.c.l.b16 %v3853
          %v4007 = vunpack.c.h.b16 %v3853
          %v4008 = vunpack.c.l.b16 %v3854
          %v4009 = vunpack.c.h.b16 %v3854
          %v4010 = vunpack.c.l.b16 %v3855
          %v4011 = vunpack.c.h.b16 %v3855
          %v4012 = vunpack.c.l.b16 %v3856
          %v4013 = vunpack.c.h.b16 %v3856
          %v4014 = vunpack.c.l.b16 %v3857
          %v4015 = vunpack.c.h.b16 %v3857
          %v4016 = vunpack.c.l.b16 %v3858
          %v4017 = vunpack.c.h.b16 %v3858
          %v4018 = vunpack.c.l.b16 %v3859
          %v4019 = vunpack.c.h.b16 %v3859
          %v4020 = vunpack.c.l.b16 %v3860
          %v4021 = vunpack.c.h.b16 %v3860
          %v4022 = vunpack.c.l.b16 %v3861
          %v4023 = vunpack.c.h.b16 %v3861
          %v4024 = vunpack.c.l.b16 %v3862
          %v4025 = vunpack.c.h.b16 %v3862
          %v4026 = vunpack.c.l.b16 %v3863
          %v4027 = vunpack.c.h.b16 %v3863
          %v4028 = vunpack.c.l.b16 %v3864
          %v4029 = vunpack.c.h.b16 %v3864
          %v4030 = vunpack.c.l.b16 %v3865
          %v4031 = vunpack.c.h.b16 %v3865
          %v4032 = vunpack.c.l.b16 %v3866
          %v4033 = vunpack.c.h.b16 %v3866
          %v4034 = vunpack.c.l.b16 %v3867
          %v4035 = vunpack.c.h.b16 %v3867
          %v4036 = vunpack.c.l.b16 %v3868
          %v4037 = vunpack.c.h.b16 %v3868
          %v4038 = vunpack.c.l.b16 %v3869
          %v4039 = vunpack.c.h.b16 %v3869
          %v4040 = vunpack.c.l.b16 %v3870
          %v4041 = vunpack.c.h.b16 %v3870
          %v4042 = vunpack.c.l.b16 %v3871
          %v4043 = vunpack.c.h.b16 %v3871
          %v4044 = vunpack.c.l.b16 %v3872
          %v4045 = vunpack.c.h.b16 %v3872
          %v4046 = vunpack.c.l.b16 %v3873
          %v4047 = vunpack.c.h.b16 %v3873
          %v4048 = vunpack.c.l.b16 %v3874
          %v4049 = vunpack.c.h.b16 %v3874
          %v4050 = vunpack.c.l.b16 %v3875
          %v4051 = vunpack.c.h.b16 %v3875
          %v4052 = vunpack.c.l.b16 %v3876
          %v4053 = vunpack.c.h.b16 %v3876
          %v4054 = vunpack.c.l.b16 %v3877
          %v4055 = vunpack.c.h.b16 %v3877
          %v4056 = vunpack.c.l.b16 %v3878
          %v4057 = vunpack.c.h.b16 %v3878
          %v4058 = vunpack.c.l.b16 %v3879
          %v4059 = vunpack.c.h.b16 %v3879
          %v4060 = vunpack.c.l.b16 %v3880
          %v4061 = vunpack.c.h.b16 %v3880
          %v4062 = vunpack.c.l.b16 %v3881
          %v4063 = vunpack.c.h.b16 %v3881
          %v4064 = vunpack.c.l.b16 %v3882
          %v4065 = vunpack.c.h.b16 %v3882
          %v4066 = vunpack.c.l.b16 %v3883
          %v4067 = vunpack.c.h.b16 %v3883
          %v4068 = vunpack.c.l.b16 %v3884
          %v4069 = vunpack.c.h.b16 %v3884
          %v4070 = vunpack.c.l.b16 %v3885
          %v4071 = vunpack.c.h.b16 %v3885
          %v4072 = vunpack.c.l.b16 %v3886
          %v4073 = vunpack.c.h.b16 %v3886
          %v4074 = vunpack.c.l.b16 %v3887
          %v4075 = vunpack.c.h.b16 %v3887
          %v4076 = vunpack.c.l.b16 %v3888
          %v4077 = vunpack.c.h.b16 %v3888
          %v4078 = vunpack.c.l.b16 %v3889
          %v4079 = vunpack.c.h.b16 %v3889
          %v4080 = vunpack.c.l.b16 %v3890
          %v4081 = vunpack.c.h.b16 %v3890
          %v4082 = vunpack.c.l.b16 %v3891
          %v4083 = vunpack.c.h.b16 %v3891
          %v4084 = vunpack.c.l.b16 %v3892
          %v4085 = vunpack.c.h.b16 %v3892
          %v4086 = vunpack.c.l.b16 %v3893
          %v4087 = vunpack.c.h.b16 %v3893
          %v4088 = vunpack.c.l.b16 %v3894
          %v4089 = vunpack.c.h.b16 %v3894
          %v4090 = vunpack.c.l.b16 %v3895
          %v4091 = vunpack.c.h.b16 %v3895
          %v4092 = vunpack.c.l.b16 %v3896
          %v4093 = vunpack.c.h.b16 %v3896
          %v4094 = vunpack.c.l.b16 %v3897
          %v4095 = vunpack.c.h.b16 %v3897
          %v4096 = vpack.c.b16 %v3970, %v3968
          %v4097 = vpack.c.b16 %v3971, %v3969
          %v4098 = vpack.c.b16 %v3974, %v3972
          %v4099 = vpack.c.b16 %v3975, %v3973
          %v4100 = vpack.c.b16 %v3978, %v3976
          %v4101 = vpack.c.b16 %v3979, %v3977
          %v4102 = vpack.c.b16 %v3982, %v3980
          %v4103 = vpack.c.b16 %v3983, %v3981
          %v4104 = vpack.c.b16 %v3986, %v3984
          %v4105 = vpack.c.b16 %v3987, %v3985
          %v4106 = vpack.c.b16 %v3990, %v3988
          %v4107 = vpack.c.b16 %v3991, %v3989
          %v4108 = vpack.c.b16 %v3994, %v3992
          %v4109 = vpack.c.b16 %v3995, %v3993
          %v4110 = vpack.c.b16 %v3998, %v3996
          %v4111 = vpack.c.b16 %v3999, %v3997
          %v4112 = vpack.c.b16 %v4002, %v4000
          %v4113 = vpack.c.b16 %v4003, %v4001
          %v4114 = vpack.c.b16 %v4006, %v4004
          %v4115 = vpack.c.b16 %v4007, %v4005
          %v4116 = vpack.c.b16 %v4010, %v4008
          %v4117 = vpack.c.b16 %v4011, %v4009
          %v4118 = vpack.c.b16 %v4014, %v4012
          %v4119 = vpack.c.b16 %v4015, %v4013
          %v4120 = vpack.c.b16 %v4018, %v4016
          %v4121 = vpack.c.b16 %v4019, %v4017
          %v4122 = vpack.c.b16 %v4022, %v4020
          %v4123 = vpack.c.b16 %v4023, %v4021
          %v4124 = vpack.c.b16 %v4026, %v4024
          %v4125 = vpack.c.b16 %v4027, %v4025
          %v4126 = vpack.c.b16 %v4030, %v4028
          %v4127 = vpack.c.b16 %v4031, %v4029
          %v4128 = vpack.c.b16 %v4034, %v4032
          %v4129 = vpack.c.b16 %v4035, %v4033
          %v4130 = vpack.c.b16 %v4038, %v4036
          %v4131 = vpack.c.b16 %v4039, %v4037
          %v4132 = vpack.c.b16 %v4042, %v4040
          %v4133 = vpack.c.b16 %v4043, %v4041
          %v4134 = vpack.c.b16 %v4046, %v4044
          %v4135 = vpack.c.b16 %v4047, %v4045
          %v4136 = vpack.c.b16 %v4050, %v4048
          %v4137 = vpack.c.b16 %v4051, %v4049
          %v4138 = vpack.c.b16 %v4054, %v4052
          %v4139 = vpack.c.b16 %v4055, %v4053
          %v4140 = vpack.c.b16 %v4058, %v4056
          %v4141 = vpack.c.b16 %v4059, %v4057
          %v4142 = vpack.c.b16 %v4062, %v4060
          %v4143 = vpack.c.b16 %v4063, %v4061
          %v4144 = vpack.c.b16 %v4066, %v4064
          %v4145 = vpack.c.b16 %v4067, %v4065
          %v4146 = vpack.c.b16 %v4070, %v4068
          %v4147 = vpack.c.b16 %v4071, %v4069
          %v4148 = vpack.c.b16 %v4074, %v4072
          %v4149 = vpack.c.b16 %v4075, %v4073
          %v4150 = vpack.c.b16 %v4078, %v4076
          %v4151 = vpack.c.b16 %v4079, %v4077
          %v4152 = vpack.c.b16 %v4082, %v4080
          %v4153 = vpack.c.b16 %v4083, %v4081
          %v4154 = vpack.c.b16 %v4086, %v4084
          %v4155 = vpack.c.b16 %v4087, %v4085
          %v4156 = vpack.c.b16 %v4090, %v4088
          %v4157 = vpack.c.b16 %v4091, %v4089
          %v4158 = vpack.c.b16 %v4094, %v4092
          %v4159 = vpack.c.b16 %v4095, %v4093
          %4224 = vmatpush.bf16.msra.mxu0 %v4110
          %4225 = vmatpush.bf16.msra.mxu0 %v4108
          %4226 = vmatpush.bf16.msra.mxu0 %v4106
          %4227 = vmatpush.bf16.msra.mxu0 %v4104
          %4228 = vmatpush.bf16.msra.mxu0 %v4102
          %4229 = vmatpush.bf16.msra.mxu0 %v4100
          %4230 = vmatpush.bf16.msra.mxu0 %v4098
          %4231 = vmatpush.bf16.msra.mxu0 %v4096
          %4232 = vmatmul.bf16.gmra.mxu0 %v3830
          %v4233 = vpop.f32.mrf.mxu0
          %v4234 = vadd.f32 %v3900, %v4233
          %v4235 = vpop.f32.mrf.mxu0
          %4236 = vdwg.mxu0
          %4237 = vmatpush.bf16.msra.mxu0 %v4126
          %4238 = vmatpush.bf16.msra.mxu0 %v4124
          %4239 = vmatpush.bf16.msra.mxu0 %v4122
          %4240 = vmatpush.bf16.msra.mxu0 %v4120
          %4241 = vmatpush.bf16.msra.mxu0 %v4118
          %4242 = vmatpush.bf16.msra.mxu0 %v4116
          %4243 = vmatpush.bf16.msra.mxu0 %v4114
          %4244 = vmatpush.bf16.msra.mxu0 %v4112
          %4245 = vmatmul.bf16.gmra.mxu0 %v3831
          %v4246 = vpop.f32.mrf.mxu0
          %v4247 = vadd.f32 %v4234, %v4246
          %v4248 = vpop.f32.mrf.mxu0
          %4249 = vdwg.mxu0
          %4250 = vmatpush.bf16.msra.mxu0 %v4142
          %4251 = vmatpush.bf16.msra.mxu0 %v4140
          %4252 = vmatpush.bf16.msra.mxu0 %v4138
          %4253 = vmatpush.bf16.msra.mxu0 %v4136
          %4254 = vmatpush.bf16.msra.mxu0 %v4134
          %4255 = vmatpush.bf16.msra.mxu0 %v4132
          %4256 = vmatpush.bf16.msra.mxu0 %v4130
          %4257 = vmatpush.bf16.msra.mxu0 %v4128
          %4258 = vmatmul.bf16.gmra.mxu0 %v3832
          %v4259 = vpop.f32.mrf.mxu0
          %v4260 = vadd.f32 %v4247, %v4259
          %v4261 = vpop.f32.mrf.mxu0
          %4262 = vdwg.mxu0
          %4263 = vmatpush.bf16.msra.mxu0 %v4158
          %4264 = vmatpush.bf16.msra.mxu0 %v4156
          %4265 = vmatpush.bf16.msra.mxu0 %v4154
          %4266 = vmatpush.bf16.msra.mxu0 %v4152
          %4267 = vmatpush.bf16.msra.mxu0 %v4150
          %4268 = vmatpush.bf16.msra.mxu0 %v4148
          %4269 = vmatpush.bf16.msra.mxu0 %v4146
          %4270 = vmatpush.bf16.msra.mxu0 %v4144
          %4271 = vmatmul.bf16.gmra.mxu0 %v3833
          %v4272 = vpop.f32.mrf.mxu0
          %v4273 = vadd.f32 %v4260, %v4272
          %v4274 = vpop.f32.mrf.mxu0
          %4275 = vdwg.mxu0
          %4276 = vmatpush.bf16.msra.mxu0 %v4111
          %4277 = vmatpush.bf16.msra.mxu0 %v4109
          %4278 = vmatpush.bf16.msra.mxu0 %v4107
          %4279 = vmatpush.bf16.msra.mxu0 %v4105
          %4280 = vmatpush.bf16.msra.mxu0 %v4103
          %4281 = vmatpush.bf16.msra.mxu0 %v4101
          %4282 = vmatpush.bf16.msra.mxu0 %v4099
          %4283 = vmatpush.bf16.msra.mxu0 %v4097
          %4284 = vmatmul.bf16.gmra.mxu0 %v3830
          %v4285 = vpop.f32.mrf.mxu0
          %v4286 = vadd.f32 %v3901, %v4285
          %v4287 = vpop.f32.mrf.mxu0
          %4288 = vdwg.mxu0
          %4289 = vmatpush.bf16.msra.mxu0 %v4127
          %4290 = vmatpush.bf16.msra.mxu0 %v4125
          %4291 = vmatpush.bf16.msra.mxu0 %v4123
          %4292 = vmatpush.bf16.msra.mxu0 %v4121
          %4293 = vmatpush.bf16.msra.mxu0 %v4119
          %4294 = vmatpush.bf16.msra.mxu0 %v4117
          %4295 = vmatpush.bf16.msra.mxu0 %v4115
          %4296 = vmatpush.bf16.msra.mxu0 %v4113
          %4297 = vmatmul.bf16.gmra.mxu0 %v3831
          %v4298 = vpop.f32.mrf.mxu0
          %v4299 = vadd.f32 %v4286, %v4298
          %v4300 = vpop.f32.mrf.mxu0
          %4301 = vdwg.mxu0
          %4302 = vmatpush.bf16.msra.mxu0 %v4143
          %4303 = vmatpush.bf16.msra.mxu0 %v4141
          %4304 = vmatpush.bf16.msra.mxu0 %v4139
          %4305 = vmatpush.bf16.msra.mxu0 %v4137
          %4306 = vmatpush.bf16.msra.mxu0 %v4135
          %4307 = vmatpush.bf16.msra.mxu0 %v4133
          %4308 = vmatpush.bf16.msra.mxu0 %v4131
          %4309 = vmatpush.bf16.msra.mxu0 %v4129
          %4310 = vmatmul.bf16.gmra.mxu0 %v3832
          %v4311 = vpop.f32.mrf.mxu0
          %v4312 = vadd.f32 %v4299, %v4311
          %v4313 = vpop.f32.mrf.mxu0
          %4314 = vdwg.mxu0
          %4315 = vmatpush.bf16.msra.mxu0 %v4159
          %4316 = vmatpush.bf16.msra.mxu0 %v4157
          %4317 = vmatpush.bf16.msra.mxu0 %v4155
          %4318 = vmatpush.bf16.msra.mxu0 %v4153
          %4319 = vmatpush.bf16.msra.mxu0 %v4151
          %4320 = vmatpush.bf16.msra.mxu0 %v4149
          %4321 = vmatpush.bf16.msra.mxu0 %v4147
          %4322 = vmatpush.bf16.msra.mxu0 %v4145
          %4323 = vmatmul.bf16.gmra.mxu0 %v3833
          %v4324 = vpop.f32.mrf.mxu0
          %v4325 = vadd.f32 %v4312, %v4324
          %v4326 = vpop.f32.mrf.mxu0
          %4327 = vdwg.mxu0
          %v4328 = vld [vmem:[%s13] sm:$0x3]
          %v4329 = vld [vmem:[%s14] sm:$0x3]
          %v4330 = vrot.slane %v4273, 4
          %v4331 = vadd.f32 %v4273, %v4330
          %v4332 = vrot.slane %v4331, 2
          %v4333 = vadd.f32 %v4331, %v4332
          %v4334 = vrot.slane %v4333, 1
          %v4335 = vadd.f32 %v4333, %v4334
          %v4336 = vrot.slane %v4325, 4
          %v4337 = vadd.f32 %v4325, %v4336
          %v4338 = vrot.slane %v4337, 2
          %v4339 = vadd.f32 %v4337, %v4338
          %v4340 = vrot.slane %v4339, 1
          %v4341 = vadd.f32 %v4339, %v4340
          %v4342 = vmul.f32 %v4335, %v3695
          %v4343 = vmul.f32 %v4341, %v3695
          %v4344 = vmul.f32 %v4273, %v4273
          %v4345 = vmul.f32 %v4325, %v4325
          %v4346 = vrot.slane %v4344, 4
          %v4347 = vadd.f32 %v4344, %v4346
          %v4348 = vrot.slane %v4347, 2
          %v4349 = vadd.f32 %v4347, %v4348
          %v4350 = vrot.slane %v4349, 1
          %v4351 = vadd.f32 %v4349, %v4350
          %v4352 = vrot.slane %v4345, 4
          %v4353 = vadd.f32 %v4345, %v4352
          %v4354 = vrot.slane %v4353, 2
          %v4355 = vadd.f32 %v4353, %v4354
          %v4356 = vrot.slane %v4355, 1
          %v4357 = vadd.f32 %v4355, %v4356
          %v4358 = vmul.f32 %v4351, %v3695
          %v4359 = vmul.f32 %v4357, %v3695
          %v4360 = vmul.f32 %v4342, %v4342
          %v4361 = vmul.f32 %v4343, %v4343
          %v4362 = vsub.f32 %v4358, %v4360
          %v4363 = vsub.f32 %v4359, %v4361
          %v4364 = vsub.f32 %v4273, %v4342
          %v4365 = vsub.f32 %v4325, %v4343
          %v4366 = vadd.f32 %v4362, 1e-05
          %v4367 = vadd.f32 %v4363, 1e-05
          %v4368 = vrsqrt.pop %v4366
          %v4369 = vmul.f32 %v4368, %v4366
          %v4370 = vmul.f32 %v4369, %v4368
          %v4371 = vmul.f32 0.5, %v4370
          %v4372 = vsub.f32 1.5, %v4371
          %v4373 = vmul.f32 %v4368, %v4372
          %vm4374 = vweird.f32 %v4366
          %vm4375 = vweird.f32 %v4368
          %vm4376 = vmor %vm4374, %vm4375
          %v4377 = vsel %vm4376, %v4368, %v4373
          %v4378 = vrsqrt.pop %v4367
          %v4379 = vmul.f32 %v4378, %v4367
          %v4380 = vmul.f32 %v4379, %v4378
          %v4381 = vmul.f32 0.5, %v4380
          %v4382 = vsub.f32 1.5, %v4381
          %v4383 = vmul.f32 %v4378, %v4382
          %vm4384 = vweird.f32 %v4367
          %vm4385 = vweird.f32 %v4378
          %vm4386 = vmor %vm4384, %vm4385
          %v4387 = vsel %vm4386, %v4378, %v4383
          %v4388 = vmul.f32 %v4364, %v4377
          %v4389 = vmul.f32 %v4365, %v4387
          %v4391 = vperm.slane %v4328, 0
          %v4392 = vperm.slane %v4328, 1
          %v4395 = vmul.f32 %v4388, %v4391
          %v4396 = vmul.f32 %v4389, %v4392
          %v4398 = vperm.slane %v4329, 0
          %v4399 = vperm.slane %v4329, 1
          %v4402 = vadd.f32 %v4395, %v4398
          %v4403 = vadd.f32 %v4396, %v4399
          %vm4404 = vcmp.gt.f32.partialorder %v4402, 0.0
          %vm4405 = vcmp.gt.f32.partialorder %v4403, 0.0
          %v4406 = vmul.f32 %v4402, 0.2
          %v4407 = vmul.f32 %v4403, 0.2
          %v4408 = vsel %vm4404, %v4402, %v4406
          %v4409 = vsel %vm4405, %v4403, %v4407
          %v4410 = vld [vmem:[%s15] sm:$0xff]
          %v4411 = vld [vmem:[%s15 + $0x8] sm:$0xff]
          %v4412 = vld [vmem:[%s15 + $0x10] sm:$0xff]
          %v4413 = vld [vmem:[%s15 + $0x18] sm:$0xff]
          %v4414 = vld [vmem:[%s15 + $0x20] sm:$0xff]
          %v4415 = vld [vmem:[%s15 + $0x28] sm:$0xff]
          %v4416 = vld [vmem:[%s15 + $0x30] sm:$0xff]
          %v4417 = vld [vmem:[%s15 + $0x38] sm:$0xff]
          %v4418 = vld [vmem:[%s15 + $0x40] sm:$0xff]
          %v4419 = vld [vmem:[%s15 + $0x48] sm:$0xff]
          %v4420 = vld [vmem:[%s15 + $0x50] sm:$0xff]
          %v4421 = vld [vmem:[%s15 + $0x58] sm:$0xff]
          %v4422 = vld [vmem:[%s15 + $0x60] sm:$0xff]
          %v4423 = vld [vmem:[%s15 + $0x68] sm:$0xff]
          %v4424 = vld [vmem:[%s15 + $0x70] sm:$0xff]
          %v4425 = vld [vmem:[%s15 + $0x78] sm:$0xff]
          %v4426 = vld [vmem:[%s15 + $0x80] sm:$0xff]
          %v4427 = vld [vmem:[%s15 + $0x88] sm:$0xff]
          %v4428 = vld [vmem:[%s15 + $0x90] sm:$0xff]
          %v4429 = vld [vmem:[%s15 + $0x98] sm:$0xff]
          %v4430 = vld [vmem:[%s15 + $0xa0] sm:$0xff]
          %v4431 = vld [vmem:[%s15 + $0xa8] sm:$0xff]
          %v4432 = vld [vmem:[%s15 + $0xb0] sm:$0xff]
          %v4433 = vld [vmem:[%s15 + $0xb8] sm:$0xff]
          %v4434 = vld [vmem:[%s15 + $0xc0] sm:$0xff]
          %v4435 = vld [vmem:[%s15 + $0xc8] sm:$0xff]
          %v4436 = vld [vmem:[%s15 + $0xd0] sm:$0xff]
          %v4437 = vld [vmem:[%s15 + $0xd8] sm:$0xff]
          %v4438 = vld [vmem:[%s15 + $0xe0] sm:$0xff]
          %v4439 = vld [vmem:[%s15 + $0xe8] sm:$0xff]
          %v4440 = vld [vmem:[%s15 + $0xf0] sm:$0xff]
          %v4441 = vld [vmem:[%s15 + $0xf8] sm:$0xff]
          %v4442 = vld [vmem:[#allocation3] sm:$0x1]
          %v4444 = vperm.slane %v4442, 0
          %4446 = vmatpush.msra.mxu0 %v4425
          %4447 = vmatpush.msra.mxu0 %v4424
          %4448 = vmatpush.msra.mxu0 %v4423
          %4449 = vmatpush.msra.mxu0 %v4422
          %4450 = vmatpush.msra.mxu0 %v4421
          %4451 = vmatpush.msra.mxu0 %v4420
          %4452 = vmatpush.msra.mxu0 %v4419
          %4453 = vmatpush.msra.mxu0 %v4418
          %4454 = vmatpush.msra.mxu0 %v4417
          %4455 = vmatpush.msra.mxu0 %v4416
          %4456 = vmatpush.msra.mxu0 %v4415
          %4457 = vmatpush.msra.mxu0 %v4414
          %4458 = vmatpush.msra.mxu0 %v4413
          %4459 = vmatpush.msra.mxu0 %v4412
          %4460 = vmatpush.msra.mxu0 %v4411
          %4461 = vmatpush.msra.mxu0 %v4410
          %4462 = vmatmul.f32.gmra.mxu0 %v4408
          %v4463 = vpop.f32.mrf.mxu0
          %v4464 = vadd.f32 %v4444, %v4463
          %4465 = vdwg.mxu0
          %4466 = vmatpush.msra.mxu0 %v4441
          %4467 = vmatpush.msra.mxu0 %v4440
          %4468 = vmatpush.msra.mxu0 %v4439
          %4469 = vmatpush.msra.mxu0 %v4438
          %4470 = vmatpush.msra.mxu0 %v4437
          %4471 = vmatpush.msra.mxu0 %v4436
          %4472 = vmatpush.msra.mxu0 %v4435
          %4473 = vmatpush.msra.mxu0 %v4434
          %4474 = vmatpush.msra.mxu0 %v4433
          %4475 = vmatpush.msra.mxu0 %v4432
          %4476 = vmatpush.msra.mxu0 %v4431
          %4477 = vmatpush.msra.mxu0 %v4430
          %4478 = vmatpush.msra.mxu0 %v4429
          %4479 = vmatpush.msra.mxu0 %v4428
          %4480 = vmatpush.msra.mxu0 %v4427
          %4481 = vmatpush.msra.mxu0 %v4426
          %4482 = vmatmul.f32.gmra.mxu0 %v4409
          %v4483 = vpop.f32.mrf.mxu0
          %v4484 = vadd.f32 %v4464, %v4483
          %4485 = vdwg.mxu0
          %v4486 = vxor.u32 %v4484, 2147483648
          %v4487 = vmul.f32 %v4486, 1.442695
          %v4488 = vpow.pop %v4487
          %v4489 = vadd.f32 %v4488, 1.0
          %v4490 = vrcp.pop %v4489
          %v4491 = vmul.f32 %v4489, %v4490
          %v4492 = vsub.f32 1.0, %v4491
          %v4493 = vmul.f32 %v4490, %v4492
          %v4494 = vadd.f32 %v4490, %v4493
          %vm4495 = vweird.f32 %v4489
          %vm4496 = vweird.f32 %v4490
          %vm4497 = vmor %vm4495, %vm4496
          %v4498 = vsel %vm4497, %v4490, %v4494
          %v4499 = vand.u32 2147483647, %v4489
          %vm4500 = vcmp.eq.f32.partialorder %v4499, 8.507059e+37
          %v4501 = vand.u32 %v4489, 2147483648
          %v4502 = vor.u32 1.1754944e-38, %v4501
          %v4503 = vsel %vm4500, %v4502, %v4498
          %v4504 = vmul.f32 1.0, %v4503
          %vm4505 = vcmask 7168
          %4506 = vst.msk [vmem:[%s17] sm:$0xff] %vm4505, %v4504
        $region112: #{tpu_custom_call.1} parent=87 // pred_fallthru
          _
        // Predicated region
        $region113: #{tpu_custom_call.1} parent=87 // pred_check
          %p4507 = pneg %p422
        $region114: #{tpu_custom_call.1} parent=87 // pred_check_branch
          %4509 = sbr.rel (%p4507) target = $region116
        $region115: #{tpu_custom_call.1} parent=87 // pred_region
          _
        $region116: #{tpu_custom_call.1} parent=87 // pred_fallthru
          _
        // Predicated region
        $region117: #{tpu_custom_call.1} parent=87 // pred_check
          %p4510 = pneg %p422
        $region118: #{tpu_custom_call.1} parent=87 // pred_check_branch
          %4512 = sbr.rel (%p4510) target = $region120
        $region119: #{tpu_custom_call.1} parent=87 // pred_region
          _
        $region120: #{tpu_custom_call.1} parent=87 // pred_fallthru
          _
      $region88: #{tpu_custom_call.1} parent=5 // pred_fallthru
        _
      %p4513 = scmp.le.s32.totalorder 2, %s32
      // Predicated region
      $region121: #{tpu_custom_call.1} parent=5 // pred_check
        %p4514 = pneg %p4513
      $region122: #{tpu_custom_call.1} parent=5 // pred_check_branch
        %4516 = sbr.rel (%p4514) target = $region124
      $region123: #{tpu_custom_call.1} parent=5 // pred_region
        %s4517 = ssub.s32 %s32, 2
      $region124: #{tpu_custom_call.1} parent=5 // pred_fallthru
        _
    $region6: #{tpu_custom_call.1} parent=1 // loop_footer
      %s36 = sadd.s32 1, %s32
    $region7: #{tpu_custom_call.1} parent=1 // loop_footer_branch
      %31 = sbr.rel target = $region3
    $region8: #{tpu_custom_call.1} parent=1 // loop_exit
      _
    %4518 = vsyncpa [#allocation5], 1
    %s4519 = scalar_lea.sflag [#allocation5], 1
    %4520 = vsyncpa %s4519, 1
    %4521 = vsyncpa [#allocation7], 1
    %s4522 = scalar_lea.sflag [#allocation7], 1
    %4523 = vsyncpa %s4522, 1
    %4524 = vsyncpa [#allocation10], 1

</llo_original>
